<compile_context>
chip_gen: v7x
topology: tpu7x:2x2x1
jax: 0.10.0
libtpu: 0.0.40
codegen_flags: <defaults>
</compile_context>

<pallas_src>
import functools
import math

import jax
import jax.numpy as jnp
from jax import lax
from jax.experimental import pallas as pl
from jax.experimental.pallas import tpu as pltpu

LABEL_PAD = 128  # lane-dense classifier output width


# ----------------------------------------------------------------------------
# Pallas kernel: full forward (all layers + classifier) for one batch element
# ----------------------------------------------------------------------------
def _layer_norm(x, g, b, eps=1e-5):
    mu = jnp.mean(x, axis=-1, keepdims=True)
    xc = x - mu
    var = jnp.mean(xc * xc, axis=-1, keepdims=True)
    return xc * lax.rsqrt(var + eps) * g + b


def _transformer_kernel(x_ref, mask_ref,
                        wq_ref, bq_ref, wk_ref, bk_ref, wv_ref, bv_ref,
                        wo_ref, bo_ref, ln1g_ref, ln1b_ref,
                        w1_ref, b1_ref, w2_ref, b2_ref, ln2g_ref, ln2b_ref,
                        wl_ref, bl_ref, o_ref,
                        *, num_layers, num_heads):
    x = x_ref[0]            # (T, D)
    madd = mask_ref[0]      # (T, 1) additive mask: 0 valid, -1e4 padded query rows
    T, D = x.shape
    hd = D // num_heads
    scale = 1.0 / math.sqrt(hd)

    h = x
    for l in range(num_layers):            # static loop over stacked layer weights
        wq, wk, wv, wo = wq_ref[l], wk_ref[l], wv_ref[l], wo_ref[l]
        bq, bk, bv, bo = bq_ref[l], bk_ref[l], bv_ref[l], bo_ref[l]

        # Q/K/V projections: one big MXU matmul each, computed once per layer.
        q = jnp.dot(h, wq, preferred_element_type=jnp.float32) + bq
        k = jnp.dot(h, wk, preferred_element_type=jnp.float32) + bk
        v = jnp.dot(h, wv, preferred_element_type=jnp.float32) + bv

        # Multi-head attention; output projection folded in as a per-head block sum.
        acc = jnp.zeros((T, D), jnp.float32)
        for hh in range(num_heads):         # static loop, small 2D MXU ops
            sl = slice(hh * hd, (hh + 1) * hd)
            qh, kh, vh = q[:, sl], k[:, sl], v[:, sl]
            # scores = qh @ kh.T without an explicit transpose
            s = lax.dot_general(qh, kh, (((1,), (1,)), ((), ())),
                                preferred_element_type=jnp.float32) * scale
            s = s + madd                                    # mask padded query rows
            s = s - jnp.max(s, axis=-1, keepdims=True)
            p = jnp.exp(s)
            p = p * pl.reciprocal(jnp.sum(p, axis=-1, keepdims=True), approx=True)
            ctx = jnp.dot(p, vh, preferred_element_type=jnp.float32)     # (T, hd)
            acc = acc + jnp.dot(ctx, wo[sl, :],
                                preferred_element_type=jnp.float32)       # (T, D)
        attn = acc + bo

        # residual + post-LN, then ReLU feed-forward + residual + post-LN
        h = _layer_norm(h + attn, ln1g_ref[l], ln1b_ref[l])
        ff = jnp.maximum(
            jnp.dot(h, w1_ref[l], preferred_element_type=jnp.float32) + b1_ref[l],
            0.0)
        ff = jnp.dot(ff, w2_ref[l], preferred_element_type=jnp.float32) + b2_ref[l]
        h = _layer_norm(h + ff, ln2g_ref[l], ln2b_ref[l])
        # TODO(synk): dropout layers are training-only; eval mode => identity.

    # Final classifier, padded to LABEL_PAD lanes -> lane-dense store.
    o_ref[0] = jnp.dot(h, wl_ref[...], preferred_element_type=jnp.float32) + bl_ref[...]


# ----------------------------------------------------------------------------
# Wrapper
# ----------------------------------------------------------------------------
_WEIGHT_NAMES = ("wq", "bq", "wk", "bk", "wv", "bv", "wo", "bo",
                 "ln1_g", "ln1_b", "w1", "b1", "w2", "b2", "ln2_g", "ln2_b",
                 "linear_w", "linear_b")


def _full_spec(arr):
    zeros = (0,) * arr.ndim
    return pl.BlockSpec(arr.shape, lambda b, _z=zeros: _z)


def transformer_forward(params, src, src_len, *, num_heads):
    emb_table = params["embedding"]
    D = emb_table.shape[1]
    B, T = src.shape
    L = params["wq"].shape[0]
    label_pad = params["linear_w"].shape[1]

    # embedding lookup (gather) done with XLA outside the kernel
    x = jnp.take(emb_table, src, axis=0).astype(jnp.float32)            # (B, T, D)

    valid = (jnp.arange(T)[None, :] < src_len[:, None]).astype(jnp.float32)  # (B, T)
    mask_add = ((1.0 - valid) * -10000.0)[:, :, None]                   # (B, T, 1)

    weights = [params[n] for n in _WEIGHT_NAMES]
    kernel = functools.partial(_transformer_kernel,
                               num_layers=L, num_heads=num_heads)

    in_specs = ([pl.BlockSpec((1, T, D), lambda b: (b, 0, 0)),
                 pl.BlockSpec((1, T, 1), lambda b: (b, 0, 0))]
                + [_full_spec(w) for w in weights])

    return pl.pallas_call(
        kernel,
        out_shape=jax.ShapeDtypeStruct((B, T, label_pad), jnp.float32),
        grid=(B,),
        in_specs=in_specs,
        out_specs=pl.BlockSpec((1, T, label_pad), lambda b: (b, 0, 0)),
        compiler_params=pltpu.CompilerParams(
            dimension_semantics=("parallel",)),
    )(x, mask_add, *weights)


def model_forward(params, src, src_len, *, num_heads, label_number):
    feats_pad = transformer_forward(params, src, src_len, num_heads=num_heads)
    return feats_pad[:, :, :label_number]


# ----------------------------------------------------------------------------
# Parameter init (arrays only -- no Python scalars inside the jitted pytree)
# ----------------------------------------------------------------------------
def init_params(key, *, vocab_len, embed_size, hidden_size, transformer_layers,
                ff_size, label_number):
    assert embed_size == hidden_size, "hidden starts as the embedding"
    D, F, L = hidden_size, ff_size, transformer_layers
    kD = 1.0 / math.sqrt(D)
    kF = 1.0 / math.sqrt(F)
    keys = iter(jax.random.split(key, 32))

    def uni(shape, bound):
        return jax.random.uniform(next(keys), shape, jnp.float32, -bound, bound)

    params = {
        "embedding": jax.random.normal(next(keys), (vocab_len, D), jnp.float32),
        "wq": uni((L, D, D), kD), "bq": uni((L, 1, D), kD),
        "wk": uni((L, D, D), kD), "bk": uni((L, 1, D), kD),
        "wv": uni((L, D, D), kD), "bv": uni((L, 1, D), kD),
        "wo": uni((L, D, D), kD), "bo": uni((L, 1, D), kD),
        "ln1_g": jnp.ones((L, 1, D), jnp.float32),
        "ln1_b": jnp.zeros((L, 1, D), jnp.float32),
        "w1": uni((L, D, F), kD), "b1": uni((L, 1, F), kD),
        "w2": uni((L, F, D), kF), "b2": uni((L, 1, D), kF),
        "ln2_g": jnp.ones((L, 1, D), jnp.float32),
        "ln2_b": jnp.zeros((L, 1, D), jnp.float32),
        # classifier padded to LABEL_PAD output lanes (extra columns are zero)
        "linear_w": jnp.zeros((D, LABEL_PAD), jnp.float32)
                      .at[:, :label_number].set(uni((D, label_number), kD)),
        "linear_b": jnp.zeros((1, LABEL_PAD), jnp.float32)
                      .at[:, :label_number].set(uni((1, label_number), kD)),
    }
    return params


# ----------------------------------------------------------------------------
# Example
# ----------------------------------------------------------------------------
if __name__ == "__main__":
    key = jax.random.PRNGKey(0)
    k_par, k_src = jax.random.split(key)

    vocab_len = 50
    embed_size = hidden_size = 32
    transformer_layers = 2
    num_heads = 4
    ff_size = 128
    label_number = 5
    batch, seq = 2, 8

    params = init_params(k_par,
                         vocab_len=vocab_len, embed_size=embed_size,
                         hidden_size=hidden_size,
                         transformer_layers=transformer_layers,
                         ff_size=ff_size, label_number=label_number)

    src = jax.random.randint(k_src, (batch, seq), 0, vocab_len, jnp.int32)
    src_len = jnp.array([seq, 5], dtype=jnp.int32)   # second sequence is padded

    fwd = jax.jit(functools.partial(model_forward,
                                    num_heads=num_heads,
                                    label_number=label_number))
    feats = fwd(params, src, src_len)
    feats = jax.block_until_ready(feats)

    assert feats.shape == (batch, seq, label_number)
    assert bool(jnp.all(jnp.isfinite(feats)))
    print("KERNEL_OK")
</pallas_src>

<mosaic_0001>
module attributes {stable_mosaic.version = 11 : i64} {
  func.func @_transformer_kernel(%arg0: i32, %arg1: memref<1x8x32xf32, #tpu.memory_space<vmem>>, %arg2: memref<1x8x1xf32, #tpu.memory_space<vmem>>, %arg3: memref<2x32x32xf32, #tpu.memory_space<vmem>>, %arg4: memref<2x1x32xf32, #tpu.memory_space<vmem>>, %arg5: memref<2x32x32xf32, #tpu.memory_space<vmem>>, %arg6: memref<2x1x32xf32, #tpu.memory_space<vmem>>, %arg7: memref<2x32x32xf32, #tpu.memory_space<vmem>>, %arg8: memref<2x1x32xf32, #tpu.memory_space<vmem>>, %arg9: memref<2x32x32xf32, #tpu.memory_space<vmem>>, %arg10: memref<2x1x32xf32, #tpu.memory_space<vmem>>, %arg11: memref<2x1x32xf32, #tpu.memory_space<vmem>>, %arg12: memref<2x1x32xf32, #tpu.memory_space<vmem>>, %arg13: memref<2x32x128xf32, #tpu.memory_space<vmem>>, %arg14: memref<2x1x128xf32, #tpu.memory_space<vmem>>, %arg15: memref<2x128x32xf32, #tpu.memory_space<vmem>>, %arg16: memref<2x1x32xf32, #tpu.memory_space<vmem>>, %arg17: memref<2x1x32xf32, #tpu.memory_space<vmem>>, %arg18: memref<2x1x32xf32, #tpu.memory_space<vmem>>, %arg19: memref<32x128xf32, #tpu.memory_space<vmem>>, %arg20: memref<1x128xf32, #tpu.memory_space<vmem>>, %arg21: memref<1x8x128xf32, #tpu.memory_space<vmem>>) attributes {dimension_semantics = [#tpu.dimension_semantics<parallel>], iteration_bounds = array<i64: 2>, scalar_prefetch = 0 : i64, scratch_operands = 0 : i64, tpu.core_type = #tpu.core_type<tc>, window_params = [{transform_indices = @transform_0, window_bounds = array<i64: 1, 8, 32>}, {transform_indices = @transform_1, window_bounds = array<i64: 1, 8, 1>}, {pipeline_mode = #tpu.pipeline_mode<synchronous>, transform_indices = @transform_2, window_bounds = array<i64: 2, 32, 32>}, {pipeline_mode = #tpu.pipeline_mode<synchronous>, transform_indices = @transform_3, window_bounds = array<i64: 2, 1, 32>}, {pipeline_mode = #tpu.pipeline_mode<synchronous>, transform_indices = @transform_4, window_bounds = array<i64: 2, 32, 32>}, {pipeline_mode = #tpu.pipeline_mode<synchronous>, transform_indices = @transform_5, window_bounds = array<i64: 2, 1, 32>}, {pipeline_mode = #tpu.pipeline_mode<synchronous>, transform_indices = @transform_6, window_bounds = array<i64: 2, 32, 32>}, {pipeline_mode = #tpu.pipeline_mode<synchronous>, transform_indices = @transform_7, window_bounds = array<i64: 2, 1, 32>}, {pipeline_mode = #tpu.pipeline_mode<synchronous>, transform_indices = @transform_8, window_bounds = array<i64: 2, 32, 32>}, {pipeline_mode = #tpu.pipeline_mode<synchronous>, transform_indices = @transform_9, window_bounds = array<i64: 2, 1, 32>}, {pipeline_mode = #tpu.pipeline_mode<synchronous>, transform_indices = @transform_10, window_bounds = array<i64: 2, 1, 32>}, {pipeline_mode = #tpu.pipeline_mode<synchronous>, transform_indices = @transform_11, window_bounds = array<i64: 2, 1, 32>}, {pipeline_mode = #tpu.pipeline_mode<synchronous>, transform_indices = @transform_12, window_bounds = array<i64: 2, 32, 128>}, {pipeline_mode = #tpu.pipeline_mode<synchronous>, transform_indices = @transform_13, window_bounds = array<i64: 2, 1, 128>}, {pipeline_mode = #tpu.pipeline_mode<synchronous>, transform_indices = @transform_14, window_bounds = array<i64: 2, 128, 32>}, {pipeline_mode = #tpu.pipeline_mode<synchronous>, transform_indices = @transform_15, window_bounds = array<i64: 2, 1, 32>}, {pipeline_mode = #tpu.pipeline_mode<synchronous>, transform_indices = @transform_16, window_bounds = array<i64: 2, 1, 32>}, {pipeline_mode = #tpu.pipeline_mode<synchronous>, transform_indices = @transform_17, window_bounds = array<i64: 2, 1, 32>}, {pipeline_mode = #tpu.pipeline_mode<synchronous>, transform_indices = @transform_18, window_bounds = array<i64: 32, 128>}, {pipeline_mode = #tpu.pipeline_mode<synchronous>, transform_indices = @transform_19, window_bounds = array<i64: 1, 128>}, {transform_indices = @transform_20, window_bounds = array<i64: 1, 8, 128>}]} {
    %c0 = arith.constant 0 : index
    %c0_0 = arith.constant 0 : index
    %c0_1 = arith.constant 0 : index
    %0 = vector.load %arg1[%c0, %c0_0, %c0_1] : memref<1x8x32xf32, #tpu.memory_space<vmem>>, vector<1x8x32xf32>
    %1 = vector.shape_cast %0 : vector<1x8x32xf32> to vector<8x32xf32>
    %c0_2 = arith.constant 0 : index
    %c0_3 = arith.constant 0 : index
    %c0_4 = arith.constant 0 : index
    %2 = vector.load %arg2[%c0_2, %c0_3, %c0_4] : memref<1x8x1xf32, #tpu.memory_space<vmem>>, vector<1x8x1xf32>
    %3 = vector.shape_cast %2 : vector<1x8x1xf32> to vector<8x1xf32>
    %c0_5 = arith.constant 0 : index
    %c0_6 = arith.constant 0 : index
    %c0_7 = arith.constant 0 : index
    %4 = vector.load %arg3[%c0_5, %c0_6, %c0_7] : memref<2x32x32xf32, #tpu.memory_space<vmem>>, vector<1x32x32xf32>
    %5 = vector.shape_cast %4 : vector<1x32x32xf32> to vector<32x32xf32>
    %c0_8 = arith.constant 0 : index
    %c0_9 = arith.constant 0 : index
    %c0_10 = arith.constant 0 : index
    %6 = vector.load %arg5[%c0_8, %c0_9, %c0_10] : memref<2x32x32xf32, #tpu.memory_space<vmem>>, vector<1x32x32xf32>
    %7 = vector.shape_cast %6 : vector<1x32x32xf32> to vector<32x32xf32>
    %c0_11 = arith.constant 0 : index
    %c0_12 = arith.constant 0 : index
    %c0_13 = arith.constant 0 : index
    %8 = vector.load %arg7[%c0_11, %c0_12, %c0_13] : memref<2x32x32xf32, #tpu.memory_space<vmem>>, vector<1x32x32xf32>
    %9 = vector.shape_cast %8 : vector<1x32x32xf32> to vector<32x32xf32>
    %c0_14 = arith.constant 0 : index
    %c0_15 = arith.constant 0 : index
    %c0_16 = arith.constant 0 : index
    %10 = vector.load %arg9[%c0_14, %c0_15, %c0_16] : memref<2x32x32xf32, #tpu.memory_space<vmem>>, vector<1x32x32xf32>
    %11 = vector.shape_cast %10 : vector<1x32x32xf32> to vector<32x32xf32>
    %c0_17 = arith.constant 0 : index
    %c0_18 = arith.constant 0 : index
    %c0_19 = arith.constant 0 : index
    %12 = vector.load %arg4[%c0_17, %c0_18, %c0_19] : memref<2x1x32xf32, #tpu.memory_space<vmem>>, vector<1x1x32xf32>
    %13 = vector.shape_cast %12 : vector<1x1x32xf32> to vector<1x32xf32>
    %c0_20 = arith.constant 0 : index
    %c0_21 = arith.constant 0 : index
    %c0_22 = arith.constant 0 : index
    %14 = vector.load %arg6[%c0_20, %c0_21, %c0_22] : memref<2x1x32xf32, #tpu.memory_space<vmem>>, vector<1x1x32xf32>
    %15 = vector.shape_cast %14 : vector<1x1x32xf32> to vector<1x32xf32>
    %c0_23 = arith.constant 0 : index
    %c0_24 = arith.constant 0 : index
    %c0_25 = arith.constant 0 : index
    %16 = vector.load %arg8[%c0_23, %c0_24, %c0_25] : memref<2x1x32xf32, #tpu.memory_space<vmem>>, vector<1x1x32xf32>
    %17 = vector.shape_cast %16 : vector<1x1x32xf32> to vector<1x32xf32>
    %c0_26 = arith.constant 0 : index
    %c0_27 = arith.constant 0 : index
    %c0_28 = arith.constant 0 : index
    %18 = vector.load %arg10[%c0_26, %c0_27, %c0_28] : memref<2x1x32xf32, #tpu.memory_space<vmem>>, vector<1x1x32xf32>
    %19 = vector.shape_cast %18 : vector<1x1x32xf32> to vector<1x32xf32>
    %cst = arith.constant dense<0.000000e+00> : vector<8x32xf32>
    %20 = tpu.matmul %1, %5, %cst {dimension_numbers = #tpu.dot_dimension_numbers<[1], [0], [0], [1], [0, 0, 1, 1], [], []>} : vector<8x32xf32>, vector<32x32xf32>, vector<8x32xf32> -> vector<8x32xf32>
    %21 = vector.broadcast %13 : vector<1x32xf32> to vector<8x32xf32>
    %22 = arith.addf %20, %21 : vector<8x32xf32>
    %cst_29 = arith.constant dense<0.000000e+00> : vector<8x32xf32>
    %23 = tpu.matmul %1, %7, %cst_29 {dimension_numbers = #tpu.dot_dimension_numbers<[1], [0], [0], [1], [0, 0, 1, 1], [], []>} : vector<8x32xf32>, vector<32x32xf32>, vector<8x32xf32> -> vector<8x32xf32>
    %24 = vector.broadcast %15 : vector<1x32xf32> to vector<8x32xf32>
    %25 = arith.addf %23, %24 : vector<8x32xf32>
    %cst_30 = arith.constant dense<0.000000e+00> : vector<8x32xf32>
    %26 = tpu.matmul %1, %9, %cst_30 {dimension_numbers = #tpu.dot_dimension_numbers<[1], [0], [0], [1], [0, 0, 1, 1], [], []>} : vector<8x32xf32>, vector<32x32xf32>, vector<8x32xf32> -> vector<8x32xf32>
    %27 = vector.broadcast %17 : vector<1x32xf32> to vector<8x32xf32>
    %28 = arith.addf %26, %27 : vector<8x32xf32>
    %cst_31 = arith.constant 0.000000e+00 : f32
    %29 = vector.broadcast %cst_31 : f32 to vector<8x32xf32>
    %30 = vector.extract_strided_slice %22 {offsets = [0, 0], sizes = [8, 8], strides = [1, 1]} : vector<8x32xf32> to vector<8x8xf32>
    %31 = vector.extract_strided_slice %25 {offsets = [0, 0], sizes = [8, 8], strides = [1, 1]} : vector<8x32xf32> to vector<8x8xf32>
    %32 = vector.extract_strided_slice %28 {offsets = [0, 0], sizes = [8, 8], strides = [1, 1]} : vector<8x32xf32> to vector<8x8xf32>
    %cst_32 = arith.constant dense<0.000000e+00> : vector<8x8xf32>
    %33 = tpu.matmul %30, %31, %cst_32 {dimension_numbers = #tpu.dot_dimension_numbers<[1], [1], [0], [0], [0, 0, 1, 0], [], []>} : vector<8x8xf32>, vector<8x8xf32>, vector<8x8xf32> -> vector<8x8xf32>
    %cst_33 = arith.constant 0.353553385 : f32
    %34 = vector.broadcast %cst_33 : f32 to vector<8x8xf32>
    %35 = arith.mulf %33, %34 : vector<8x8xf32>
    %36 = vector.broadcast %3 : vector<8x1xf32> to vector<8x8xf32>
    %37 = arith.addf %35, %36 : vector<8x8xf32>
    %cst_34 = arith.constant dense<0xFF800000> : vector<8xf32>
    %38 = vector.multi_reduction <maximumf>, %37, %cst_34 [1] : vector<8x8xf32> to vector<8xf32>
    %39 = vector.shape_cast %38 : vector<8xf32> to vector<8x1xf32>
    %40 = vector.broadcast %39 : vector<8x1xf32> to vector<8x8xf32>
    %41 = arith.subf %37, %40 : vector<8x8xf32>
    %42 = math.exp %41 : vector<8x8xf32>
    %cst_35 = arith.constant dense<0.000000e+00> : vector<8xf32>
    %43 = vector.multi_reduction <add>, %42, %cst_35 [1] : vector<8x8xf32> to vector<8xf32>
    %44 = vector.shape_cast %43 : vector<8xf32> to vector<8x1xf32>
    %45 = tpu.reciprocal %44 {approx = true} : vector<8x1xf32> -> vector<8x1xf32>
    %46 = vector.broadcast %45 : vector<8x1xf32> to vector<8x8xf32>
    %47 = arith.mulf %42, %46 : vector<8x8xf32>
    %cst_36 = arith.constant dense<0.000000e+00> : vector<8x8xf32>
    %48 = tpu.matmul %47, %32, %cst_36 {dimension_numbers = #tpu.dot_dimension_numbers<[1], [0], [0], [1], [0, 0, 1, 1], [], []>} : vector<8x8xf32>, vector<8x8xf32>, vector<8x8xf32> -> vector<8x8xf32>
    %49 = vector.extract_strided_slice %11 {offsets = [0, 0], sizes = [8, 32], strides = [1, 1]} : vector<32x32xf32> to vector<8x32xf32>
    %cst_37 = arith.constant dense<0.000000e+00> : vector<8x32xf32>
    %50 = tpu.matmul %48, %49, %cst_37 {dimension_numbers = #tpu.dot_dimension_numbers<[1], [0], [0], [1], [0, 0, 1, 1], [], []>} : vector<8x8xf32>, vector<8x32xf32>, vector<8x32xf32> -> vector<8x32xf32>
    %51 = arith.addf %29, %50 : vector<8x32xf32>
    %52 = vector.extract_strided_slice %22 {offsets = [0, 8], sizes = [8, 8], strides = [1, 1]} : vector<8x32xf32> to vector<8x8xf32>
    %53 = vector.extract_strided_slice %25 {offsets = [0, 8], sizes = [8, 8], strides = [1, 1]} : vector<8x32xf32> to vector<8x8xf32>
    %54 = vector.extract_strided_slice %28 {offsets = [0, 8], sizes = [8, 8], strides = [1, 1]} : vector<8x32xf32> to vector<8x8xf32>
    %cst_38 = arith.constant dense<0.000000e+00> : vector<8x8xf32>
    %55 = tpu.matmul %52, %53, %cst_38 {dimension_numbers = #tpu.dot_dimension_numbers<[1], [1], [0], [0], [0, 0, 1, 0], [], []>} : vector<8x8xf32>, vector<8x8xf32>, vector<8x8xf32> -> vector<8x8xf32>
    %cst_39 = arith.constant 0.353553385 : f32
    %56 = vector.broadcast %cst_39 : f32 to vector<8x8xf32>
    %57 = arith.mulf %55, %56 : vector<8x8xf32>
    %58 = vector.broadcast %3 : vector<8x1xf32> to vector<8x8xf32>
    %59 = arith.addf %57, %58 : vector<8x8xf32>
    %cst_40 = arith.constant dense<0xFF800000> : vector<8xf32>
    %60 = vector.multi_reduction <maximumf>, %59, %cst_40 [1] : vector<8x8xf32> to vector<8xf32>
    %61 = vector.shape_cast %60 : vector<8xf32> to vector<8x1xf32>
    %62 = vector.broadcast %61 : vector<8x1xf32> to vector<8x8xf32>
    %63 = arith.subf %59, %62 : vector<8x8xf32>
    %64 = math.exp %63 : vector<8x8xf32>
    %cst_41 = arith.constant dense<0.000000e+00> : vector<8xf32>
    %65 = vector.multi_reduction <add>, %64, %cst_41 [1] : vector<8x8xf32> to vector<8xf32>
    %66 = vector.shape_cast %65 : vector<8xf32> to vector<8x1xf32>
    %67 = tpu.reciprocal %66 {approx = true} : vector<8x1xf32> -> vector<8x1xf32>
    %68 = vector.broadcast %67 : vector<8x1xf32> to vector<8x8xf32>
    %69 = arith.mulf %64, %68 : vector<8x8xf32>
    %cst_42 = arith.constant dense<0.000000e+00> : vector<8x8xf32>
    %70 = tpu.matmul %69, %54, %cst_42 {dimension_numbers = #tpu.dot_dimension_numbers<[1], [0], [0], [1], [0, 0, 1, 1], [], []>} : vector<8x8xf32>, vector<8x8xf32>, vector<8x8xf32> -> vector<8x8xf32>
    %71 = vector.extract_strided_slice %11 {offsets = [8, 0], sizes = [8, 32], strides = [1, 1]} : vector<32x32xf32> to vector<8x32xf32>
    %cst_43 = arith.constant dense<0.000000e+00> : vector<8x32xf32>
    %72 = tpu.matmul %70, %71, %cst_43 {dimension_numbers = #tpu.dot_dimension_numbers<[1], [0], [0], [1], [0, 0, 1, 1], [], []>} : vector<8x8xf32>, vector<8x32xf32>, vector<8x32xf32> -> vector<8x32xf32>
    %73 = arith.addf %51, %72 : vector<8x32xf32>
    %74 = vector.extract_strided_slice %22 {offsets = [0, 16], sizes = [8, 8], strides = [1, 1]} : vector<8x32xf32> to vector<8x8xf32>
    %75 = vector.extract_strided_slice %25 {offsets = [0, 16], sizes = [8, 8], strides = [1, 1]} : vector<8x32xf32> to vector<8x8xf32>
    %76 = vector.extract_strided_slice %28 {offsets = [0, 16], sizes = [8, 8], strides = [1, 1]} : vector<8x32xf32> to vector<8x8xf32>
    %cst_44 = arith.constant dense<0.000000e+00> : vector<8x8xf32>
    %77 = tpu.matmul %74, %75, %cst_44 {dimension_numbers = #tpu.dot_dimension_numbers<[1], [1], [0], [0], [0, 0, 1, 0], [], []>} : vector<8x8xf32>, vector<8x8xf32>, vector<8x8xf32> -> vector<8x8xf32>
    %cst_45 = arith.constant 0.353553385 : f32
    %78 = vector.broadcast %cst_45 : f32 to vector<8x8xf32>
    %79 = arith.mulf %77, %78 : vector<8x8xf32>
    %80 = vector.broadcast %3 : vector<8x1xf32> to vector<8x8xf32>
    %81 = arith.addf %79, %80 : vector<8x8xf32>
    %cst_46 = arith.constant dense<0xFF800000> : vector<8xf32>
    %82 = vector.multi_reduction <maximumf>, %81, %cst_46 [1] : vector<8x8xf32> to vector<8xf32>
    %83 = vector.shape_cast %82 : vector<8xf32> to vector<8x1xf32>
    %84 = vector.broadcast %83 : vector<8x1xf32> to vector<8x8xf32>
    %85 = arith.subf %81, %84 : vector<8x8xf32>
    %86 = math.exp %85 : vector<8x8xf32>
    %cst_47 = arith.constant dense<0.000000e+00> : vector<8xf32>
    %87 = vector.multi_reduction <add>, %86, %cst_47 [1] : vector<8x8xf32> to vector<8xf32>
    %88 = vector.shape_cast %87 : vector<8xf32> to vector<8x1xf32>
    %89 = tpu.reciprocal %88 {approx = true} : vector<8x1xf32> -> vector<8x1xf32>
    %90 = vector.broadcast %89 : vector<8x1xf32> to vector<8x8xf32>
    %91 = arith.mulf %86, %90 : vector<8x8xf32>
    %cst_48 = arith.constant dense<0.000000e+00> : vector<8x8xf32>
    %92 = tpu.matmul %91, %76, %cst_48 {dimension_numbers = #tpu.dot_dimension_numbers<[1], [0], [0], [1], [0, 0, 1, 1], [], []>} : vector<8x8xf32>, vector<8x8xf32>, vector<8x8xf32> -> vector<8x8xf32>
    %93 = vector.extract_strided_slice %11 {offsets = [16, 0], sizes = [8, 32], strides = [1, 1]} : vector<32x32xf32> to vector<8x32xf32>
    %cst_49 = arith.constant dense<0.000000e+00> : vector<8x32xf32>
    %94 = tpu.matmul %92, %93, %cst_49 {dimension_numbers = #tpu.dot_dimension_numbers<[1], [0], [0], [1], [0, 0, 1, 1], [], []>} : vector<8x8xf32>, vector<8x32xf32>, vector<8x32xf32> -> vector<8x32xf32>
    %95 = arith.addf %73, %94 : vector<8x32xf32>
    %96 = vector.extract_strided_slice %22 {offsets = [0, 24], sizes = [8, 8], strides = [1, 1]} : vector<8x32xf32> to vector<8x8xf32>
    %97 = vector.extract_strided_slice %25 {offsets = [0, 24], sizes = [8, 8], strides = [1, 1]} : vector<8x32xf32> to vector<8x8xf32>
    %98 = vector.extract_strided_slice %28 {offsets = [0, 24], sizes = [8, 8], strides = [1, 1]} : vector<8x32xf32> to vector<8x8xf32>
    %cst_50 = arith.constant dense<0.000000e+00> : vector<8x8xf32>
    %99 = tpu.matmul %96, %97, %cst_50 {dimension_numbers = #tpu.dot_dimension_numbers<[1], [1], [0], [0], [0, 0, 1, 0], [], []>} : vector<8x8xf32>, vector<8x8xf32>, vector<8x8xf32> -> vector<8x8xf32>
    %cst_51 = arith.constant 0.353553385 : f32
    %100 = vector.broadcast %cst_51 : f32 to vector<8x8xf32>
    %101 = arith.mulf %99, %100 : vector<8x8xf32>
    %102 = vector.broadcast %3 : vector<8x1xf32> to vector<8x8xf32>
    %103 = arith.addf %101, %102 : vector<8x8xf32>
    %cst_52 = arith.constant dense<0xFF800000> : vector<8xf32>
    %104 = vector.multi_reduction <maximumf>, %103, %cst_52 [1] : vector<8x8xf32> to vector<8xf32>
    %105 = vector.shape_cast %104 : vector<8xf32> to vector<8x1xf32>
    %106 = vector.broadcast %105 : vector<8x1xf32> to vector<8x8xf32>
    %107 = arith.subf %103, %106 : vector<8x8xf32>
    %108 = math.exp %107 : vector<8x8xf32>
    %cst_53 = arith.constant dense<0.000000e+00> : vector<8xf32>
    %109 = vector.multi_reduction <add>, %108, %cst_53 [1] : vector<8x8xf32> to vector<8xf32>
    %110 = vector.shape_cast %109 : vector<8xf32> to vector<8x1xf32>
    %111 = tpu.reciprocal %110 {approx = true} : vector<8x1xf32> -> vector<8x1xf32>
    %112 = vector.broadcast %111 : vector<8x1xf32> to vector<8x8xf32>
    %113 = arith.mulf %108, %112 : vector<8x8xf32>
    %cst_54 = arith.constant dense<0.000000e+00> : vector<8x8xf32>
    %114 = tpu.matmul %113, %98, %cst_54 {dimension_numbers = #tpu.dot_dimension_numbers<[1], [0], [0], [1], [0, 0, 1, 1], [], []>} : vector<8x8xf32>, vector<8x8xf32>, vector<8x8xf32> -> vector<8x8xf32>
    %115 = vector.extract_strided_slice %11 {offsets = [24, 0], sizes = [8, 32], strides = [1, 1]} : vector<32x32xf32> to vector<8x32xf32>
    %cst_55 = arith.constant dense<0.000000e+00> : vector<8x32xf32>
    %116 = tpu.matmul %114, %115, %cst_55 {dimension_numbers = #tpu.dot_dimension_numbers<[1], [0], [0], [1], [0, 0, 1, 1], [], []>} : vector<8x8xf32>, vector<8x32xf32>, vector<8x32xf32> -> vector<8x32xf32>
    %117 = arith.addf %95, %116 : vector<8x32xf32>
    %118 = vector.broadcast %19 : vector<1x32xf32> to vector<8x32xf32>
    %119 = arith.addf %117, %118 : vector<8x32xf32>
    %120 = arith.addf %1, %119 : vector<8x32xf32>
    %c0_56 = arith.constant 0 : index
    %c0_57 = arith.constant 0 : index
    %c0_58 = arith.constant 0 : index
    %121 = vector.load %arg11[%c0_56, %c0_57, %c0_58] : memref<2x1x32xf32, #tpu.memory_space<vmem>>, vector<1x1x32xf32>
    %122 = vector.shape_cast %121 : vector<1x1x32xf32> to vector<1x32xf32>
    %c0_59 = arith.constant 0 : index
    %c0_60 = arith.constant 0 : index
    %c0_61 = arith.constant 0 : index
    %123 = vector.load %arg12[%c0_59, %c0_60, %c0_61] : memref<2x1x32xf32, #tpu.memory_space<vmem>>, vector<1x1x32xf32>
    %124 = vector.shape_cast %123 : vector<1x1x32xf32> to vector<1x32xf32>
    %cst_62 = arith.constant dense<0.000000e+00> : vector<8xf32>
    %125 = vector.multi_reduction <add>, %120, %cst_62 [1] : vector<8x32xf32> to vector<8xf32>
    %126 = vector.shape_cast %125 : vector<8xf32> to vector<8x1xf32>
    %cst_63 = arith.constant 3.200000e+01 : f32
    %127 = vector.broadcast %cst_63 : f32 to vector<8x1xf32>
    %128 = arith.divf %126, %127 : vector<8x1xf32>
    %129 = vector.broadcast %128 : vector<8x1xf32> to vector<8x32xf32>
    %130 = arith.subf %120, %129 : vector<8x32xf32>
    %131 = arith.mulf %130, %130 : vector<8x32xf32>
    %cst_64 = arith.constant dense<0.000000e+00> : vector<8xf32>
    %132 = vector.multi_reduction <add>, %131, %cst_64 [1] : vector<8x32xf32> to vector<8xf32>
    %133 = vector.shape_cast %132 : vector<8xf32> to vector<8x1xf32>
    %cst_65 = arith.constant 3.200000e+01 : f32
    %134 = vector.broadcast %cst_65 : f32 to vector<8x1xf32>
    %135 = arith.divf %133, %134 : vector<8x1xf32>
    %cst_66 = arith.constant 9.99999974E-6 : f32
    %136 = vector.broadcast %cst_66 : f32 to vector<8x1xf32>
    %137 = arith.addf %135, %136 : vector<8x1xf32>
    %138 = math.rsqrt %137 : vector<8x1xf32>
    %139 = vector.broadcast %138 : vector<8x1xf32> to vector<8x32xf32>
    %140 = arith.mulf %130, %139 : vector<8x32xf32>
    %141 = vector.broadcast %122 : vector<1x32xf32> to vector<8x32xf32>
    %142 = arith.mulf %140, %141 : vector<8x32xf32>
    %143 = vector.broadcast %124 : vector<1x32xf32> to vector<8x32xf32>
    %144 = arith.addf %142, %143 : vector<8x32xf32>
    %c0_67 = arith.constant 0 : index
    %c0_68 = arith.constant 0 : index
    %c0_69 = arith.constant 0 : index
    %145 = vector.load %arg13[%c0_67, %c0_68, %c0_69] : memref<2x32x128xf32, #tpu.memory_space<vmem>>, vector<1x32x128xf32>
    %146 = vector.shape_cast %145 : vector<1x32x128xf32> to vector<32x128xf32>
    %cst_70 = arith.constant dense<0.000000e+00> : vector<8x128xf32>
    %147 = tpu.matmul %144, %146, %cst_70 {dimension_numbers = #tpu.dot_dimension_numbers<[1], [0], [0], [1], [0, 0, 1, 1], [], []>} : vector<8x32xf32>, vector<32x128xf32>, vector<8x128xf32> -> vector<8x128xf32>
    %c0_71 = arith.constant 0 : index
    %c0_72 = arith.constant 0 : index
    %c0_73 = arith.constant 0 : index
    %148 = vector.load %arg14[%c0_71, %c0_72, %c0_73] : memref<2x1x128xf32, #tpu.memory_space<vmem>>, vector<1x1x128xf32>
    %149 = vector.shape_cast %148 : vector<1x1x128xf32> to vector<1x128xf32>
    %150 = vector.broadcast %149 : vector<1x128xf32> to vector<8x128xf32>
    %151 = arith.addf %147, %150 : vector<8x128xf32>
    %cst_74 = arith.constant 0.000000e+00 : f32
    %152 = vector.broadcast %cst_74 : f32 to vector<8x128xf32>
    %153 = arith.maximumf %151, %152 : vector<8x128xf32>
    %c0_75 = arith.constant 0 : index
    %c0_76 = arith.constant 0 : index
    %c0_77 = arith.constant 0 : index
    %154 = vector.load %arg15[%c0_75, %c0_76, %c0_77] : memref<2x128x32xf32, #tpu.memory_space<vmem>>, vector<1x128x32xf32>
    %155 = vector.shape_cast %154 : vector<1x128x32xf32> to vector<128x32xf32>
    %cst_78 = arith.constant dense<0.000000e+00> : vector<8x32xf32>
    %156 = tpu.matmul %153, %155, %cst_78 {dimension_numbers = #tpu.dot_dimension_numbers<[1], [0], [0], [1], [0, 0, 1, 1], [], []>} : vector<8x128xf32>, vector<128x32xf32>, vector<8x32xf32> -> vector<8x32xf32>
    %c0_79 = arith.constant 0 : index
    %c0_80 = arith.constant 0 : index
    %c0_81 = arith.constant 0 : index
    %157 = vector.load %arg16[%c0_79, %c0_80, %c0_81] : memref<2x1x32xf32, #tpu.memory_space<vmem>>, vector<1x1x32xf32>
    %158 = vector.shape_cast %157 : vector<1x1x32xf32> to vector<1x32xf32>
    %159 = vector.broadcast %158 : vector<1x32xf32> to vector<8x32xf32>
    %160 = arith.addf %156, %159 : vector<8x32xf32>
    %161 = arith.addf %144, %160 : vector<8x32xf32>
    %c0_82 = arith.constant 0 : index
    %c0_83 = arith.constant 0 : index
    %c0_84 = arith.constant 0 : index
    %162 = vector.load %arg17[%c0_82, %c0_83, %c0_84] : memref<2x1x32xf32, #tpu.memory_space<vmem>>, vector<1x1x32xf32>
    %163 = vector.shape_cast %162 : vector<1x1x32xf32> to vector<1x32xf32>
    %c0_85 = arith.constant 0 : index
    %c0_86 = arith.constant 0 : index
    %c0_87 = arith.constant 0 : index
    %164 = vector.load %arg18[%c0_85, %c0_86, %c0_87] : memref<2x1x32xf32, #tpu.memory_space<vmem>>, vector<1x1x32xf32>
    %165 = vector.shape_cast %164 : vector<1x1x32xf32> to vector<1x32xf32>
    %cst_88 = arith.constant dense<0.000000e+00> : vector<8xf32>
    %166 = vector.multi_reduction <add>, %161, %cst_88 [1] : vector<8x32xf32> to vector<8xf32>
    %167 = vector.shape_cast %166 : vector<8xf32> to vector<8x1xf32>
    %cst_89 = arith.constant 3.200000e+01 : f32
    %168 = vector.broadcast %cst_89 : f32 to vector<8x1xf32>
    %169 = arith.divf %167, %168 : vector<8x1xf32>
    %170 = vector.broadcast %169 : vector<8x1xf32> to vector<8x32xf32>
    %171 = arith.subf %161, %170 : vector<8x32xf32>
    %172 = arith.mulf %171, %171 : vector<8x32xf32>
    %cst_90 = arith.constant dense<0.000000e+00> : vector<8xf32>
    %173 = vector.multi_reduction <add>, %172, %cst_90 [1] : vector<8x32xf32> to vector<8xf32>
    %174 = vector.shape_cast %173 : vector<8xf32> to vector<8x1xf32>
    %cst_91 = arith.constant 3.200000e+01 : f32
    %175 = vector.broadcast %cst_91 : f32 to vector<8x1xf32>
    %176 = arith.divf %174, %175 : vector<8x1xf32>
    %cst_92 = arith.constant 9.99999974E-6 : f32
    %177 = vector.broadcast %cst_92 : f32 to vector<8x1xf32>
    %178 = arith.addf %176, %177 : vector<8x1xf32>
    %179 = math.rsqrt %178 : vector<8x1xf32>
    %180 = vector.broadcast %179 : vector<8x1xf32> to vector<8x32xf32>
    %181 = arith.mulf %171, %180 : vector<8x32xf32>
    %182 = vector.broadcast %163 : vector<1x32xf32> to vector<8x32xf32>
    %183 = arith.mulf %181, %182 : vector<8x32xf32>
    %184 = vector.broadcast %165 : vector<1x32xf32> to vector<8x32xf32>
    %185 = arith.addf %183, %184 : vector<8x32xf32>
    %c1 = arith.constant 1 : index
    %c0_93 = arith.constant 0 : index
    %c0_94 = arith.constant 0 : index
    %186 = vector.load %arg3[%c1, %c0_93, %c0_94] : memref<2x32x32xf32, #tpu.memory_space<vmem>>, vector<1x32x32xf32>
    %187 = vector.shape_cast %186 : vector<1x32x32xf32> to vector<32x32xf32>
    %c1_95 = arith.constant 1 : index
    %c0_96 = arith.constant 0 : index
    %c0_97 = arith.constant 0 : index
    %188 = vector.load %arg5[%c1_95, %c0_96, %c0_97] : memref<2x32x32xf32, #tpu.memory_space<vmem>>, vector<1x32x32xf32>
    %189 = vector.shape_cast %188 : vector<1x32x32xf32> to vector<32x32xf32>
    %c1_98 = arith.constant 1 : index
    %c0_99 = arith.constant 0 : index
    %c0_100 = arith.constant 0 : index
    %190 = vector.load %arg7[%c1_98, %c0_99, %c0_100] : memref<2x32x32xf32, #tpu.memory_space<vmem>>, vector<1x32x32xf32>
    %191 = vector.shape_cast %190 : vector<1x32x32xf32> to vector<32x32xf32>
    %c1_101 = arith.constant 1 : index
    %c0_102 = arith.constant 0 : index
    %c0_103 = arith.constant 0 : index
    %192 = vector.load %arg9[%c1_101, %c0_102, %c0_103] : memref<2x32x32xf32, #tpu.memory_space<vmem>>, vector<1x32x32xf32>
    %193 = vector.shape_cast %192 : vector<1x32x32xf32> to vector<32x32xf32>
    %c1_104 = arith.constant 1 : index
    %c0_105 = arith.constant 0 : index
    %c0_106 = arith.constant 0 : index
    %194 = vector.load %arg4[%c1_104, %c0_105, %c0_106] : memref<2x1x32xf32, #tpu.memory_space<vmem>>, vector<1x1x32xf32>
    %195 = vector.shape_cast %194 : vector<1x1x32xf32> to vector<1x32xf32>
    %c1_107 = arith.constant 1 : index
    %c0_108 = arith.constant 0 : index
    %c0_109 = arith.constant 0 : index
    %196 = vector.load %arg6[%c1_107, %c0_108, %c0_109] : memref<2x1x32xf32, #tpu.memory_space<vmem>>, vector<1x1x32xf32>
    %197 = vector.shape_cast %196 : vector<1x1x32xf32> to vector<1x32xf32>
    %c1_110 = arith.constant 1 : index
    %c0_111 = arith.constant 0 : index
    %c0_112 = arith.constant 0 : index
    %198 = vector.load %arg8[%c1_110, %c0_111, %c0_112] : memref<2x1x32xf32, #tpu.memory_space<vmem>>, vector<1x1x32xf32>
    %199 = vector.shape_cast %198 : vector<1x1x32xf32> to vector<1x32xf32>
    %c1_113 = arith.constant 1 : index
    %c0_114 = arith.constant 0 : index
    %c0_115 = arith.constant 0 : index
    %200 = vector.load %arg10[%c1_113, %c0_114, %c0_115] : memref<2x1x32xf32, #tpu.memory_space<vmem>>, vector<1x1x32xf32>
    %201 = vector.shape_cast %200 : vector<1x1x32xf32> to vector<1x32xf32>
    %cst_116 = arith.constant dense<0.000000e+00> : vector<8x32xf32>
    %202 = tpu.matmul %185, %187, %cst_116 {dimension_numbers = #tpu.dot_dimension_numbers<[1], [0], [0], [1], [0, 0, 1, 1], [], []>} : vector<8x32xf32>, vector<32x32xf32>, vector<8x32xf32> -> vector<8x32xf32>
    %203 = vector.broadcast %195 : vector<1x32xf32> to vector<8x32xf32>
    %204 = arith.addf %202, %203 : vector<8x32xf32>
    %cst_117 = arith.constant dense<0.000000e+00> : vector<8x32xf32>
    %205 = tpu.matmul %185, %189, %cst_117 {dimension_numbers = #tpu.dot_dimension_numbers<[1], [0], [0], [1], [0, 0, 1, 1], [], []>} : vector<8x32xf32>, vector<32x32xf32>, vector<8x32xf32> -> vector<8x32xf32>
    %206 = vector.broadcast %197 : vector<1x32xf32> to vector<8x32xf32>
    %207 = arith.addf %205, %206 : vector<8x32xf32>
    %cst_118 = arith.constant dense<0.000000e+00> : vector<8x32xf32>
    %208 = tpu.matmul %185, %191, %cst_118 {dimension_numbers = #tpu.dot_dimension_numbers<[1], [0], [0], [1], [0, 0, 1, 1], [], []>} : vector<8x32xf32>, vector<32x32xf32>, vector<8x32xf32> -> vector<8x32xf32>
    %209 = vector.broadcast %199 : vector<1x32xf32> to vector<8x32xf32>
    %210 = arith.addf %208, %209 : vector<8x32xf32>
    %cst_119 = arith.constant 0.000000e+00 : f32
    %211 = vector.broadcast %cst_119 : f32 to vector<8x32xf32>
    %212 = vector.extract_strided_slice %204 {offsets = [0, 0], sizes = [8, 8], strides = [1, 1]} : vector<8x32xf32> to vector<8x8xf32>
    %213 = vector.extract_strided_slice %207 {offsets = [0, 0], sizes = [8, 8], strides = [1, 1]} : vector<8x32xf32> to vector<8x8xf32>
    %214 = vector.extract_strided_slice %210 {offsets = [0, 0], sizes = [8, 8], strides = [1, 1]} : vector<8x32xf32> to vector<8x8xf32>
    %cst_120 = arith.constant dense<0.000000e+00> : vector<8x8xf32>
    %215 = tpu.matmul %212, %213, %cst_120 {dimension_numbers = #tpu.dot_dimension_numbers<[1], [1], [0], [0], [0, 0, 1, 0], [], []>} : vector<8x8xf32>, vector<8x8xf32>, vector<8x8xf32> -> vector<8x8xf32>
    %cst_121 = arith.constant 0.353553385 : f32
    %216 = vector.broadcast %cst_121 : f32 to vector<8x8xf32>
    %217 = arith.mulf %215, %216 : vector<8x8xf32>
    %218 = vector.broadcast %3 : vector<8x1xf32> to vector<8x8xf32>
    %219 = arith.addf %217, %218 : vector<8x8xf32>
    %cst_122 = arith.constant dense<0xFF800000> : vector<8xf32>
    %220 = vector.multi_reduction <maximumf>, %219, %cst_122 [1] : vector<8x8xf32> to vector<8xf32>
    %221 = vector.shape_cast %220 : vector<8xf32> to vector<8x1xf32>
    %222 = vector.broadcast %221 : vector<8x1xf32> to vector<8x8xf32>
    %223 = arith.subf %219, %222 : vector<8x8xf32>
    %224 = math.exp %223 : vector<8x8xf32>
    %cst_123 = arith.constant dense<0.000000e+00> : vector<8xf32>
    %225 = vector.multi_reduction <add>, %224, %cst_123 [1] : vector<8x8xf32> to vector<8xf32>
    %226 = vector.shape_cast %225 : vector<8xf32> to vector<8x1xf32>
    %227 = tpu.reciprocal %226 {approx = true} : vector<8x1xf32> -> vector<8x1xf32>
    %228 = vector.broadcast %227 : vector<8x1xf32> to vector<8x8xf32>
    %229 = arith.mulf %224, %228 : vector<8x8xf32>
    %cst_124 = arith.constant dense<0.000000e+00> : vector<8x8xf32>
    %230 = tpu.matmul %229, %214, %cst_124 {dimension_numbers = #tpu.dot_dimension_numbers<[1], [0], [0], [1], [0, 0, 1, 1], [], []>} : vector<8x8xf32>, vector<8x8xf32>, vector<8x8xf32> -> vector<8x8xf32>
    %231 = vector.extract_strided_slice %193 {offsets = [0, 0], sizes = [8, 32], strides = [1, 1]} : vector<32x32xf32> to vector<8x32xf32>
    %cst_125 = arith.constant dense<0.000000e+00> : vector<8x32xf32>
    %232 = tpu.matmul %230, %231, %cst_125 {dimension_numbers = #tpu.dot_dimension_numbers<[1], [0], [0], [1], [0, 0, 1, 1], [], []>} : vector<8x8xf32>, vector<8x32xf32>, vector<8x32xf32> -> vector<8x32xf32>
    %233 = arith.addf %211, %232 : vector<8x32xf32>
    %234 = vector.extract_strided_slice %204 {offsets = [0, 8], sizes = [8, 8], strides = [1, 1]} : vector<8x32xf32> to vector<8x8xf32>
    %235 = vector.extract_strided_slice %207 {offsets = [0, 8], sizes = [8, 8], strides = [1, 1]} : vector<8x32xf32> to vector<8x8xf32>
    %236 = vector.extract_strided_slice %210 {offsets = [0, 8], sizes = [8, 8], strides = [1, 1]} : vector<8x32xf32> to vector<8x8xf32>
    %cst_126 = arith.constant dense<0.000000e+00> : vector<8x8xf32>
    %237 = tpu.matmul %234, %235, %cst_126 {dimension_numbers = #tpu.dot_dimension_numbers<[1], [1], [0], [0], [0, 0, 1, 0], [], []>} : vector<8x8xf32>, vector<8x8xf32>, vector<8x8xf32> -> vector<8x8xf32>
    %cst_127 = arith.constant 0.353553385 : f32
    %238 = vector.broadcast %cst_127 : f32 to vector<8x8xf32>
    %239 = arith.mulf %237, %238 : vector<8x8xf32>
    %240 = vector.broadcast %3 : vector<8x1xf32> to vector<8x8xf32>
    %241 = arith.addf %239, %240 : vector<8x8xf32>
    %cst_128 = arith.constant dense<0xFF800000> : vector<8xf32>
    %242 = vector.multi_reduction <maximumf>, %241, %cst_128 [1] : vector<8x8xf32> to vector<8xf32>
    %243 = vector.shape_cast %242 : vector<8xf32> to vector<8x1xf32>
    %244 = vector.broadcast %243 : vector<8x1xf32> to vector<8x8xf32>
    %245 = arith.subf %241, %244 : vector<8x8xf32>
    %246 = math.exp %245 : vector<8x8xf32>
    %cst_129 = arith.constant dense<0.000000e+00> : vector<8xf32>
    %247 = vector.multi_reduction <add>, %246, %cst_129 [1] : vector<8x8xf32> to vector<8xf32>
    %248 = vector.shape_cast %247 : vector<8xf32> to vector<8x1xf32>
    %249 = tpu.reciprocal %248 {approx = true} : vector<8x1xf32> -> vector<8x1xf32>
    %250 = vector.broadcast %249 : vector<8x1xf32> to vector<8x8xf32>
    %251 = arith.mulf %246, %250 : vector<8x8xf32>
    %cst_130 = arith.constant dense<0.000000e+00> : vector<8x8xf32>
    %252 = tpu.matmul %251, %236, %cst_130 {dimension_numbers = #tpu.dot_dimension_numbers<[1], [0], [0], [1], [0, 0, 1, 1], [], []>} : vector<8x8xf32>, vector<8x8xf32>, vector<8x8xf32> -> vector<8x8xf32>
    %253 = vector.extract_strided_slice %193 {offsets = [8, 0], sizes = [8, 32], strides = [1, 1]} : vector<32x32xf32> to vector<8x32xf32>
    %cst_131 = arith.constant dense<0.000000e+00> : vector<8x32xf32>
    %254 = tpu.matmul %252, %253, %cst_131 {dimension_numbers = #tpu.dot_dimension_numbers<[1], [0], [0], [1], [0, 0, 1, 1], [], []>} : vector<8x8xf32>, vector<8x32xf32>, vector<8x32xf32> -> vector<8x32xf32>
    %255 = arith.addf %233, %254 : vector<8x32xf32>
    %256 = vector.extract_strided_slice %204 {offsets = [0, 16], sizes = [8, 8], strides = [1, 1]} : vector<8x32xf32> to vector<8x8xf32>
    %257 = vector.extract_strided_slice %207 {offsets = [0, 16], sizes = [8, 8], strides = [1, 1]} : vector<8x32xf32> to vector<8x8xf32>
    %258 = vector.extract_strided_slice %210 {offsets = [0, 16], sizes = [8, 8], strides = [1, 1]} : vector<8x32xf32> to vector<8x8xf32>
    %cst_132 = arith.constant dense<0.000000e+00> : vector<8x8xf32>
    %259 = tpu.matmul %256, %257, %cst_132 {dimension_numbers = #tpu.dot_dimension_numbers<[1], [1], [0], [0], [0, 0, 1, 0], [], []>} : vector<8x8xf32>, vector<8x8xf32>, vector<8x8xf32> -> vector<8x8xf32>
    %cst_133 = arith.constant 0.353553385 : f32
    %260 = vector.broadcast %cst_133 : f32 to vector<8x8xf32>
    %261 = arith.mulf %259, %260 : vector<8x8xf32>
    %262 = vector.broadcast %3 : vector<8x1xf32> to vector<8x8xf32>
    %263 = arith.addf %261, %262 : vector<8x8xf32>
    %cst_134 = arith.constant dense<0xFF800000> : vector<8xf32>
    %264 = vector.multi_reduction <maximumf>, %263, %cst_134 [1] : vector<8x8xf32> to vector<8xf32>
    %265 = vector.shape_cast %264 : vector<8xf32> to vector<8x1xf32>
    %266 = vector.broadcast %265 : vector<8x1xf32> to vector<8x8xf32>
    %267 = arith.subf %263, %266 : vector<8x8xf32>
    %268 = math.exp %267 : vector<8x8xf32>
    %cst_135 = arith.constant dense<0.000000e+00> : vector<8xf32>
    %269 = vector.multi_reduction <add>, %268, %cst_135 [1] : vector<8x8xf32> to vector<8xf32>
    %270 = vector.shape_cast %269 : vector<8xf32> to vector<8x1xf32>
    %271 = tpu.reciprocal %270 {approx = true} : vector<8x1xf32> -> vector<8x1xf32>
    %272 = vector.broadcast %271 : vector<8x1xf32> to vector<8x8xf32>
    %273 = arith.mulf %268, %272 : vector<8x8xf32>
    %cst_136 = arith.constant dense<0.000000e+00> : vector<8x8xf32>
    %274 = tpu.matmul %273, %258, %cst_136 {dimension_numbers = #tpu.dot_dimension_numbers<[1], [0], [0], [1], [0, 0, 1, 1], [], []>} : vector<8x8xf32>, vector<8x8xf32>, vector<8x8xf32> -> vector<8x8xf32>
    %275 = vector.extract_strided_slice %193 {offsets = [16, 0], sizes = [8, 32], strides = [1, 1]} : vector<32x32xf32> to vector<8x32xf32>
    %cst_137 = arith.constant dense<0.000000e+00> : vector<8x32xf32>
    %276 = tpu.matmul %274, %275, %cst_137 {dimension_numbers = #tpu.dot_dimension_numbers<[1], [0], [0], [1], [0, 0, 1, 1], [], []>} : vector<8x8xf32>, vector<8x32xf32>, vector<8x32xf32> -> vector<8x32xf32>
    %277 = arith.addf %255, %276 : vector<8x32xf32>
    %278 = vector.extract_strided_slice %204 {offsets = [0, 24], sizes = [8, 8], strides = [1, 1]} : vector<8x32xf32> to vector<8x8xf32>
    %279 = vector.extract_strided_slice %207 {offsets = [0, 24], sizes = [8, 8], strides = [1, 1]} : vector<8x32xf32> to vector<8x8xf32>
    %280 = vector.extract_strided_slice %210 {offsets = [0, 24], sizes = [8, 8], strides = [1, 1]} : vector<8x32xf32> to vector<8x8xf32>
    %cst_138 = arith.constant dense<0.000000e+00> : vector<8x8xf32>
    %281 = tpu.matmul %278, %279, %cst_138 {dimension_numbers = #tpu.dot_dimension_numbers<[1], [1], [0], [0], [0, 0, 1, 0], [], []>} : vector<8x8xf32>, vector<8x8xf32>, vector<8x8xf32> -> vector<8x8xf32>
    %cst_139 = arith.constant 0.353553385 : f32
    %282 = vector.broadcast %cst_139 : f32 to vector<8x8xf32>
    %283 = arith.mulf %281, %282 : vector<8x8xf32>
    %284 = vector.broadcast %3 : vector<8x1xf32> to vector<8x8xf32>
    %285 = arith.addf %283, %284 : vector<8x8xf32>
    %cst_140 = arith.constant dense<0xFF800000> : vector<8xf32>
    %286 = vector.multi_reduction <maximumf>, %285, %cst_140 [1] : vector<8x8xf32> to vector<8xf32>
    %287 = vector.shape_cast %286 : vector<8xf32> to vector<8x1xf32>
    %288 = vector.broadcast %287 : vector<8x1xf32> to vector<8x8xf32>
    %289 = arith.subf %285, %288 : vector<8x8xf32>
    %290 = math.exp %289 : vector<8x8xf32>
    %cst_141 = arith.constant dense<0.000000e+00> : vector<8xf32>
    %291 = vector.multi_reduction <add>, %290, %cst_141 [1] : vector<8x8xf32> to vector<8xf32>
    %292 = vector.shape_cast %291 : vector<8xf32> to vector<8x1xf32>
    %293 = tpu.reciprocal %292 {approx = true} : vector<8x1xf32> -> vector<8x1xf32>
    %294 = vector.broadcast %293 : vector<8x1xf32> to vector<8x8xf32>
    %295 = arith.mulf %290, %294 : vector<8x8xf32>
    %cst_142 = arith.constant dense<0.000000e+00> : vector<8x8xf32>
    %296 = tpu.matmul %295, %280, %cst_142 {dimension_numbers = #tpu.dot_dimension_numbers<[1], [0], [0], [1], [0, 0, 1, 1], [], []>} : vector<8x8xf32>, vector<8x8xf32>, vector<8x8xf32> -> vector<8x8xf32>
    %297 = vector.extract_strided_slice %193 {offsets = [24, 0], sizes = [8, 32], strides = [1, 1]} : vector<32x32xf32> to vector<8x32xf32>
    %cst_143 = arith.constant dense<0.000000e+00> : vector<8x32xf32>
    %298 = tpu.matmul %296, %297, %cst_143 {dimension_numbers = #tpu.dot_dimension_numbers<[1], [0], [0], [1], [0, 0, 1, 1], [], []>} : vector<8x8xf32>, vector<8x32xf32>, vector<8x32xf32> -> vector<8x32xf32>
    %299 = arith.addf %277, %298 : vector<8x32xf32>
    %300 = vector.broadcast %201 : vector<1x32xf32> to vector<8x32xf32>
    %301 = arith.addf %299, %300 : vector<8x32xf32>
    %302 = arith.addf %185, %301 : vector<8x32xf32>
    %c1_144 = arith.constant 1 : index
    %c0_145 = arith.constant 0 : index
    %c0_146 = arith.constant 0 : index
    %303 = vector.load %arg11[%c1_144, %c0_145, %c0_146] : memref<2x1x32xf32, #tpu.memory_space<vmem>>, vector<1x1x32xf32>
    %304 = vector.shape_cast %303 : vector<1x1x32xf32> to vector<1x32xf32>
    %c1_147 = arith.constant 1 : index
    %c0_148 = arith.constant 0 : index
    %c0_149 = arith.constant 0 : index
    %305 = vector.load %arg12[%c1_147, %c0_148, %c0_149] : memref<2x1x32xf32, #tpu.memory_space<vmem>>, vector<1x1x32xf32>
    %306 = vector.shape_cast %305 : vector<1x1x32xf32> to vector<1x32xf32>
    %cst_150 = arith.constant dense<0.000000e+00> : vector<8xf32>
    %307 = vector.multi_reduction <add>, %302, %cst_150 [1] : vector<8x32xf32> to vector<8xf32>
    %308 = vector.shape_cast %307 : vector<8xf32> to vector<8x1xf32>
    %cst_151 = arith.constant 3.200000e+01 : f32
    %309 = vector.broadcast %cst_151 : f32 to vector<8x1xf32>
    %310 = arith.divf %308, %309 : vector<8x1xf32>
    %311 = vector.broadcast %310 : vector<8x1xf32> to vector<8x32xf32>
    %312 = arith.subf %302, %311 : vector<8x32xf32>
    %313 = arith.mulf %312, %312 : vector<8x32xf32>
    %cst_152 = arith.constant dense<0.000000e+00> : vector<8xf32>
    %314 = vector.multi_reduction <add>, %313, %cst_152 [1] : vector<8x32xf32> to vector<8xf32>
    %315 = vector.shape_cast %314 : vector<8xf32> to vector<8x1xf32>
    %cst_153 = arith.constant 3.200000e+01 : f32
    %316 = vector.broadcast %cst_153 : f32 to vector<8x1xf32>
    %317 = arith.divf %315, %316 : vector<8x1xf32>
    %cst_154 = arith.constant 9.99999974E-6 : f32
    %318 = vector.broadcast %cst_154 : f32 to vector<8x1xf32>
    %319 = arith.addf %317, %318 : vector<8x1xf32>
    %320 = math.rsqrt %319 : vector<8x1xf32>
    %321 = vector.broadcast %320 : vector<8x1xf32> to vector<8x32xf32>
    %322 = arith.mulf %312, %321 : vector<8x32xf32>
    %323 = vector.broadcast %304 : vector<1x32xf32> to vector<8x32xf32>
    %324 = arith.mulf %322, %323 : vector<8x32xf32>
    %325 = vector.broadcast %306 : vector<1x32xf32> to vector<8x32xf32>
    %326 = arith.addf %324, %325 : vector<8x32xf32>
    %c1_155 = arith.constant 1 : index
    %c0_156 = arith.constant 0 : index
    %c0_157 = arith.constant 0 : index
    %327 = vector.load %arg13[%c1_155, %c0_156, %c0_157] : memref<2x32x128xf32, #tpu.memory_space<vmem>>, vector<1x32x128xf32>
    %328 = vector.shape_cast %327 : vector<1x32x128xf32> to vector<32x128xf32>
    %cst_158 = arith.constant dense<0.000000e+00> : vector<8x128xf32>
    %329 = tpu.matmul %326, %328, %cst_158 {dimension_numbers = #tpu.dot_dimension_numbers<[1], [0], [0], [1], [0, 0, 1, 1], [], []>} : vector<8x32xf32>, vector<32x128xf32>, vector<8x128xf32> -> vector<8x128xf32>
    %c1_159 = arith.constant 1 : index
    %c0_160 = arith.constant 0 : index
    %c0_161 = arith.constant 0 : index
    %330 = vector.load %arg14[%c1_159, %c0_160, %c0_161] : memref<2x1x128xf32, #tpu.memory_space<vmem>>, vector<1x1x128xf32>
    %331 = vector.shape_cast %330 : vector<1x1x128xf32> to vector<1x128xf32>
    %332 = vector.broadcast %331 : vector<1x128xf32> to vector<8x128xf32>
    %333 = arith.addf %329, %332 : vector<8x128xf32>
    %cst_162 = arith.constant 0.000000e+00 : f32
    %334 = vector.broadcast %cst_162 : f32 to vector<8x128xf32>
    %335 = arith.maximumf %333, %334 : vector<8x128xf32>
    %c1_163 = arith.constant 1 : index
    %c0_164 = arith.constant 0 : index
    %c0_165 = arith.constant 0 : index
    %336 = vector.load %arg15[%c1_163, %c0_164, %c0_165] : memref<2x128x32xf32, #tpu.memory_space<vmem>>, vector<1x128x32xf32>
    %337 = vector.shape_cast %336 : vector<1x128x32xf32> to vector<128x32xf32>
    %cst_166 = arith.constant dense<0.000000e+00> : vector<8x32xf32>
    %338 = tpu.matmul %335, %337, %cst_166 {dimension_numbers = #tpu.dot_dimension_numbers<[1], [0], [0], [1], [0, 0, 1, 1], [], []>} : vector<8x128xf32>, vector<128x32xf32>, vector<8x32xf32> -> vector<8x32xf32>
    %c1_167 = arith.constant 1 : index
    %c0_168 = arith.constant 0 : index
    %c0_169 = arith.constant 0 : index
    %339 = vector.load %arg16[%c1_167, %c0_168, %c0_169] : memref<2x1x32xf32, #tpu.memory_space<vmem>>, vector<1x1x32xf32>
    %340 = vector.shape_cast %339 : vector<1x1x32xf32> to vector<1x32xf32>
    %341 = vector.broadcast %340 : vector<1x32xf32> to vector<8x32xf32>
    %342 = arith.addf %338, %341 : vector<8x32xf32>
    %343 = arith.addf %326, %342 : vector<8x32xf32>
    %c1_170 = arith.constant 1 : index
    %c0_171 = arith.constant 0 : index
    %c0_172 = arith.constant 0 : index
    %344 = vector.load %arg17[%c1_170, %c0_171, %c0_172] : memref<2x1x32xf32, #tpu.memory_space<vmem>>, vector<1x1x32xf32>
    %345 = vector.shape_cast %344 : vector<1x1x32xf32> to vector<1x32xf32>
    %c1_173 = arith.constant 1 : index
    %c0_174 = arith.constant 0 : index
    %c0_175 = arith.constant 0 : index
    %346 = vector.load %arg18[%c1_173, %c0_174, %c0_175] : memref<2x1x32xf32, #tpu.memory_space<vmem>>, vector<1x1x32xf32>
    %347 = vector.shape_cast %346 : vector<1x1x32xf32> to vector<1x32xf32>
    %cst_176 = arith.constant dense<0.000000e+00> : vector<8xf32>
    %348 = vector.multi_reduction <add>, %343, %cst_176 [1] : vector<8x32xf32> to vector<8xf32>
    %349 = vector.shape_cast %348 : vector<8xf32> to vector<8x1xf32>
    %cst_177 = arith.constant 3.200000e+01 : f32
    %350 = vector.broadcast %cst_177 : f32 to vector<8x1xf32>
    %351 = arith.divf %349, %350 : vector<8x1xf32>
    %352 = vector.broadcast %351 : vector<8x1xf32> to vector<8x32xf32>
    %353 = arith.subf %343, %352 : vector<8x32xf32>
    %354 = arith.mulf %353, %353 : vector<8x32xf32>
    %cst_178 = arith.constant dense<0.000000e+00> : vector<8xf32>
    %355 = vector.multi_reduction <add>, %354, %cst_178 [1] : vector<8x32xf32> to vector<8xf32>
    %356 = vector.shape_cast %355 : vector<8xf32> to vector<8x1xf32>
    %cst_179 = arith.constant 3.200000e+01 : f32
    %357 = vector.broadcast %cst_179 : f32 to vector<8x1xf32>
    %358 = arith.divf %356, %357 : vector<8x1xf32>
    %cst_180 = arith.constant 9.99999974E-6 : f32
    %359 = vector.broadcast %cst_180 : f32 to vector<8x1xf32>
    %360 = arith.addf %358, %359 : vector<8x1xf32>
    %361 = math.rsqrt %360 : vector<8x1xf32>
    %362 = vector.broadcast %361 : vector<8x1xf32> to vector<8x32xf32>
    %363 = arith.mulf %353, %362 : vector<8x32xf32>
    %364 = vector.broadcast %345 : vector<1x32xf32> to vector<8x32xf32>
    %365 = arith.mulf %363, %364 : vector<8x32xf32>
    %366 = vector.broadcast %347 : vector<1x32xf32> to vector<8x32xf32>
    %367 = arith.addf %365, %366 : vector<8x32xf32>
    %c0_181 = arith.constant 0 : index
    %c0_182 = arith.constant 0 : index
    %368 = vector.load %arg19[%c0_181, %c0_182] : memref<32x128xf32, #tpu.memory_space<vmem>>, vector<32x128xf32>
    %cst_183 = arith.constant dense<0.000000e+00> : vector<8x128xf32>
    %369 = tpu.matmul %367, %368, %cst_183 {dimension_numbers = #tpu.dot_dimension_numbers<[1], [0], [0], [1], [0, 0, 1, 1], [], []>} : vector<8x32xf32>, vector<32x128xf32>, vector<8x128xf32> -> vector<8x128xf32>
    %c0_184 = arith.constant 0 : index
    %c0_185 = arith.constant 0 : index
    %370 = vector.load %arg20[%c0_184, %c0_185] : memref<1x128xf32, #tpu.memory_space<vmem>>, vector<1x128xf32>
    %371 = vector.broadcast %370 : vector<1x128xf32> to vector<8x128xf32>
    %372 = arith.addf %369, %371 : vector<8x128xf32>
    %c0_186 = arith.constant 0 : index
    %c0_187 = arith.constant 0 : index
    %c0_188 = arith.constant 0 : index
    %373 = vector.load %arg21[%c0_186, %c0_187, %c0_188] : memref<1x8x128xf32, #tpu.memory_space<vmem>>, vector<1x8x128xf32>
    %374 = vector.shape_cast %373 : vector<1x8x128xf32> to vector<8x128xf32>
    %375 = vector.shape_cast %372 : vector<8x128xf32> to vector<1x8x128xf32>
    tpu.vector_store %arg21[%c0_186, %c0_187, %c0_188], %375 {strides = array<i32>} : memref<1x8x128xf32, #tpu.memory_space<vmem>>, vector<1x8x128xf32>,
    return
  }
  func.func @transform_0(%arg0: i32) -> (i32, i32, i32) {
    %c0_i32 = arith.constant 0 : i32
    %c0_i32_0 = arith.constant 0 : i32
    %c0_i32_1 = arith.constant 0 : i32
    return %arg0, %c0_i32, %c0_i32_0 : i32, i32, i32
  }
  func.func @transform_1(%arg0: i32) -> (i32, i32, i32) {
    %c0_i32 = arith.constant 0 : i32
    %c0_i32_0 = arith.constant 0 : i32
    %c0_i32_1 = arith.constant 0 : i32
    return %arg0, %c0_i32, %c0_i32_0 : i32, i32, i32
  }
  func.func @transform_2(%arg0: i32) -> (i32, i32, i32) {
    %c0_i32 = arith.constant 0 : i32
    %c0_i32_0 = arith.constant 0 : i32
    %c0_i32_1 = arith.constant 0 : i32
    %c0_i32_2 = arith.constant 0 : i32
    return %c0_i32, %c0_i32_0, %c0_i32_1 : i32, i32, i32
  }
  func.func @transform_3(%arg0: i32) -> (i32, i32, i32) {
    %c0_i32 = arith.constant 0 : i32
    %c0_i32_0 = arith.constant 0 : i32
    %c0_i32_1 = arith.constant 0 : i32
    %c0_i32_2 = arith.constant 0 : i32
    return %c0_i32, %c0_i32_0, %c0_i32_1 : i32, i32, i32
  }
  func.func @transform_4(%arg0: i32) -> (i32, i32, i32) {
    %c0_i32 = arith.constant 0 : i32
    %c0_i32_0 = arith.constant 0 : i32
    %c0_i32_1 = arith.constant 0 : i32
    %c0_i32_2 = arith.constant 0 : i32
    return %c0_i32, %c0_i32_0, %c0_i32_1 : i32, i32, i32
  }
  func.func @transform_5(%arg0: i32) -> (i32, i32, i32) {
    %c0_i32 = arith.constant 0 : i32
    %c0_i32_0 = arith.constant 0 : i32
    %c0_i32_1 = arith.constant 0 : i32
    %c0_i32_2 = arith.constant 0 : i32
    return %c0_i32, %c0_i32_0, %c0_i32_1 : i32, i32, i32
  }
  func.func @transform_6(%arg0: i32) -> (i32, i32, i32) {
    %c0_i32 = arith.constant 0 : i32
    %c0_i32_0 = arith.constant 0 : i32
    %c0_i32_1 = arith.constant 0 : i32
    %c0_i32_2 = arith.constant 0 : i32
    return %c0_i32, %c0_i32_0, %c0_i32_1 : i32, i32, i32
  }
  func.func @transform_7(%arg0: i32) -> (i32, i32, i32) {
    %c0_i32 = arith.constant 0 : i32
    %c0_i32_0 = arith.constant 0 : i32
    %c0_i32_1 = arith.constant 0 : i32
    %c0_i32_2 = arith.constant 0 : i32
    return %c0_i32, %c0_i32_0, %c0_i32_1 : i32, i32, i32
  }
  func.func @transform_8(%arg0: i32) -> (i32, i32, i32) {
    %c0_i32 = arith.constant 0 : i32
    %c0_i32_0 = arith.constant 0 : i32
    %c0_i32_1 = arith.constant 0 : i32
    %c0_i32_2 = arith.constant 0 : i32
    return %c0_i32, %c0_i32_0, %c0_i32_1 : i32, i32, i32
  }
  func.func @transform_9(%arg0: i32) -> (i32, i32, i32) {
    %c0_i32 = arith.constant 0 : i32
    %c0_i32_0 = arith.constant 0 : i32
    %c0_i32_1 = arith.constant 0 : i32
    %c0_i32_2 = arith.constant 0 : i32
    return %c0_i32, %c0_i32_0, %c0_i32_1 : i32, i32, i32
  }
  func.func @transform_10(%arg0: i32) -> (i32, i32, i32) {
    %c0_i32 = arith.constant 0 : i32
    %c0_i32_0 = arith.constant 0 : i32
    %c0_i32_1 = arith.constant 0 : i32
    %c0_i32_2 = arith.constant 0 : i32
    return %c0_i32, %c0_i32_0, %c0_i32_1 : i32, i32, i32
  }
  func.func @transform_11(%arg0: i32) -> (i32, i32, i32) {
    %c0_i32 = arith.constant 0 : i32
    %c0_i32_0 = arith.constant 0 : i32
    %c0_i32_1 = arith.constant 0 : i32
    %c0_i32_2 = arith.constant 0 : i32
    return %c0_i32, %c0_i32_0, %c0_i32_1 : i32, i32, i32
  }
  func.func @transform_12(%arg0: i32) -> (i32, i32, i32) {
    %c0_i32 = arith.constant 0 : i32
    %c0_i32_0 = arith.constant 0 : i32
    %c0_i32_1 = arith.constant 0 : i32
    %c0_i32_2 = arith.constant 0 : i32
    return %c0_i32, %c0_i32_0, %c0_i32_1 : i32, i32, i32
  }
  func.func @transform_13(%arg0: i32) -> (i32, i32, i32) {
    %c0_i32 = arith.constant 0 : i32
    %c0_i32_0 = arith.constant 0 : i32
    %c0_i32_1 = arith.constant 0 : i32
    %c0_i32_2 = arith.constant 0 : i32
    return %c0_i32, %c0_i32_0, %c0_i32_1 : i32, i32, i32
  }
  func.func @transform_14(%arg0: i32) -> (i32, i32, i32) {
    %c0_i32 = arith.constant 0 : i32
    %c0_i32_0 = arith.constant 0 : i32
    %c0_i32_1 = arith.constant 0 : i32
    %c0_i32_2 = arith.constant 0 : i32
    return %c0_i32, %c0_i32_0, %c0_i32_1 : i32, i32, i32
  }
  func.func @transform_15(%arg0: i32) -> (i32, i32, i32) {
    %c0_i32 = arith.constant 0 : i32
    %c0_i32_0 = arith.constant 0 : i32
    %c0_i32_1 = arith.constant 0 : i32
    %c0_i32_2 = arith.constant 0 : i32
    return %c0_i32, %c0_i32_0, %c0_i32_1 : i32, i32, i32
  }
  func.func @transform_16(%arg0: i32) -> (i32, i32, i32) {
    %c0_i32 = arith.constant 0 : i32
    %c0_i32_0 = arith.constant 0 : i32
    %c0_i32_1 = arith.constant 0 : i32
    %c0_i32_2 = arith.constant 0 : i32
    return %c0_i32, %c0_i32_0, %c0_i32_1 : i32, i32, i32
  }
  func.func @transform_17(%arg0: i32) -> (i32, i32, i32) {
    %c0_i32 = arith.constant 0 : i32
    %c0_i32_0 = arith.constant 0 : i32
    %c0_i32_1 = arith.constant 0 : i32
    %c0_i32_2 = arith.constant 0 : i32
    return %c0_i32, %c0_i32_0, %c0_i32_1 : i32, i32, i32
  }
  func.func @transform_18(%arg0: i32) -> (i32, i32) {
    %c0_i32 = arith.constant 0 : i32
    %c0_i32_0 = arith.constant 0 : i32
    %c0_i32_1 = arith.constant 0 : i32
    return %c0_i32, %c0_i32_0 : i32, i32
  }
  func.func @transform_19(%arg0: i32) -> (i32, i32) {
    %c0_i32 = arith.constant 0 : i32
    %c0_i32_0 = arith.constant 0 : i32
    %c0_i32_1 = arith.constant 0 : i32
    return %c0_i32, %c0_i32_0 : i32, i32
  }
  func.func @transform_20(%arg0: i32) -> (i32, i32, i32) {
    %c0_i32 = arith.constant 0 : i32
    %c0_i32_0 = arith.constant 0 : i32
    %c0_i32_1 = arith.constant 0 : i32
    return %arg0, %c0_i32, %c0_i32_0 : i32, i32, i32
  }
}

</mosaic_0001>

<llo_original>
// kernel: model_forward.1
$region0: #{model_forward.1}
  #allocation0 [shape = 'u32[]', space=smem, size = 0x4, offset = 0x4, fixed_abs, tag = 'smem constant byte address 0x4 - core index']
  #allocation1 [shape = 'u32[144,128]{1,0:T(1,128)}', space=vmem, size = 0x12000, scoped, tag = 'internal scratch']
  %s0 = inlined_call_operand.vmem [shape: f32[2,8,32], index: 0, kind: input, shape index: {}]
  %s1 = inlined_call_operand.vmem [shape: f32[2,8,1], index: 1, kind: input, shape index: {}]
  %s2 = inlined_call_operand.vmem [shape: f32[2,32,32], index: 2, kind: input, shape index: {}]
  %s3 = inlined_call_operand.vmem [shape: f32[2,1,32], index: 3, kind: input, shape index: {}]
  %s4 = inlined_call_operand.vmem [shape: f32[2,32,32], index: 4, kind: input, shape index: {}]
  %s5 = inlined_call_operand.vmem [shape: f32[2,1,32], index: 5, kind: input, shape index: {}]
  %s6 = inlined_call_operand.vmem [shape: f32[2,32,32], index: 6, kind: input, shape index: {}]
  %s7 = inlined_call_operand.vmem [shape: f32[2,1,32], index: 7, kind: input, shape index: {}]
  %s8 = inlined_call_operand.vmem [shape: f32[2,32,32], index: 8, kind: input, shape index: {}]
  %s9 = inlined_call_operand.vmem [shape: f32[2,1,32], index: 9, kind: input, shape index: {}]
  %s10 = inlined_call_operand.vmem [shape: f32[2,1,32], index: 10, kind: input, shape index: {}]
  %s11 = inlined_call_operand.vmem [shape: f32[2,1,32], index: 11, kind: input, shape index: {}]
  %s12 = inlined_call_operand.vmem [shape: f32[2,32,128], index: 12, kind: input, shape index: {}]
  %s13 = inlined_call_operand.vmem [shape: f32[2,1,128], index: 13, kind: input, shape index: {}]
  %s14 = inlined_call_operand.vmem [shape: f32[2,128,32], index: 14, kind: input, shape index: {}]
  %s15 = inlined_call_operand.vmem [shape: f32[2,1,32], index: 15, kind: input, shape index: {}]
  %s16 = inlined_call_operand.vmem [shape: f32[2,1,32], index: 16, kind: input, shape index: {}]
  %s17 = inlined_call_operand.vmem [shape: f32[2,1,32], index: 17, kind: input, shape index: {}]
  %s18 = inlined_call_operand.vmem [shape: f32[32,128], index: 18, kind: input, shape index: {}]
  %s19 = inlined_call_operand.vmem [shape: f32[1,128], index: 19, kind: input, shape index: {}]
  %s20 = inlined_call_operand.vmem [shape: f32[2,8,128], index: 20, kind: output, shape index: {}]
  %s21 = sld [smem:[#allocation0]]
  $region113: #{model_forward.1} parent=0
    _
  %s23 = ssub.s32 1, %s21
  %s24 = scalar_select 0, %s23, %s21
  loop: start=0, step=1, limit=4
  $region2: #{model_forward.1} parent=0 // loop_pre_header
    _
  $region3: #{model_forward.1} parent=0 // loop_header
    %s26 = sphi 0, %s30
    %p27 = scmp.ge.s32.totalorder %s26, 4
    %s36 = sphi 0, %s38
    %s39 = sphi 0, %s36
    %s40 = sphi 0, %s39
    %s56 = sphi 0, %s40
    %s62 = sphi 0, %s64
    %s65 = sphi 0, %s62
    %s66 = sphi 0, %s65
    %s82 = sphi 0, %s66
    %s86 = sphi 0, %s86
    %s88 = sphi 0, %s86
    %s89 = sphi 0, %s88
    %s103 = sphi 0, %s89
    %s107 = sphi 0, %s107
    %s109 = sphi 0, %s107
    %s110 = sphi 0, %s109
    %s124 = sphi 0, %s110
    %s128 = sphi 0, %s128
    %s130 = sphi 0, %s128
    %s131 = sphi 0, %s130
    %s145 = sphi 0, %s131
    %s149 = sphi 0, %s149
    %s151 = sphi 0, %s149
    %s152 = sphi 0, %s151
    %s166 = sphi 0, %s152
    %s170 = sphi 0, %s170
    %s172 = sphi 0, %s170
    %s173 = sphi 0, %s172
    %s187 = sphi 0, %s173
    %s191 = sphi 0, %s191
    %s193 = sphi 0, %s191
    %s194 = sphi 0, %s193
    %s208 = sphi 0, %s194
    %s212 = sphi 0, %s212
    %s214 = sphi 0, %s212
    %s215 = sphi 0, %s214
    %s229 = sphi 0, %s215
    %s233 = sphi 0, %s233
    %s235 = sphi 0, %s233
    %s236 = sphi 0, %s235
    %s250 = sphi 0, %s236
    %s254 = sphi 0, %s254
    %s256 = sphi 0, %s254
    %s257 = sphi 0, %s256
    %s271 = sphi 0, %s257
    %s275 = sphi 0, %s275
    %s277 = sphi 0, %s275
    %s278 = sphi 0, %s277
    %s292 = sphi 0, %s278
    %s296 = sphi 0, %s296
    %s298 = sphi 0, %s296
    %s299 = sphi 0, %s298
    %s313 = sphi 0, %s299
    %s317 = sphi 0, %s317
    %s319 = sphi 0, %s317
    %s320 = sphi 0, %s319
    %s334 = sphi 0, %s320
    %s338 = sphi 0, %s338
    %s340 = sphi 0, %s338
    %s341 = sphi 0, %s340
    %s355 = sphi 0, %s341
    %s359 = sphi 0, %s359
    %s361 = sphi 0, %s359
    %s362 = sphi 0, %s361
    %s376 = sphi 0, %s362
    %s380 = sphi 0, %s380
    %s382 = sphi 0, %s380
    %s383 = sphi 0, %s382
    %s397 = sphi 0, %s383
    %s401 = sphi 0, %s401
    %s403 = sphi 0, %s401
    %s404 = sphi 0, %s403
    %s418 = sphi 0, %s404
    %s422 = sphi 0, %s422
    %s424 = sphi 0, %s422
    %s425 = sphi 0, %s424
    %s439 = sphi 0, %s425
    %s443 = sphi 0, %s443
    %s445 = sphi 0, %s443
    %s446 = sphi 0, %s445
    %s460 = sphi 0, %s446
    %s466 = sphi 0, %s468
    %s469 = sphi 0, %s466
    %s470 = sphi 0, %s469
    %s486 = sphi 0, %s470
  $region4: #{model_forward.1} parent=0 // loop_header_branch
    %29 = sbr.rel (%p27) target = $region8
  $region5: #{model_forward.1} parent=0 // loop_body
    %s31 = ssub.s32 %s26, 1
    %s32 = ssub.s32 %s26, 2
    %s33 = sadd.s32 %s26, 1
    %s34 = ssub.s32 %s26, %s33
    %p35 = scmp.eq.s32.totalorder %s34, 0
    %s37 = sadd.s32 %s36, 1
    %s38 = scalar_select %p35, %s36, %s37
    %p41 = pneg %p35
    %p42 = scmp.eq.s32.totalorder %s26, 1
    %p43 = por %p41, %p42
    %p44 = scmp.ne.s32.totalorder %s36, %s39
    %p45 = scmp.eq.s32.totalorder %s26, 0
    %p46 = por %p44, %p45
    %p47 = scmp.ne.s32.totalorder %s36, %s39
    %p48 = scmp.eq.s32.totalorder %s31, 1
    %p49 = por %p47, %p48
    %p50 = scmp.ne.s32.totalorder %s39, %s40
    %p51 = scmp.eq.s32.totalorder %s31, 0
    %p52 = por %p50, %p51
    %p53 = scmp.ne.s32.totalorder %s39, %s40
    %p54 = scmp.eq.s32.totalorder %s32, 1
    %p55 = por %p53, %p54
    %p57 = scmp.ne.s32.totalorder %s40, %s56
    %p58 = scmp.eq.s32.totalorder %s32, 0
    %p59 = por %p57, %p58
    %s60 = ssub.s32 %s26, %s33
    %p61 = scmp.eq.s32.totalorder %s60, 0
    %s63 = sadd.s32 %s62, 1
    %s64 = scalar_select %p61, %s62, %s63
    %p67 = pneg %p61
    %p68 = scmp.eq.s32.totalorder %s26, 1
    %p69 = por %p67, %p68
    %p70 = scmp.ne.s32.totalorder %s62, %s65
    %p71 = scmp.eq.s32.totalorder %s26, 0
    %p72 = por %p70, %p71
    %p73 = scmp.ne.s32.totalorder %s62, %s65
    %p74 = scmp.eq.s32.totalorder %s31, 1
    %p75 = por %p73, %p74
    %p76 = scmp.ne.s32.totalorder %s65, %s66
    %p77 = scmp.eq.s32.totalorder %s31, 0
    %p78 = por %p76, %p77
    %p79 = scmp.ne.s32.totalorder %s65, %s66
    %p80 = scmp.eq.s32.totalorder %s32, 1
    %p81 = por %p79, %p80
    %p83 = scmp.ne.s32.totalorder %s66, %s82
    %p84 = scmp.eq.s32.totalorder %s32, 0
    %p85 = por %p83, %p84
    %s87 = sadd.s32 %s86, 1
    %p90 = scmp.eq.s32.totalorder %s26, 1
    %p91 = scmp.ne.s32.totalorder %s86, %s88
    %p92 = scmp.eq.s32.totalorder %s26, 0
    %p93 = por %p91, %p92
    %p94 = scmp.ne.s32.totalorder %s86, %s88
    %p95 = scmp.eq.s32.totalorder %s31, 1
    %p96 = por %p94, %p95
    %p97 = scmp.ne.s32.totalorder %s88, %s89
    %p98 = scmp.eq.s32.totalorder %s31, 0
    %p99 = por %p97, %p98
    %p100 = scmp.ne.s32.totalorder %s88, %s89
    %p101 = scmp.eq.s32.totalorder %s32, 1
    %p102 = por %p100, %p101
    %p104 = scmp.ne.s32.totalorder %s89, %s103
    %p105 = scmp.eq.s32.totalorder %s32, 0
    %p106 = por %p104, %p105
    %s108 = sadd.s32 %s107, 1
    %p111 = scmp.eq.s32.totalorder %s26, 1
    %p112 = scmp.ne.s32.totalorder %s107, %s109
    %p113 = scmp.eq.s32.totalorder %s26, 0
    %p114 = por %p112, %p113
    %p115 = scmp.ne.s32.totalorder %s107, %s109
    %p116 = scmp.eq.s32.totalorder %s31, 1
    %p117 = por %p115, %p116
    %p118 = scmp.ne.s32.totalorder %s109, %s110
    %p119 = scmp.eq.s32.totalorder %s31, 0
    %p120 = por %p118, %p119
    %p121 = scmp.ne.s32.totalorder %s109, %s110
    %p122 = scmp.eq.s32.totalorder %s32, 1
    %p123 = por %p121, %p122
    %p125 = scmp.ne.s32.totalorder %s110, %s124
    %p126 = scmp.eq.s32.totalorder %s32, 0
    %p127 = por %p125, %p126
    %s129 = sadd.s32 %s128, 1
    %p132 = scmp.eq.s32.totalorder %s26, 1
    %p133 = scmp.ne.s32.totalorder %s128, %s130
    %p134 = scmp.eq.s32.totalorder %s26, 0
    %p135 = por %p133, %p134
    %p136 = scmp.ne.s32.totalorder %s128, %s130
    %p137 = scmp.eq.s32.totalorder %s31, 1
    %p138 = por %p136, %p137
    %p139 = scmp.ne.s32.totalorder %s130, %s131
    %p140 = scmp.eq.s32.totalorder %s31, 0
    %p141 = por %p139, %p140
    %p142 = scmp.ne.s32.totalorder %s130, %s131
    %p143 = scmp.eq.s32.totalorder %s32, 1
    %p144 = por %p142, %p143
    %p146 = scmp.ne.s32.totalorder %s131, %s145
    %p147 = scmp.eq.s32.totalorder %s32, 0
    %p148 = por %p146, %p147
    %s150 = sadd.s32 %s149, 1
    %p153 = scmp.eq.s32.totalorder %s26, 1
    %p154 = scmp.ne.s32.totalorder %s149, %s151
    %p155 = scmp.eq.s32.totalorder %s26, 0
    %p156 = por %p154, %p155
    %p157 = scmp.ne.s32.totalorder %s149, %s151
    %p158 = scmp.eq.s32.totalorder %s31, 1
    %p159 = por %p157, %p158
    %p160 = scmp.ne.s32.totalorder %s151, %s152
    %p161 = scmp.eq.s32.totalorder %s31, 0
    %p162 = por %p160, %p161
    %p163 = scmp.ne.s32.totalorder %s151, %s152
    %p164 = scmp.eq.s32.totalorder %s32, 1
    %p165 = por %p163, %p164
    %p167 = scmp.ne.s32.totalorder %s152, %s166
    %p168 = scmp.eq.s32.totalorder %s32, 0
    %p169 = por %p167, %p168
    %s171 = sadd.s32 %s170, 1
    %p174 = scmp.eq.s32.totalorder %s26, 1
    %p175 = scmp.ne.s32.totalorder %s170, %s172
    %p176 = scmp.eq.s32.totalorder %s26, 0
    %p177 = por %p175, %p176
    %p178 = scmp.ne.s32.totalorder %s170, %s172
    %p179 = scmp.eq.s32.totalorder %s31, 1
    %p180 = por %p178, %p179
    %p181 = scmp.ne.s32.totalorder %s172, %s173
    %p182 = scmp.eq.s32.totalorder %s31, 0
    %p183 = por %p181, %p182
    %p184 = scmp.ne.s32.totalorder %s172, %s173
    %p185 = scmp.eq.s32.totalorder %s32, 1
    %p186 = por %p184, %p185
    %p188 = scmp.ne.s32.totalorder %s173, %s187
    %p189 = scmp.eq.s32.totalorder %s32, 0
    %p190 = por %p188, %p189
    %s192 = sadd.s32 %s191, 1
    %p195 = scmp.eq.s32.totalorder %s26, 1
    %p196 = scmp.ne.s32.totalorder %s191, %s193
    %p197 = scmp.eq.s32.totalorder %s26, 0
    %p198 = por %p196, %p197
    %p199 = scmp.ne.s32.totalorder %s191, %s193
    %p200 = scmp.eq.s32.totalorder %s31, 1
    %p201 = por %p199, %p200
    %p202 = scmp.ne.s32.totalorder %s193, %s194
    %p203 = scmp.eq.s32.totalorder %s31, 0
    %p204 = por %p202, %p203
    %p205 = scmp.ne.s32.totalorder %s193, %s194
    %p206 = scmp.eq.s32.totalorder %s32, 1
    %p207 = por %p205, %p206
    %p209 = scmp.ne.s32.totalorder %s194, %s208
    %p210 = scmp.eq.s32.totalorder %s32, 0
    %p211 = por %p209, %p210
    %s213 = sadd.s32 %s212, 1
    %p216 = scmp.eq.s32.totalorder %s26, 1
    %p217 = scmp.ne.s32.totalorder %s212, %s214
    %p218 = scmp.eq.s32.totalorder %s26, 0
    %p219 = por %p217, %p218
    %p220 = scmp.ne.s32.totalorder %s212, %s214
    %p221 = scmp.eq.s32.totalorder %s31, 1
    %p222 = por %p220, %p221
    %p223 = scmp.ne.s32.totalorder %s214, %s215
    %p224 = scmp.eq.s32.totalorder %s31, 0
    %p225 = por %p223, %p224
    %p226 = scmp.ne.s32.totalorder %s214, %s215
    %p227 = scmp.eq.s32.totalorder %s32, 1
    %p228 = por %p226, %p227
    %p230 = scmp.ne.s32.totalorder %s215, %s229
    %p231 = scmp.eq.s32.totalorder %s32, 0
    %p232 = por %p230, %p231
    %s234 = sadd.s32 %s233, 1
    %p237 = scmp.eq.s32.totalorder %s26, 1
    %p238 = scmp.ne.s32.totalorder %s233, %s235
    %p239 = scmp.eq.s32.totalorder %s26, 0
    %p240 = por %p238, %p239
    %p241 = scmp.ne.s32.totalorder %s233, %s235
    %p242 = scmp.eq.s32.totalorder %s31, 1
    %p243 = por %p241, %p242
    %p244 = scmp.ne.s32.totalorder %s235, %s236
    %p245 = scmp.eq.s32.totalorder %s31, 0
    %p246 = por %p244, %p245
    %p247 = scmp.ne.s32.totalorder %s235, %s236
    %p248 = scmp.eq.s32.totalorder %s32, 1
    %p249 = por %p247, %p248
    %p251 = scmp.ne.s32.totalorder %s236, %s250
    %p252 = scmp.eq.s32.totalorder %s32, 0
    %p253 = por %p251, %p252
    %s255 = sadd.s32 %s254, 1
    %p258 = scmp.eq.s32.totalorder %s26, 1
    %p259 = scmp.ne.s32.totalorder %s254, %s256
    %p260 = scmp.eq.s32.totalorder %s26, 0
    %p261 = por %p259, %p260
    %p262 = scmp.ne.s32.totalorder %s254, %s256
    %p263 = scmp.eq.s32.totalorder %s31, 1
    %p264 = por %p262, %p263
    %p265 = scmp.ne.s32.totalorder %s256, %s257
    %p266 = scmp.eq.s32.totalorder %s31, 0
    %p267 = por %p265, %p266
    %p268 = scmp.ne.s32.totalorder %s256, %s257
    %p269 = scmp.eq.s32.totalorder %s32, 1
    %p270 = por %p268, %p269
    %p272 = scmp.ne.s32.totalorder %s257, %s271
    %p273 = scmp.eq.s32.totalorder %s32, 0
    %p274 = por %p272, %p273
    %s276 = sadd.s32 %s275, 1
    %p279 = scmp.eq.s32.totalorder %s26, 1
    %p280 = scmp.ne.s32.totalorder %s275, %s277
    %p281 = scmp.eq.s32.totalorder %s26, 0
    %p282 = por %p280, %p281
    %p283 = scmp.ne.s32.totalorder %s275, %s277
    %p284 = scmp.eq.s32.totalorder %s31, 1
    %p285 = por %p283, %p284
    %p286 = scmp.ne.s32.totalorder %s277, %s278
    %p287 = scmp.eq.s32.totalorder %s31, 0
    %p288 = por %p286, %p287
    %p289 = scmp.ne.s32.totalorder %s277, %s278
    %p290 = scmp.eq.s32.totalorder %s32, 1
    %p291 = por %p289, %p290
    %p293 = scmp.ne.s32.totalorder %s278, %s292
    %p294 = scmp.eq.s32.totalorder %s32, 0
    %p295 = por %p293, %p294
    %s297 = sadd.s32 %s296, 1
    %p300 = scmp.eq.s32.totalorder %s26, 1
    %p301 = scmp.ne.s32.totalorder %s296, %s298
    %p302 = scmp.eq.s32.totalorder %s26, 0
    %p303 = por %p301, %p302
    %p304 = scmp.ne.s32.totalorder %s296, %s298
    %p305 = scmp.eq.s32.totalorder %s31, 1
    %p306 = por %p304, %p305
    %p307 = scmp.ne.s32.totalorder %s298, %s299
    %p308 = scmp.eq.s32.totalorder %s31, 0
    %p309 = por %p307, %p308
    %p310 = scmp.ne.s32.totalorder %s298, %s299
    %p311 = scmp.eq.s32.totalorder %s32, 1
    %p312 = por %p310, %p311
    %p314 = scmp.ne.s32.totalorder %s299, %s313
    %p315 = scmp.eq.s32.totalorder %s32, 0
    %p316 = por %p314, %p315
    %s318 = sadd.s32 %s317, 1
    %p321 = scmp.eq.s32.totalorder %s26, 1
    %p322 = scmp.ne.s32.totalorder %s317, %s319
    %p323 = scmp.eq.s32.totalorder %s26, 0
    %p324 = por %p322, %p323
    %p325 = scmp.ne.s32.totalorder %s317, %s319
    %p326 = scmp.eq.s32.totalorder %s31, 1
    %p327 = por %p325, %p326
    %p328 = scmp.ne.s32.totalorder %s319, %s320
    %p329 = scmp.eq.s32.totalorder %s31, 0
    %p330 = por %p328, %p329
    %p331 = scmp.ne.s32.totalorder %s319, %s320
    %p332 = scmp.eq.s32.totalorder %s32, 1
    %p333 = por %p331, %p332
    %p335 = scmp.ne.s32.totalorder %s320, %s334
    %p336 = scmp.eq.s32.totalorder %s32, 0
    %p337 = por %p335, %p336
    %s339 = sadd.s32 %s338, 1
    %p342 = scmp.eq.s32.totalorder %s26, 1
    %p343 = scmp.ne.s32.totalorder %s338, %s340
    %p344 = scmp.eq.s32.totalorder %s26, 0
    %p345 = por %p343, %p344
    %p346 = scmp.ne.s32.totalorder %s338, %s340
    %p347 = scmp.eq.s32.totalorder %s31, 1
    %p348 = por %p346, %p347
    %p349 = scmp.ne.s32.totalorder %s340, %s341
    %p350 = scmp.eq.s32.totalorder %s31, 0
    %p351 = por %p349, %p350
    %p352 = scmp.ne.s32.totalorder %s340, %s341
    %p353 = scmp.eq.s32.totalorder %s32, 1
    %p354 = por %p352, %p353
    %p356 = scmp.ne.s32.totalorder %s341, %s355
    %p357 = scmp.eq.s32.totalorder %s32, 0
    %p358 = por %p356, %p357
    %s360 = sadd.s32 %s359, 1
    %p363 = scmp.eq.s32.totalorder %s26, 1
    %p364 = scmp.ne.s32.totalorder %s359, %s361
    %p365 = scmp.eq.s32.totalorder %s26, 0
    %p366 = por %p364, %p365
    %p367 = scmp.ne.s32.totalorder %s359, %s361
    %p368 = scmp.eq.s32.totalorder %s31, 1
    %p369 = por %p367, %p368
    %p370 = scmp.ne.s32.totalorder %s361, %s362
    %p371 = scmp.eq.s32.totalorder %s31, 0
    %p372 = por %p370, %p371
    %p373 = scmp.ne.s32.totalorder %s361, %s362
    %p374 = scmp.eq.s32.totalorder %s32, 1
    %p375 = por %p373, %p374
    %p377 = scmp.ne.s32.totalorder %s362, %s376
    %p378 = scmp.eq.s32.totalorder %s32, 0
    %p379 = por %p377, %p378
    %s381 = sadd.s32 %s380, 1
    %p384 = scmp.eq.s32.totalorder %s26, 1
    %p385 = scmp.ne.s32.totalorder %s380, %s382
    %p386 = scmp.eq.s32.totalorder %s26, 0
    %p387 = por %p385, %p386
    %p388 = scmp.ne.s32.totalorder %s380, %s382
    %p389 = scmp.eq.s32.totalorder %s31, 1
    %p390 = por %p388, %p389
    %p391 = scmp.ne.s32.totalorder %s382, %s383
    %p392 = scmp.eq.s32.totalorder %s31, 0
    %p393 = por %p391, %p392
    %p394 = scmp.ne.s32.totalorder %s382, %s383
    %p395 = scmp.eq.s32.totalorder %s32, 1
    %p396 = por %p394, %p395
    %p398 = scmp.ne.s32.totalorder %s383, %s397
    %p399 = scmp.eq.s32.totalorder %s32, 0
    %p400 = por %p398, %p399
    %s402 = sadd.s32 %s401, 1
    %p405 = scmp.eq.s32.totalorder %s26, 1
    %p406 = scmp.ne.s32.totalorder %s401, %s403
    %p407 = scmp.eq.s32.totalorder %s26, 0
    %p408 = por %p406, %p407
    %p409 = scmp.ne.s32.totalorder %s401, %s403
    %p410 = scmp.eq.s32.totalorder %s31, 1
    %p411 = por %p409, %p410
    %p412 = scmp.ne.s32.totalorder %s403, %s404
    %p413 = scmp.eq.s32.totalorder %s31, 0
    %p414 = por %p412, %p413
    %p415 = scmp.ne.s32.totalorder %s403, %s404
    %p416 = scmp.eq.s32.totalorder %s32, 1
    %p417 = por %p415, %p416
    %p419 = scmp.ne.s32.totalorder %s404, %s418
    %p420 = scmp.eq.s32.totalorder %s32, 0
    %p421 = por %p419, %p420
    %s423 = sadd.s32 %s422, 1
    %p426 = scmp.eq.s32.totalorder %s26, 1
    %p427 = scmp.ne.s32.totalorder %s422, %s424
    %p428 = scmp.eq.s32.totalorder %s26, 0
    %p429 = por %p427, %p428
    %p430 = scmp.ne.s32.totalorder %s422, %s424
    %p431 = scmp.eq.s32.totalorder %s31, 1
    %p432 = por %p430, %p431
    %p433 = scmp.ne.s32.totalorder %s424, %s425
    %p434 = scmp.eq.s32.totalorder %s31, 0
    %p435 = por %p433, %p434
    %p436 = scmp.ne.s32.totalorder %s424, %s425
    %p437 = scmp.eq.s32.totalorder %s32, 1
    %p438 = por %p436, %p437
    %p440 = scmp.ne.s32.totalorder %s425, %s439
    %p441 = scmp.eq.s32.totalorder %s32, 0
    %p442 = por %p440, %p441
    %s444 = sadd.s32 %s443, 1
    %p447 = scmp.eq.s32.totalorder %s26, 1
    %p448 = scmp.ne.s32.totalorder %s443, %s445
    %p449 = scmp.eq.s32.totalorder %s26, 0
    %p450 = por %p448, %p449
    %p451 = scmp.ne.s32.totalorder %s443, %s445
    %p452 = scmp.eq.s32.totalorder %s31, 1
    %p453 = por %p451, %p452
    %p454 = scmp.ne.s32.totalorder %s445, %s446
    %p455 = scmp.eq.s32.totalorder %s31, 0
    %p456 = por %p454, %p455
    %p457 = scmp.ne.s32.totalorder %s445, %s446
    %p458 = scmp.eq.s32.totalorder %s32, 1
    %p459 = por %p457, %p458
    %p461 = scmp.ne.s32.totalorder %s446, %s460
    %p462 = scmp.eq.s32.totalorder %s32, 0
    %p463 = por %p461, %p462
    %s464 = ssub.s32 %s26, %s33
    %p465 = scmp.eq.s32.totalorder %s464, 0
    %s467 = sadd.s32 %s466, 1
    %s468 = scalar_select %p465, %s466, %s467
    %p471 = pneg %p465
    %p472 = scmp.eq.s32.totalorder %s26, 1
    %p473 = por %p471, %p472
    %p474 = scmp.ne.s32.totalorder %s466, %s469
    %p475 = scmp.eq.s32.totalorder %s26, 0
    %p476 = por %p474, %p475
    %p477 = scmp.ne.s32.totalorder %s466, %s469
    %p478 = scmp.eq.s32.totalorder %s31, 1
    %p479 = por %p477, %p478
    %p480 = scmp.ne.s32.totalorder %s469, %s470
    %p481 = scmp.eq.s32.totalorder %s31, 0
    %p482 = por %p480, %p481
    %p483 = scmp.ne.s32.totalorder %s469, %s470
    %p484 = scmp.eq.s32.totalorder %s32, 1
    %p485 = por %p483, %p484
    %p487 = scmp.ne.s32.totalorder %s470, %s486
    %p488 = scmp.eq.s32.totalorder %s32, 0
    %p489 = por %p487, %p488
    %p490 = scmp.le.s32.totalorder 1, %s26
    %p491 = scmp.lt.s32.totalorder %s26, 3
    %p492 = pnand %p490, %p491
    %p493 = pneg %p492
    // Predicated region
    $region9: #{model_forward.1} parent=5 // pred_check
      _
    $region10: #{model_forward.1} parent=5 // pred_check_branch
      %495 = sbr.rel (%p492) target = $region12
    $region11: #{model_forward.1} parent=5 // pred_region
      %s496 = ssub.s32 %s26, 1
      // Predicated region
      $region13: #{model_forward.1} parent=11 // pred_check
        %p497 = pneg %p99
      $region14: #{model_forward.1} parent=11 // pred_check_branch
        %499 = sbr.rel (%p497) target = $region16
      $region15: #{model_forward.1} parent=11 // pred_region
        _
      $region16: #{model_forward.1} parent=11 // pred_fallthru
        _
      // Predicated region
      $region17: #{model_forward.1} parent=11 // pred_check
        %p500 = pneg %p120
      $region18: #{model_forward.1} parent=11 // pred_check_branch
        %502 = sbr.rel (%p500) target = $region20
      $region19: #{model_forward.1} parent=11 // pred_region
        _
      $region20: #{model_forward.1} parent=11 // pred_fallthru
        _
      // Predicated region
      $region21: #{model_forward.1} parent=11 // pred_check
        %p503 = pneg %p141
      $region22: #{model_forward.1} parent=11 // pred_check_branch
        %505 = sbr.rel (%p503) target = $region24
      $region23: #{model_forward.1} parent=11 // pred_region
        _
      $region24: #{model_forward.1} parent=11 // pred_fallthru
        _
      // Predicated region
      $region25: #{model_forward.1} parent=11 // pred_check
        %p506 = pneg %p162
      $region26: #{model_forward.1} parent=11 // pred_check_branch
        %508 = sbr.rel (%p506) target = $region28
      $region27: #{model_forward.1} parent=11 // pred_region
        _
      $region28: #{model_forward.1} parent=11 // pred_fallthru
        _
      // Predicated region
      $region29: #{model_forward.1} parent=11 // pred_check
        %p509 = pneg %p183
      $region30: #{model_forward.1} parent=11 // pred_check_branch
        %511 = sbr.rel (%p509) target = $region32
      $region31: #{model_forward.1} parent=11 // pred_region
        _
      $region32: #{model_forward.1} parent=11 // pred_fallthru
        _
      // Predicated region
      $region33: #{model_forward.1} parent=11 // pred_check
        %p512 = pneg %p204
      $region34: #{model_forward.1} parent=11 // pred_check_branch
        %514 = sbr.rel (%p512) target = $region36
      $region35: #{model_forward.1} parent=11 // pred_region
        _
      $region36: #{model_forward.1} parent=11 // pred_fallthru
        _
      // Predicated region
      $region37: #{model_forward.1} parent=11 // pred_check
        %p515 = pneg %p225
      $region38: #{model_forward.1} parent=11 // pred_check_branch
        %517 = sbr.rel (%p515) target = $region40
      $region39: #{model_forward.1} parent=11 // pred_region
        _
      $region40: #{model_forward.1} parent=11 // pred_fallthru
        _
      // Predicated region
      $region41: #{model_forward.1} parent=11 // pred_check
        %p518 = pneg %p246
      $region42: #{model_forward.1} parent=11 // pred_check_branch
        %520 = sbr.rel (%p518) target = $region44
      $region43: #{model_forward.1} parent=11 // pred_region
        _
      $region44: #{model_forward.1} parent=11 // pred_fallthru
        _
      // Predicated region
      $region45: #{model_forward.1} parent=11 // pred_check
        %p521 = pneg %p267
      $region46: #{model_forward.1} parent=11 // pred_check_branch
        %523 = sbr.rel (%p521) target = $region48
      $region47: #{model_forward.1} parent=11 // pred_region
        _
      $region48: #{model_forward.1} parent=11 // pred_fallthru
        _
      // Predicated region
      $region49: #{model_forward.1} parent=11 // pred_check
        %p524 = pneg %p288
      $region50: #{model_forward.1} parent=11 // pred_check_branch
        %526 = sbr.rel (%p524) target = $region52
      $region51: #{model_forward.1} parent=11 // pred_region
        _
      $region52: #{model_forward.1} parent=11 // pred_fallthru
        _
      // Predicated region
      $region53: #{model_forward.1} parent=11 // pred_check
        %p527 = pneg %p309
      $region54: #{model_forward.1} parent=11 // pred_check_branch
        %529 = sbr.rel (%p527) target = $region56
      $region55: #{model_forward.1} parent=11 // pred_region
        _
      $region56: #{model_forward.1} parent=11 // pred_fallthru
        _
      // Predicated region
      $region57: #{model_forward.1} parent=11 // pred_check
        %p530 = pneg %p330
      $region58: #{model_forward.1} parent=11 // pred_check_branch
        %532 = sbr.rel (%p530) target = $region60
      $region59: #{model_forward.1} parent=11 // pred_region
        _
      $region60: #{model_forward.1} parent=11 // pred_fallthru
        _
      // Predicated region
      $region61: #{model_forward.1} parent=11 // pred_check
        %p533 = pneg %p351
      $region62: #{model_forward.1} parent=11 // pred_check_branch
        %535 = sbr.rel (%p533) target = $region64
      $region63: #{model_forward.1} parent=11 // pred_region
        _
      $region64: #{model_forward.1} parent=11 // pred_fallthru
        _
      // Predicated region
      $region65: #{model_forward.1} parent=11 // pred_check
        %p536 = pneg %p372
      $region66: #{model_forward.1} parent=11 // pred_check_branch
        %538 = sbr.rel (%p536) target = $region68
      $region67: #{model_forward.1} parent=11 // pred_region
        _
      $region68: #{model_forward.1} parent=11 // pred_fallthru
        _
      // Predicated region
      $region69: #{model_forward.1} parent=11 // pred_check
        %p539 = pneg %p393
      $region70: #{model_forward.1} parent=11 // pred_check_branch
        %541 = sbr.rel (%p539) target = $region72
      $region71: #{model_forward.1} parent=11 // pred_region
        _
      $region72: #{model_forward.1} parent=11 // pred_fallthru
        _
      // Predicated region
      $region73: #{model_forward.1} parent=11 // pred_check
        %p542 = pneg %p414
      $region74: #{model_forward.1} parent=11 // pred_check_branch
        %544 = sbr.rel (%p542) target = $region76
      $region75: #{model_forward.1} parent=11 // pred_region
        _
      $region76: #{model_forward.1} parent=11 // pred_fallthru
        _
      // Predicated region
      $region77: #{model_forward.1} parent=11 // pred_check
        %p545 = pneg %p435
      $region78: #{model_forward.1} parent=11 // pred_check_branch
        %547 = sbr.rel (%p545) target = $region80
      $region79: #{model_forward.1} parent=11 // pred_region
        _
      $region80: #{model_forward.1} parent=11 // pred_fallthru
        _
      // Predicated region
      $region81: #{model_forward.1} parent=11 // pred_check
        %p548 = pneg %p456
      $region82: #{model_forward.1} parent=11 // pred_check_branch
        %550 = sbr.rel (%p548) target = $region84
      $region83: #{model_forward.1} parent=11 // pred_region
        _
      $region84: #{model_forward.1} parent=11 // pred_fallthru
        _
    $region12: #{model_forward.1} parent=5 // pred_fallthru
      _
    %p551 = scmp.lt.s32.totalorder %s26, 2
    // Predicated region
    $region85: #{model_forward.1} parent=5 // pred_check
      %p552 = pneg %p551
    $region86: #{model_forward.1} parent=5 // pred_check_branch
      %554 = sbr.rel (%p552) target = $region88
    $region87: #{model_forward.1} parent=5 // pred_region
      // Predicated region
      $region89: #{model_forward.1} parent=87 // pred_check
        %p555 = pneg %p46
      $region90: #{model_forward.1} parent=87 // pred_check_branch
        %557 = sbr.rel (%p555) target = $region92
      $region91: #{model_forward.1} parent=87 // pred_region
        %p558 = scmp.lt.s32.totalorder %s26, 1
        %s559 = scalar_select %p558, %s26, 1
        %s560 = smul.addr %s559, 8
        %s561 = scalar_lea.vmem %s0, %s560
      $region92: #{model_forward.1} parent=87 // pred_fallthru
        _
      // Predicated region
      $region93: #{model_forward.1} parent=87 // pred_check
        %p562 = pneg %p72
      $region94: #{model_forward.1} parent=87 // pred_check_branch
        %564 = sbr.rel (%p562) target = $region96
      $region95: #{model_forward.1} parent=87 // pred_region
        %p565 = scmp.lt.s32.totalorder %s26, 1
        %s566 = scalar_select %p565, %s26, 1
        %s567 = smul.addr %s566, 8
        %s568 = scalar_lea.vmem %s1, %s567
      $region96: #{model_forward.1} parent=87 // pred_fallthru
        _
    $region88: #{model_forward.1} parent=5 // pred_fallthru
      _
    %p569 = scmp.le.s32.totalorder 1, %s26
    %p570 = scmp.lt.s32.totalorder %s26, 3
    %p571 = pnand %p569, %p570
    %p572 = pneg %p571
    // Predicated region
    $region97: #{model_forward.1} parent=5 // pred_check
      _
    $region98: #{model_forward.1} parent=5 // pred_check_branch
      %574 = sbr.rel (%p571) target = $region100
    $region99: #{model_forward.1} parent=5 // pred_region
      %s575 = ssub.s32 %s26, 1
      %p576 = scmp.lt.s32.totalorder %s31, 1
      %s577 = scalar_select %p576, %s31, 1
      %s578 = smul.addr %s577, 8
      %s579 = scalar_lea.vmem %s0, %s578
      %p580 = pneg %p52
      %p581 = pneg %p49
      %p582 = scmp.lt.s32.totalorder %s31, 1
      %s583 = scalar_select %p582, %s31, 1
      %s584 = smul.addr %s583, 8
      %s585 = scalar_lea.vmem %s1, %s584
      %p586 = pneg %p78
      %p587 = pneg %p75
      %p588 = pneg %p99
      %p589 = pneg %p96
      %p590 = pneg %p120
      %p591 = pneg %p117
      %p592 = pneg %p141
      %p593 = pneg %p138
      %p594 = pneg %p162
      %p595 = pneg %p159
      %p596 = pneg %p183
      %p597 = pneg %p180
      %p598 = pneg %p204
      %p599 = pneg %p201
      %p600 = pneg %p225
      %p601 = pneg %p222
      %p602 = pneg %p246
      %p603 = pneg %p243
      %p604 = pneg %p267
      %p605 = pneg %p264
      %p606 = pneg %p288
      %p607 = pneg %p285
      %p608 = pneg %p309
      %p609 = pneg %p306
      %p610 = pneg %p330
      %p611 = pneg %p327
      %p612 = pneg %p351
      %p613 = pneg %p348
      %p614 = pneg %p372
      %p615 = pneg %p369
      %p616 = pneg %p393
      %p617 = pneg %p390
      %p618 = pneg %p414
      %p619 = pneg %p411
      %p620 = pneg %p435
      %p621 = pneg %p432
      %p622 = pneg %p456
      %p623 = pneg %p453
      %p624 = pneg %p482
      %p625 = pneg %p479
      %p626 = scmp.lt.s32.totalorder %s31, 1
      %s627 = scalar_select %p626, %s31, 1
      %s628 = smul.addr %s627, 8
      %s629 = scalar_lea.vmem %s20, %s628
      %p630 = scmp.lt.s32.totalorder %s31, 1
      %s631 = scalar_select %p630, %s31, 1
      %s632 = smul.addr %s631, 8
      %s633 = scalar_lea.vmem %s0, %s632
      %p634 = scmp.lt.s32.totalorder %s31, 1
      %s635 = scalar_select %p634, %s31, 1
      %s636 = smul.addr %s635, 8
      %s637 = scalar_lea.vmem %s1, %s636
      %p638 = scmp.lt.s32.totalorder %s31, 1
      %s639 = scalar_select %p638, %s31, 1
      %s640 = smul.addr %s639, 8
      %s641 = scalar_lea.vmem %s20, %s640
      %v642 = vld [vmem:[%s633] sm:$0xff]
      %v643 = vld [vmem:[%s637] sm:$0xff]
      %v644 = vld [vmem:[%s2] sm:$0xff]
      %v645 = vld [vmem:[%s2 + $0x8] sm:$0xff]
      %v646 = vld [vmem:[%s2 + $0x10] sm:$0xff]
      %v647 = vld [vmem:[%s2 + $0x18] sm:$0xff]
      %v648 = vld [vmem:[%s4] sm:$0xff]
      %v649 = vld [vmem:[%s4 + $0x8] sm:$0xff]
      %v650 = vld [vmem:[%s4 + $0x10] sm:$0xff]
      %v651 = vld [vmem:[%s4 + $0x18] sm:$0xff]
      %v652 = vld [vmem:[%s6] sm:$0xff]
      %v653 = vld [vmem:[%s6 + $0x8] sm:$0xff]
      %v654 = vld [vmem:[%s6 + $0x10] sm:$0xff]
      %v655 = vld [vmem:[%s6 + $0x18] sm:$0xff]
      %v656 = vld [vmem:[%s8] sm:$0xff]
      %v657 = vld [vmem:[%s8 + $0x8] sm:$0xff]
      %v658 = vld [vmem:[%s8 + $0x10] sm:$0xff]
      %v659 = vld [vmem:[%s8 + $0x18] sm:$0xff]
      %v660 = vld [vmem:[%s3] sm:$0x1]
      %v661 = vld [vmem:[%s5] sm:$0x1]
      %v662 = vld [vmem:[%s7] sm:$0x1]
      %v663 = vld [vmem:[%s9] sm:$0x1]
      %v665 = vlaneseq
      %v666 = vshrl.u32 %v665, 7
      %v667 = vsub.s32 0, %v666
      %v668 = vrot.slane %v660, %v667
      %vm670 = vcmask 261120
      %v672 = vsel %vm670, %v642, 0
      %674 = vmatprep.subr.mxu0 0.0
      %675 = vmatpush1.msra.mxu0 %v644
      %676 = vmatprep.subr.mxu0 0.0
      %677 = vmatpush1.msra.mxu0 %v645
      %678 = vmatprep.subr.mxu0 0.0
      %679 = vmatpush1.msra.mxu0 %v646
      %680 = vmatprep.subr.mxu0 0.0
      %681 = vmatpush1.msra.mxu0 %v647
      %682 = vmatprep.subr.mxu0 0.0
      %683 = vmatpush1.msra.mxu0 0.0
      %684 = vmatprep.subr.mxu0 0.0
      %685 = vmatpush1.msra.mxu0 0.0
      %686 = vmatprep.subr.mxu0 0.0
      %687 = vmatpush1.msra.mxu0 0.0
      %688 = vmatprep.subr.mxu0 0.0
      %689 = vmatpush1.msra.mxu0 0.0
      %690 = vmatprep.subr.mxu0 0.0
      %691 = vmatpush1.msra.mxu0 0.0
      %692 = vmatprep.subr.mxu0 0.0
      %693 = vmatpush1.msra.mxu0 0.0
      %694 = vmatprep.subr.mxu0 0.0
      %695 = vmatpush1.msra.mxu0 0.0
      %696 = vmatprep.subr.mxu0 0.0
      %697 = vmatpush1.msra.mxu0 0.0
      %698 = vmatprep.subr.mxu0 0.0
      %699 = vmatpush1.msra.mxu0 0.0
      %700 = vmatprep.subr.mxu0 0.0
      %701 = vmatpush1.msra.mxu0 0.0
      %702 = vmatprep.subr.mxu0 0.0
      %703 = vmatpush1.msra.mxu0 0.0
      %704 = vmatprep.subr.mxu0 0.0
      %705 = vmatpush1.msra.mxu0 0.0
      %706 = vmatprep.subr.mxu0 0.0
      %707 = vmatpush1.msra.mxu0 0.0
      %708 = vmatprep.subr.mxu0 0.0
      %709 = vmatpush1.msra.mxu0 0.0
      %710 = vmatprep.subr.mxu0 0.0
      %711 = vmatpush1.msra.mxu0 0.0
      %712 = vmatprep.subr.mxu0 0.0
      %713 = vmatpush1.msra.mxu0 0.0
      %714 = vmatprep.subr.mxu0 0.0
      %715 = vmatpush1.msra.mxu0 0.0
      %716 = vmatprep.subr.mxu0 0.0
      %717 = vmatpush1.msra.mxu0 0.0
      %718 = vmatprep.subr.mxu0 0.0
      %719 = vmatpush1.msra.mxu0 0.0
      %720 = vmatprep.subr.mxu0 0.0
      %721 = vmatpush1.msra.mxu0 0.0
      %722 = vmatprep.subr.mxu0 0.0
      %723 = vmatpush1.msra.mxu0 0.0
      %724 = vmatprep.subr.mxu0 0.0
      %725 = vmatpush1.msra.mxu0 0.0
      %726 = vmatprep.subr.mxu0 0.0
      %727 = vmatpush1.msra.mxu0 0.0
      %728 = vmatprep.subr.mxu0 0.0
      %729 = vmatpush1.msra.mxu0 0.0
      %730 = vmatprep.subr.mxu0 0.0
      %731 = vmatpush1.msra.mxu0 0.0
      %732 = vmatprep.subr.mxu0 0.0
      %733 = vmatpush1.msra.mxu0 0.0
      %734 = vmatprep.subr.mxu0 0.0
      %735 = vmatpush1.msra.mxu0 0.0
      %736 = vmatprep.subr.mxu0 0.0
      %737 = vmatpush1.msra.mxu0 0.0
      %738 = vmatprep.mubr.f32.mxu0 0.0
      %739 = vmatmul.mubr.f32.gmra.mrb[0].mxu0 %v672
      %v740 = vpop.f32.mrb[0].mxu0
      %v741 = vadd.f32 %v668, %v740
      %v742 = vpop.f32.mrb[0].mxu0
      %743 = vdwg.mxu0
      %v745 = vlaneseq
      %v746 = vshrl.u32 %v745, 7
      %v747 = vsub.s32 0, %v746
      %v748 = vrot.slane %v661, %v747
      %750 = vmatprep.subr.mxu0 0.0
      %751 = vmatpush1.msra.mxu0 %v648
      %752 = vmatprep.subr.mxu0 0.0
      %753 = vmatpush1.msra.mxu0 %v649
      %754 = vmatprep.subr.mxu0 0.0
      %755 = vmatpush1.msra.mxu0 %v650
      %756 = vmatprep.subr.mxu0 0.0
      %757 = vmatpush1.msra.mxu0 %v651
      %758 = vmatprep.subr.mxu0 0.0
      %759 = vmatpush1.msra.mxu0 0.0
      %760 = vmatprep.subr.mxu0 0.0
      %761 = vmatpush1.msra.mxu0 0.0
      %762 = vmatprep.subr.mxu0 0.0
      %763 = vmatpush1.msra.mxu0 0.0
      %764 = vmatprep.subr.mxu0 0.0
      %765 = vmatpush1.msra.mxu0 0.0
      %766 = vmatprep.subr.mxu0 0.0
      %767 = vmatpush1.msra.mxu0 0.0
      %768 = vmatprep.subr.mxu0 0.0
      %769 = vmatpush1.msra.mxu0 0.0
      %770 = vmatprep.subr.mxu0 0.0
      %771 = vmatpush1.msra.mxu0 0.0
      %772 = vmatprep.subr.mxu0 0.0
      %773 = vmatpush1.msra.mxu0 0.0
      %774 = vmatprep.subr.mxu0 0.0
      %775 = vmatpush1.msra.mxu0 0.0
      %776 = vmatprep.subr.mxu0 0.0
      %777 = vmatpush1.msra.mxu0 0.0
      %778 = vmatprep.subr.mxu0 0.0
      %779 = vmatpush1.msra.mxu0 0.0
      %780 = vmatprep.subr.mxu0 0.0
      %781 = vmatpush1.msra.mxu0 0.0
      %782 = vmatprep.subr.mxu0 0.0
      %783 = vmatpush1.msra.mxu0 0.0
      %784 = vmatprep.subr.mxu0 0.0
      %785 = vmatpush1.msra.mxu0 0.0
      %786 = vmatprep.subr.mxu0 0.0
      %787 = vmatpush1.msra.mxu0 0.0
      %788 = vmatprep.subr.mxu0 0.0
      %789 = vmatpush1.msra.mxu0 0.0
      %790 = vmatprep.subr.mxu0 0.0
      %791 = vmatpush1.msra.mxu0 0.0
      %792 = vmatprep.subr.mxu0 0.0
      %793 = vmatpush1.msra.mxu0 0.0
      %794 = vmatprep.subr.mxu0 0.0
      %795 = vmatpush1.msra.mxu0 0.0
      %796 = vmatprep.subr.mxu0 0.0
      %797 = vmatpush1.msra.mxu0 0.0
      %798 = vmatprep.subr.mxu0 0.0
      %799 = vmatpush1.msra.mxu0 0.0
      %800 = vmatprep.subr.mxu0 0.0
      %801 = vmatpush1.msra.mxu0 0.0
      %802 = vmatprep.subr.mxu0 0.0
      %803 = vmatpush1.msra.mxu0 0.0
      %804 = vmatprep.subr.mxu0 0.0
      %805 = vmatpush1.msra.mxu0 0.0
      %806 = vmatprep.subr.mxu0 0.0
      %807 = vmatpush1.msra.mxu0 0.0
      %808 = vmatprep.subr.mxu0 0.0
      %809 = vmatpush1.msra.mxu0 0.0
      %810 = vmatprep.subr.mxu0 0.0
      %811 = vmatpush1.msra.mxu0 0.0
      %812 = vmatprep.subr.mxu0 0.0
      %813 = vmatpush1.msra.mxu0 0.0
      %814 = vmatprep.mubr.f32.mxu0 0.0
      %815 = vmatmul.mubr.f32.gmra.mrb[0].mxu0 %v672
      %v816 = vpop.f32.mrb[0].mxu0
      %v817 = vadd.f32 %v748, %v816
      %v818 = vpop.f32.mrb[0].mxu0
      %819 = vdwg.mxu0
      %v821 = vlaneseq
      %v822 = vshrl.u32 %v821, 7
      %v823 = vsub.s32 0, %v822
      %v824 = vrot.slane %v662, %v823
      %826 = vmatprep.subr.mxu0 0.0
      %827 = vmatpush1.msra.mxu0 %v652
      %828 = vmatprep.subr.mxu0 0.0
      %829 = vmatpush1.msra.mxu0 %v653
      %830 = vmatprep.subr.mxu0 0.0
      %831 = vmatpush1.msra.mxu0 %v654
      %832 = vmatprep.subr.mxu0 0.0
      %833 = vmatpush1.msra.mxu0 %v655
      %834 = vmatprep.subr.mxu0 0.0
      %835 = vmatpush1.msra.mxu0 0.0
      %836 = vmatprep.subr.mxu0 0.0
      %837 = vmatpush1.msra.mxu0 0.0
      %838 = vmatprep.subr.mxu0 0.0
      %839 = vmatpush1.msra.mxu0 0.0
      %840 = vmatprep.subr.mxu0 0.0
      %841 = vmatpush1.msra.mxu0 0.0
      %842 = vmatprep.subr.mxu0 0.0
      %843 = vmatpush1.msra.mxu0 0.0
      %844 = vmatprep.subr.mxu0 0.0
      %845 = vmatpush1.msra.mxu0 0.0
      %846 = vmatprep.subr.mxu0 0.0
      %847 = vmatpush1.msra.mxu0 0.0
      %848 = vmatprep.subr.mxu0 0.0
      %849 = vmatpush1.msra.mxu0 0.0
      %850 = vmatprep.subr.mxu0 0.0
      %851 = vmatpush1.msra.mxu0 0.0
      %852 = vmatprep.subr.mxu0 0.0
      %853 = vmatpush1.msra.mxu0 0.0
      %854 = vmatprep.subr.mxu0 0.0
      %855 = vmatpush1.msra.mxu0 0.0
      %856 = vmatprep.subr.mxu0 0.0
      %857 = vmatpush1.msra.mxu0 0.0
      %858 = vmatprep.subr.mxu0 0.0
      %859 = vmatpush1.msra.mxu0 0.0
      %860 = vmatprep.subr.mxu0 0.0
      %861 = vmatpush1.msra.mxu0 0.0
      %862 = vmatprep.subr.mxu0 0.0
      %863 = vmatpush1.msra.mxu0 0.0
      %864 = vmatprep.subr.mxu0 0.0
      %865 = vmatpush1.msra.mxu0 0.0
      %866 = vmatprep.subr.mxu0 0.0
      %867 = vmatpush1.msra.mxu0 0.0
      %868 = vmatprep.subr.mxu0 0.0
      %869 = vmatpush1.msra.mxu0 0.0
      %870 = vmatprep.subr.mxu0 0.0
      %871 = vmatpush1.msra.mxu0 0.0
      %872 = vmatprep.subr.mxu0 0.0
      %873 = vmatpush1.msra.mxu0 0.0
      %874 = vmatprep.subr.mxu0 0.0
      %875 = vmatpush1.msra.mxu0 0.0
      %876 = vmatprep.subr.mxu0 0.0
      %877 = vmatpush1.msra.mxu0 0.0
      %878 = vmatprep.subr.mxu0 0.0
      %879 = vmatpush1.msra.mxu0 0.0
      %880 = vmatprep.subr.mxu0 0.0
      %881 = vmatpush1.msra.mxu0 0.0
      %882 = vmatprep.subr.mxu0 0.0
      %883 = vmatpush1.msra.mxu0 0.0
      %884 = vmatprep.subr.mxu0 0.0
      %885 = vmatpush1.msra.mxu0 0.0
      %886 = vmatprep.subr.mxu0 0.0
      %887 = vmatpush1.msra.mxu0 0.0
      %888 = vmatprep.subr.mxu0 0.0
      %889 = vmatpush1.msra.mxu0 0.0
      %890 = vmatprep.mubr.f32.mxu0 0.0
      %891 = vmatmul.mubr.f32.gmra.mrb[0].mxu0 %v672
      %v892 = vpop.f32.mrb[0].mxu0
      %v893 = vadd.f32 %v824, %v892
      %v894 = vpop.f32.mrb[0].mxu0
      %895 = vdwg.mxu0
      %vm896 = vcmask 64512
      %v898 = vsel %vm896, %v741, 0
      %v901 = vsel %vm896, %v817, 0
      %903 = vmatprep.subr.mxu0 0.0
      %904 = vmatpush1.xpose.msra.mxu0 %v901
      %905 = vmatprep.subr.mxu0 0.0
      %906 = vmatpush1.xpose.msra.mxu0 0.0
      %907 = vmatprep.subr.mxu0 0.0
      %908 = vmatpush1.xpose.msra.mxu0 0.0
      %909 = vmatprep.subr.mxu0 0.0
      %910 = vmatpush1.xpose.msra.mxu0 0.0
      %911 = vmatprep.subr.mxu0 0.0
      %912 = vmatpush1.xpose.msra.mxu0 0.0
      %913 = vmatprep.subr.mxu0 0.0
      %914 = vmatpush1.xpose.msra.mxu0 0.0
      %915 = vmatprep.subr.mxu0 0.0
      %916 = vmatpush1.xpose.msra.mxu0 0.0
      %917 = vmatprep.subr.mxu0 0.0
      %918 = vmatpush1.xpose.msra.mxu0 0.0
      %919 = vmatprep.subr.mxu0 0.0
      %920 = vmatpush1.xpose.msra.mxu0 0.0
      %921 = vmatprep.subr.mxu0 0.0
      %922 = vmatpush1.xpose.msra.mxu0 0.0
      %923 = vmatprep.subr.mxu0 0.0
      %924 = vmatpush1.xpose.msra.mxu0 0.0
      %925 = vmatprep.subr.mxu0 0.0
      %926 = vmatpush1.xpose.msra.mxu0 0.0
      %927 = vmatprep.subr.mxu0 0.0
      %928 = vmatpush1.xpose.msra.mxu0 0.0
      %929 = vmatprep.subr.mxu0 0.0
      %930 = vmatpush1.xpose.msra.mxu0 0.0
      %931 = vmatprep.subr.mxu0 0.0
      %932 = vmatpush1.xpose.msra.mxu0 0.0
      %933 = vmatprep.subr.mxu0 0.0
      %934 = vmatpush1.xpose.msra.mxu0 0.0
      %935 = vmatprep.subr.mxu0 0.0
      %936 = vmatpush1.xpose.msra.mxu0 0.0
      %937 = vmatprep.subr.mxu0 0.0
      %938 = vmatpush1.xpose.msra.mxu0 0.0
      %939 = vmatprep.subr.mxu0 0.0
      %940 = vmatpush1.xpose.msra.mxu0 0.0
      %941 = vmatprep.subr.mxu0 0.0
      %942 = vmatpush1.xpose.msra.mxu0 0.0
      %943 = vmatprep.subr.mxu0 0.0
      %944 = vmatpush1.xpose.msra.mxu0 0.0
      %945 = vmatprep.subr.mxu0 0.0
      %946 = vmatpush1.xpose.msra.mxu0 0.0
      %947 = vmatprep.subr.mxu0 0.0
      %948 = vmatpush1.xpose.msra.mxu0 0.0
      %949 = vmatprep.subr.mxu0 0.0
      %950 = vmatpush1.xpose.msra.mxu0 0.0
      %951 = vmatprep.subr.mxu0 0.0
      %952 = vmatpush1.xpose.msra.mxu0 0.0
      %953 = vmatprep.subr.mxu0 0.0
      %954 = vmatpush1.xpose.msra.mxu0 0.0
      %955 = vmatprep.subr.mxu0 0.0
      %956 = vmatpush1.xpose.msra.mxu0 0.0
      %957 = vmatprep.subr.mxu0 0.0
      %958 = vmatpush1.xpose.msra.mxu0 0.0
      %959 = vmatprep.subr.mxu0 0.0
      %960 = vmatpush1.xpose.msra.mxu0 0.0
      %961 = vmatprep.subr.mxu0 0.0
      %962 = vmatpush1.xpose.msra.mxu0 0.0
      %963 = vmatprep.subr.mxu0 0.0
      %964 = vmatpush1.xpose.msra.mxu0 0.0
      %965 = vmatprep.subr.mxu0 0.0
      %966 = vmatpush1.xpose.msra.mxu0 0.0
      %967 = vmatprep.mubr.f32.mxu0 0.0
      %968 = vmatmul.mubr.f32.gmra.mrb[0].mxu0 %v898
      %v969 = vpop.f32.mrb[0].mxu0
      %v970 = vadd.f32 0.0, %v969
      %v971 = vpop.f32.mrb[0].mxu0
      %972 = vdwg.mxu0
      %v973 = vmul.f32 %v970, 0.35355338
      %975 = vset.pattern.permute.xlu0 0
      %976 = vperm.xlu0 %975, %v643
      %v977 = vpop.permute.xlu0 %976
      %v979 = vadd.f32 %v973, %v977
      %v980 = vsel %vm896, %v979, -inf
      %981 = vmax.xlane.f32.xlu0 %v980
      %v982 = vpop.xlane.xlu0 %981
      %v983 = vsub.f32 %v979, %v982
      %v984 = vmul.f32 %v983, 1.442695
      %v985 = vpow.pop %v984
      %v986 = vsel %vm896, %v985, 0.0
      %987 = vadd.xlane.f32.xlu0 %v986
      %v988 = vpop.xlane.xlu0 %987
      %v989 = vrcp.pop %v988
      %v990 = vmul.f32 %v985, %v989
      %v992 = vsel %vm896, %v990, 0
      %994 = vmatprep.subr.mxu0 0.0
      %995 = vmatpush1.msra.mxu0 %v893
      %996 = vmatprep.subr.mxu0 0.0
      %997 = vmatpush1.msra.mxu0 0.0
      %998 = vmatprep.subr.mxu0 0.0
      %999 = vmatpush1.msra.mxu0 0.0
      %1000 = vmatprep.subr.mxu0 0.0
      %1001 = vmatpush1.msra.mxu0 0.0
      %1002 = vmatprep.subr.mxu0 0.0
      %1003 = vmatpush1.msra.mxu0 0.0
      %1004 = vmatprep.subr.mxu0 0.0
      %1005 = vmatpush1.msra.mxu0 0.0
      %1006 = vmatprep.subr.mxu0 0.0
      %1007 = vmatpush1.msra.mxu0 0.0
      %1008 = vmatprep.subr.mxu0 0.0
      %1009 = vmatpush1.msra.mxu0 0.0
      %1010 = vmatprep.subr.mxu0 0.0
      %1011 = vmatpush1.msra.mxu0 0.0
      %1012 = vmatprep.subr.mxu0 0.0
      %1013 = vmatpush1.msra.mxu0 0.0
      %1014 = vmatprep.subr.mxu0 0.0
      %1015 = vmatpush1.msra.mxu0 0.0
      %1016 = vmatprep.subr.mxu0 0.0
      %1017 = vmatpush1.msra.mxu0 0.0
      %1018 = vmatprep.subr.mxu0 0.0
      %1019 = vmatpush1.msra.mxu0 0.0
      %1020 = vmatprep.subr.mxu0 0.0
      %1021 = vmatpush1.msra.mxu0 0.0
      %1022 = vmatprep.subr.mxu0 0.0
      %1023 = vmatpush1.msra.mxu0 0.0
      %1024 = vmatprep.subr.mxu0 0.0
      %1025 = vmatpush1.msra.mxu0 0.0
      %1026 = vmatprep.subr.mxu0 0.0
      %1027 = vmatpush1.msra.mxu0 0.0
      %1028 = vmatprep.subr.mxu0 0.0
      %1029 = vmatpush1.msra.mxu0 0.0
      %1030 = vmatprep.subr.mxu0 0.0
      %1031 = vmatpush1.msra.mxu0 0.0
      %1032 = vmatprep.subr.mxu0 0.0
      %1033 = vmatpush1.msra.mxu0 0.0
      %1034 = vmatprep.subr.mxu0 0.0
      %1035 = vmatpush1.msra.mxu0 0.0
      %1036 = vmatprep.subr.mxu0 0.0
      %1037 = vmatpush1.msra.mxu0 0.0
      %1038 = vmatprep.subr.mxu0 0.0
      %1039 = vmatpush1.msra.mxu0 0.0
      %1040 = vmatprep.subr.mxu0 0.0
      %1041 = vmatpush1.msra.mxu0 0.0
      %1042 = vmatprep.subr.mxu0 0.0
      %1043 = vmatpush1.msra.mxu0 0.0
      %1044 = vmatprep.subr.mxu0 0.0
      %1045 = vmatpush1.msra.mxu0 0.0
      %1046 = vmatprep.subr.mxu0 0.0
      %1047 = vmatpush1.msra.mxu0 0.0
      %1048 = vmatprep.subr.mxu0 0.0
      %1049 = vmatpush1.msra.mxu0 0.0
      %1050 = vmatprep.subr.mxu0 0.0
      %1051 = vmatpush1.msra.mxu0 0.0
      %1052 = vmatprep.subr.mxu0 0.0
      %1053 = vmatpush1.msra.mxu0 0.0
      %1054 = vmatprep.subr.mxu0 0.0
      %1055 = vmatpush1.msra.mxu0 0.0
      %1056 = vmatprep.subr.mxu0 0.0
      %1057 = vmatpush1.msra.mxu0 0.0
      %1058 = vmatprep.mubr.f32.mxu0 0.0
      %1059 = vmatmul.mubr.f32.gmra.mrb[0].mxu0 %v992
      %v1060 = vpop.f32.mrb[0].mxu0
      %v1061 = vadd.f32 0.0, %v1060
      %v1062 = vpop.f32.mrb[0].mxu0
      %1063 = vdwg.mxu0
      %1064 = vrot.lane.b32.xlu0 %v741, 120
      %v1065 = vpop.permute.xlu0 %1064
      %1066 = vrot.lane.b32.xlu0 %v817, 120
      %v1067 = vpop.permute.xlu0 %1066
      %v1068 = vsel %vm896, %v1065, 0
      %v1070 = vsel %vm896, %v1067, 0
      %1072 = vmatprep.subr.mxu0 0.0
      %1073 = vmatpush1.xpose.msra.mxu0 %v1070
      %1074 = vmatprep.subr.mxu0 0.0
      %1075 = vmatpush1.xpose.msra.mxu0 0.0
      %1076 = vmatprep.subr.mxu0 0.0
      %1077 = vmatpush1.xpose.msra.mxu0 0.0
      %1078 = vmatprep.subr.mxu0 0.0
      %1079 = vmatpush1.xpose.msra.mxu0 0.0
      %1080 = vmatprep.subr.mxu0 0.0
      %1081 = vmatpush1.xpose.msra.mxu0 0.0
      %1082 = vmatprep.subr.mxu0 0.0
      %1083 = vmatpush1.xpose.msra.mxu0 0.0
      %1084 = vmatprep.subr.mxu0 0.0
      %1085 = vmatpush1.xpose.msra.mxu0 0.0
      %1086 = vmatprep.subr.mxu0 0.0
      %1087 = vmatpush1.xpose.msra.mxu0 0.0
      %1088 = vmatprep.subr.mxu0 0.0
      %1089 = vmatpush1.xpose.msra.mxu0 0.0
      %1090 = vmatprep.subr.mxu0 0.0
      %1091 = vmatpush1.xpose.msra.mxu0 0.0
      %1092 = vmatprep.subr.mxu0 0.0
      %1093 = vmatpush1.xpose.msra.mxu0 0.0
      %1094 = vmatprep.subr.mxu0 0.0
      %1095 = vmatpush1.xpose.msra.mxu0 0.0
      %1096 = vmatprep.subr.mxu0 0.0
      %1097 = vmatpush1.xpose.msra.mxu0 0.0
      %1098 = vmatprep.subr.mxu0 0.0
      %1099 = vmatpush1.xpose.msra.mxu0 0.0
      %1100 = vmatprep.subr.mxu0 0.0
      %1101 = vmatpush1.xpose.msra.mxu0 0.0
      %1102 = vmatprep.subr.mxu0 0.0
      %1103 = vmatpush1.xpose.msra.mxu0 0.0
      %1104 = vmatprep.subr.mxu0 0.0
      %1105 = vmatpush1.xpose.msra.mxu0 0.0
      %1106 = vmatprep.subr.mxu0 0.0
      %1107 = vmatpush1.xpose.msra.mxu0 0.0
      %1108 = vmatprep.subr.mxu0 0.0
      %1109 = vmatpush1.xpose.msra.mxu0 0.0
      %1110 = vmatprep.subr.mxu0 0.0
      %1111 = vmatpush1.xpose.msra.mxu0 0.0
      %1112 = vmatprep.subr.mxu0 0.0
      %1113 = vmatpush1.xpose.msra.mxu0 0.0
      %1114 = vmatprep.subr.mxu0 0.0
      %1115 = vmatpush1.xpose.msra.mxu0 0.0
      %1116 = vmatprep.subr.mxu0 0.0
      %1117 = vmatpush1.xpose.msra.mxu0 0.0
      %1118 = vmatprep.subr.mxu0 0.0
      %1119 = vmatpush1.xpose.msra.mxu0 0.0
      %1120 = vmatprep.subr.mxu0 0.0
      %1121 = vmatpush1.xpose.msra.mxu0 0.0
      %1122 = vmatprep.subr.mxu0 0.0
      %1123 = vmatpush1.xpose.msra.mxu0 0.0
      %1124 = vmatprep.subr.mxu0 0.0
      %1125 = vmatpush1.xpose.msra.mxu0 0.0
      %1126 = vmatprep.subr.mxu0 0.0
      %1127 = vmatpush1.xpose.msra.mxu0 0.0
      %1128 = vmatprep.subr.mxu0 0.0
      %1129 = vmatpush1.xpose.msra.mxu0 0.0
      %1130 = vmatprep.subr.mxu0 0.0
      %1131 = vmatpush1.xpose.msra.mxu0 0.0
      %1132 = vmatprep.subr.mxu0 0.0
      %1133 = vmatpush1.xpose.msra.mxu0 0.0
      %1134 = vmatprep.subr.mxu0 0.0
      %1135 = vmatpush1.xpose.msra.mxu0 0.0
      %1136 = vmatprep.mubr.f32.mxu0 0.0
      %1137 = vmatmul.mubr.f32.gmra.mrb[0].mxu0 %v1068
      %v1138 = vpop.f32.mrb[0].mxu0
      %v1139 = vadd.f32 0.0, %v1138
      %v1140 = vpop.f32.mrb[0].mxu0
      %1141 = vdwg.mxu0
      %v1142 = vmul.f32 %v1139, 0.35355338
      %v1143 = vadd.f32 %v1142, %v977
      %v1144 = vsel %vm896, %v1143, -inf
      %1145 = vmax.xlane.f32.xlu0 %v1144
      %v1146 = vpop.xlane.xlu0 %1145
      %v1147 = vsub.f32 %v1143, %v1146
      %v1148 = vmul.f32 %v1147, 1.442695
      %v1149 = vpow.pop %v1148
      %v1150 = vsel %vm896, %v1149, 0.0
      %1151 = vadd.xlane.f32.xlu0 %v1150
      %v1152 = vpop.xlane.xlu0 %1151
      %v1153 = vrcp.pop %v1152
      %v1154 = vmul.f32 %v1149, %v1153
      %1156 = vrot.lane.b32.xlu0 %v893, 120
      %v1157 = vpop.permute.xlu0 %1156
      %v1160 = vsel %vm896, %v1154, 0
      %1162 = vmatprep.subr.mxu0 0.0
      %1163 = vmatpush1.msra.mxu0 %v1157
      %1164 = vmatprep.subr.mxu0 0.0
      %1165 = vmatpush1.msra.mxu0 0.0
      %1166 = vmatprep.subr.mxu0 0.0
      %1167 = vmatpush1.msra.mxu0 0.0
      %1168 = vmatprep.subr.mxu0 0.0
      %1169 = vmatpush1.msra.mxu0 0.0
      %1170 = vmatprep.subr.mxu0 0.0
      %1171 = vmatpush1.msra.mxu0 0.0
      %1172 = vmatprep.subr.mxu0 0.0
      %1173 = vmatpush1.msra.mxu0 0.0
      %1174 = vmatprep.subr.mxu0 0.0
      %1175 = vmatpush1.msra.mxu0 0.0
      %1176 = vmatprep.subr.mxu0 0.0
      %1177 = vmatpush1.msra.mxu0 0.0
      %1178 = vmatprep.subr.mxu0 0.0
      %1179 = vmatpush1.msra.mxu0 0.0
      %1180 = vmatprep.subr.mxu0 0.0
      %1181 = vmatpush1.msra.mxu0 0.0
      %1182 = vmatprep.subr.mxu0 0.0
      %1183 = vmatpush1.msra.mxu0 0.0
      %1184 = vmatprep.subr.mxu0 0.0
      %1185 = vmatpush1.msra.mxu0 0.0
      %1186 = vmatprep.subr.mxu0 0.0
      %1187 = vmatpush1.msra.mxu0 0.0
      %1188 = vmatprep.subr.mxu0 0.0
      %1189 = vmatpush1.msra.mxu0 0.0
      %1190 = vmatprep.subr.mxu0 0.0
      %1191 = vmatpush1.msra.mxu0 0.0
      %1192 = vmatprep.subr.mxu0 0.0
      %1193 = vmatpush1.msra.mxu0 0.0
      %1194 = vmatprep.subr.mxu0 0.0
      %1195 = vmatpush1.msra.mxu0 0.0
      %1196 = vmatprep.subr.mxu0 0.0
      %1197 = vmatpush1.msra.mxu0 0.0
      %1198 = vmatprep.subr.mxu0 0.0
      %1199 = vmatpush1.msra.mxu0 0.0
      %1200 = vmatprep.subr.mxu0 0.0
      %1201 = vmatpush1.msra.mxu0 0.0
      %1202 = vmatprep.subr.mxu0 0.0
      %1203 = vmatpush1.msra.mxu0 0.0
      %1204 = vmatprep.subr.mxu0 0.0
      %1205 = vmatpush1.msra.mxu0 0.0
      %1206 = vmatprep.subr.mxu0 0.0
      %1207 = vmatpush1.msra.mxu0 0.0
      %1208 = vmatprep.subr.mxu0 0.0
      %1209 = vmatpush1.msra.mxu0 0.0
      %1210 = vmatprep.subr.mxu0 0.0
      %1211 = vmatpush1.msra.mxu0 0.0
      %1212 = vmatprep.subr.mxu0 0.0
      %1213 = vmatpush1.msra.mxu0 0.0
      %1214 = vmatprep.subr.mxu0 0.0
      %1215 = vmatpush1.msra.mxu0 0.0
      %1216 = vmatprep.subr.mxu0 0.0
      %1217 = vmatpush1.msra.mxu0 0.0
      %1218 = vmatprep.subr.mxu0 0.0
      %1219 = vmatpush1.msra.mxu0 0.0
      %1220 = vmatprep.subr.mxu0 0.0
      %1221 = vmatpush1.msra.mxu0 0.0
      %1222 = vmatprep.subr.mxu0 0.0
      %1223 = vmatpush1.msra.mxu0 0.0
      %1224 = vmatprep.subr.mxu0 0.0
      %1225 = vmatpush1.msra.mxu0 0.0
      %1226 = vmatprep.mubr.f32.mxu0 0.0
      %1227 = vmatmul.mubr.f32.gmra.mrb[0].mxu0 %v1160
      %v1228 = vpop.f32.mrb[0].mxu0
      %v1229 = vadd.f32 0.0, %v1228
      %v1230 = vpop.f32.mrb[0].mxu0
      %1231 = vdwg.mxu0
      %v1233 = vsel %vm896, %v1229, 0
      %1235 = vmatprep.subr.mxu0 0.0
      %1236 = vmatpush1.msra.mxu0 %v657
      %1237 = vmatprep.subr.mxu0 0.0
      %1238 = vmatpush1.msra.mxu0 0.0
      %1239 = vmatprep.subr.mxu0 0.0
      %1240 = vmatpush1.msra.mxu0 0.0
      %1241 = vmatprep.subr.mxu0 0.0
      %1242 = vmatpush1.msra.mxu0 0.0
      %1243 = vmatprep.subr.mxu0 0.0
      %1244 = vmatpush1.msra.mxu0 0.0
      %1245 = vmatprep.subr.mxu0 0.0
      %1246 = vmatpush1.msra.mxu0 0.0
      %1247 = vmatprep.subr.mxu0 0.0
      %1248 = vmatpush1.msra.mxu0 0.0
      %1249 = vmatprep.subr.mxu0 0.0
      %1250 = vmatpush1.msra.mxu0 0.0
      %1251 = vmatprep.subr.mxu0 0.0
      %1252 = vmatpush1.msra.mxu0 0.0
      %1253 = vmatprep.subr.mxu0 0.0
      %1254 = vmatpush1.msra.mxu0 0.0
      %1255 = vmatprep.subr.mxu0 0.0
      %1256 = vmatpush1.msra.mxu0 0.0
      %1257 = vmatprep.subr.mxu0 0.0
      %1258 = vmatpush1.msra.mxu0 0.0
      %1259 = vmatprep.subr.mxu0 0.0
      %1260 = vmatpush1.msra.mxu0 0.0
      %1261 = vmatprep.subr.mxu0 0.0
      %1262 = vmatpush1.msra.mxu0 0.0
      %1263 = vmatprep.subr.mxu0 0.0
      %1264 = vmatpush1.msra.mxu0 0.0
      %1265 = vmatprep.subr.mxu0 0.0
      %1266 = vmatpush1.msra.mxu0 0.0
      %1267 = vmatprep.subr.mxu0 0.0
      %1268 = vmatpush1.msra.mxu0 0.0
      %1269 = vmatprep.subr.mxu0 0.0
      %1270 = vmatpush1.msra.mxu0 0.0
      %1271 = vmatprep.subr.mxu0 0.0
      %1272 = vmatpush1.msra.mxu0 0.0
      %1273 = vmatprep.subr.mxu0 0.0
      %1274 = vmatpush1.msra.mxu0 0.0
      %1275 = vmatprep.subr.mxu0 0.0
      %1276 = vmatpush1.msra.mxu0 0.0
      %1277 = vmatprep.subr.mxu0 0.0
      %1278 = vmatpush1.msra.mxu0 0.0
      %1279 = vmatprep.subr.mxu0 0.0
      %1280 = vmatpush1.msra.mxu0 0.0
      %1281 = vmatprep.subr.mxu0 0.0
      %1282 = vmatpush1.msra.mxu0 0.0
      %1283 = vmatprep.subr.mxu0 0.0
      %1284 = vmatpush1.msra.mxu0 0.0
      %1285 = vmatprep.subr.mxu0 0.0
      %1286 = vmatpush1.msra.mxu0 0.0
      %1287 = vmatprep.subr.mxu0 0.0
      %1288 = vmatpush1.msra.mxu0 0.0
      %1289 = vmatprep.subr.mxu0 0.0
      %1290 = vmatpush1.msra.mxu0 0.0
      %1291 = vmatprep.subr.mxu0 0.0
      %1292 = vmatpush1.msra.mxu0 0.0
      %1293 = vmatprep.subr.mxu0 0.0
      %1294 = vmatpush1.msra.mxu0 0.0
      %1295 = vmatprep.subr.mxu0 0.0
      %1296 = vmatpush1.msra.mxu0 0.0
      %1297 = vmatprep.subr.mxu0 0.0
      %1298 = vmatpush1.msra.mxu0 0.0
      %1299 = vmatprep.mubr.f32.mxu0 0.0
      %1300 = vmatmul.mubr.f32.gmra.mrb[0].mxu0 %v1233
      %v1301 = vpop.f32.mrb[0].mxu0
      %v1302 = vadd.f32 0.0, %v1301
      %v1303 = vpop.f32.mrb[0].mxu0
      %1304 = vdwg.mxu0
      %v1306 = vsel %vm896, %v1061, 0
      %1308 = vmatprep.subr.mxu0 0.0
      %1309 = vmatpush1.msra.mxu0 %v656
      %1310 = vmatprep.subr.mxu0 0.0
      %1311 = vmatpush1.msra.mxu0 0.0
      %1312 = vmatprep.subr.mxu0 0.0
      %1313 = vmatpush1.msra.mxu0 0.0
      %1314 = vmatprep.subr.mxu0 0.0
      %1315 = vmatpush1.msra.mxu0 0.0
      %1316 = vmatprep.subr.mxu0 0.0
      %1317 = vmatpush1.msra.mxu0 0.0
      %1318 = vmatprep.subr.mxu0 0.0
      %1319 = vmatpush1.msra.mxu0 0.0
      %1320 = vmatprep.subr.mxu0 0.0
      %1321 = vmatpush1.msra.mxu0 0.0
      %1322 = vmatprep.subr.mxu0 0.0
      %1323 = vmatpush1.msra.mxu0 0.0
      %1324 = vmatprep.subr.mxu0 0.0
      %1325 = vmatpush1.msra.mxu0 0.0
      %1326 = vmatprep.subr.mxu0 0.0
      %1327 = vmatpush1.msra.mxu0 0.0
      %1328 = vmatprep.subr.mxu0 0.0
      %1329 = vmatpush1.msra.mxu0 0.0
      %1330 = vmatprep.subr.mxu0 0.0
      %1331 = vmatpush1.msra.mxu0 0.0
      %1332 = vmatprep.subr.mxu0 0.0
      %1333 = vmatpush1.msra.mxu0 0.0
      %1334 = vmatprep.subr.mxu0 0.0
      %1335 = vmatpush1.msra.mxu0 0.0
      %1336 = vmatprep.subr.mxu0 0.0
      %1337 = vmatpush1.msra.mxu0 0.0
      %1338 = vmatprep.subr.mxu0 0.0
      %1339 = vmatpush1.msra.mxu0 0.0
      %1340 = vmatprep.subr.mxu0 0.0
      %1341 = vmatpush1.msra.mxu0 0.0
      %1342 = vmatprep.subr.mxu0 0.0
      %1343 = vmatpush1.msra.mxu0 0.0
      %1344 = vmatprep.subr.mxu0 0.0
      %1345 = vmatpush1.msra.mxu0 0.0
      %1346 = vmatprep.subr.mxu0 0.0
      %1347 = vmatpush1.msra.mxu0 0.0
      %1348 = vmatprep.subr.mxu0 0.0
      %1349 = vmatpush1.msra.mxu0 0.0
      %1350 = vmatprep.subr.mxu0 0.0
      %1351 = vmatpush1.msra.mxu0 0.0
      %1352 = vmatprep.subr.mxu0 0.0
      %1353 = vmatpush1.msra.mxu0 0.0
      %1354 = vmatprep.subr.mxu0 0.0
      %1355 = vmatpush1.msra.mxu0 0.0
      %1356 = vmatprep.subr.mxu0 0.0
      %1357 = vmatpush1.msra.mxu0 0.0
      %1358 = vmatprep.subr.mxu0 0.0
      %1359 = vmatpush1.msra.mxu0 0.0
      %1360 = vmatprep.subr.mxu0 0.0
      %1361 = vmatpush1.msra.mxu0 0.0
      %1362 = vmatprep.subr.mxu0 0.0
      %1363 = vmatpush1.msra.mxu0 0.0
      %1364 = vmatprep.subr.mxu0 0.0
      %1365 = vmatpush1.msra.mxu0 0.0
      %1366 = vmatprep.subr.mxu0 0.0
      %1367 = vmatpush1.msra.mxu0 0.0
      %1368 = vmatprep.subr.mxu0 0.0
      %1369 = vmatpush1.msra.mxu0 0.0
      %1370 = vmatprep.subr.mxu0 0.0
      %1371 = vmatpush1.msra.mxu0 0.0
      %1372 = vmatprep.mubr.f32.mxu0 0.0
      %1373 = vmatmul.mubr.f32.gmra.mrb[0].mxu0 %v1306
      %v1374 = vpop.f32.mrb[0].mxu0
      %v1375 = vadd.f32 %v1302, %v1374
      %v1376 = vpop.f32.mrb[0].mxu0
      %1377 = vdwg.mxu0
      %1378 = vrot.lane.b32.xlu0 %v741, 112
      %v1379 = vpop.permute.xlu0 %1378
      %1380 = vrot.lane.b32.xlu0 %v817, 112
      %v1381 = vpop.permute.xlu0 %1380
      %v1382 = vsel %vm896, %v1379, 0
      %v1384 = vsel %vm896, %v1381, 0
      %1386 = vmatprep.subr.mxu0 0.0
      %1387 = vmatpush1.xpose.msra.mxu0 %v1384
      %1388 = vmatprep.subr.mxu0 0.0
      %1389 = vmatpush1.xpose.msra.mxu0 0.0
      %1390 = vmatprep.subr.mxu0 0.0
      %1391 = vmatpush1.xpose.msra.mxu0 0.0
      %1392 = vmatprep.subr.mxu0 0.0
      %1393 = vmatpush1.xpose.msra.mxu0 0.0
      %1394 = vmatprep.subr.mxu0 0.0
      %1395 = vmatpush1.xpose.msra.mxu0 0.0
      %1396 = vmatprep.subr.mxu0 0.0
      %1397 = vmatpush1.xpose.msra.mxu0 0.0
      %1398 = vmatprep.subr.mxu0 0.0
      %1399 = vmatpush1.xpose.msra.mxu0 0.0
      %1400 = vmatprep.subr.mxu0 0.0
      %1401 = vmatpush1.xpose.msra.mxu0 0.0
      %1402 = vmatprep.subr.mxu0 0.0
      %1403 = vmatpush1.xpose.msra.mxu0 0.0
      %1404 = vmatprep.subr.mxu0 0.0
      %1405 = vmatpush1.xpose.msra.mxu0 0.0
      %1406 = vmatprep.subr.mxu0 0.0
      %1407 = vmatpush1.xpose.msra.mxu0 0.0
      %1408 = vmatprep.subr.mxu0 0.0
      %1409 = vmatpush1.xpose.msra.mxu0 0.0
      %1410 = vmatprep.subr.mxu0 0.0
      %1411 = vmatpush1.xpose.msra.mxu0 0.0
      %1412 = vmatprep.subr.mxu0 0.0
      %1413 = vmatpush1.xpose.msra.mxu0 0.0
      %1414 = vmatprep.subr.mxu0 0.0
      %1415 = vmatpush1.xpose.msra.mxu0 0.0
      %1416 = vmatprep.subr.mxu0 0.0
      %1417 = vmatpush1.xpose.msra.mxu0 0.0
      %1418 = vmatprep.subr.mxu0 0.0
      %1419 = vmatpush1.xpose.msra.mxu0 0.0
      %1420 = vmatprep.subr.mxu0 0.0
      %1421 = vmatpush1.xpose.msra.mxu0 0.0
      %1422 = vmatprep.subr.mxu0 0.0
      %1423 = vmatpush1.xpose.msra.mxu0 0.0
      %1424 = vmatprep.subr.mxu0 0.0
      %1425 = vmatpush1.xpose.msra.mxu0 0.0
      %1426 = vmatprep.subr.mxu0 0.0
      %1427 = vmatpush1.xpose.msra.mxu0 0.0
      %1428 = vmatprep.subr.mxu0 0.0
      %1429 = vmatpush1.xpose.msra.mxu0 0.0
      %1430 = vmatprep.subr.mxu0 0.0
      %1431 = vmatpush1.xpose.msra.mxu0 0.0
      %1432 = vmatprep.subr.mxu0 0.0
      %1433 = vmatpush1.xpose.msra.mxu0 0.0
      %1434 = vmatprep.subr.mxu0 0.0
      %1435 = vmatpush1.xpose.msra.mxu0 0.0
      %1436 = vmatprep.subr.mxu0 0.0
      %1437 = vmatpush1.xpose.msra.mxu0 0.0
      %1438 = vmatprep.subr.mxu0 0.0
      %1439 = vmatpush1.xpose.msra.mxu0 0.0
      %1440 = vmatprep.subr.mxu0 0.0
      %1441 = vmatpush1.xpose.msra.mxu0 0.0
      %1442 = vmatprep.subr.mxu0 0.0
      %1443 = vmatpush1.xpose.msra.mxu0 0.0
      %1444 = vmatprep.subr.mxu0 0.0
      %1445 = vmatpush1.xpose.msra.mxu0 0.0
      %1446 = vmatprep.subr.mxu0 0.0
      %1447 = vmatpush1.xpose.msra.mxu0 0.0
      %1448 = vmatprep.subr.mxu0 0.0
      %1449 = vmatpush1.xpose.msra.mxu0 0.0
      %1450 = vmatprep.mubr.f32.mxu0 0.0
      %1451 = vmatmul.mubr.f32.gmra.mrb[0].mxu0 %v1382
      %v1452 = vpop.f32.mrb[0].mxu0
      %v1453 = vadd.f32 0.0, %v1452
      %v1454 = vpop.f32.mrb[0].mxu0
      %1455 = vdwg.mxu0
      %v1456 = vmul.f32 %v1453, 0.35355338
      %v1457 = vadd.f32 %v1456, %v977
      %v1458 = vsel %vm896, %v1457, -inf
      %1459 = vmax.xlane.f32.xlu0 %v1458
      %v1460 = vpop.xlane.xlu0 %1459
      %v1461 = vsub.f32 %v1457, %v1460
      %v1462 = vmul.f32 %v1461, 1.442695
      %v1463 = vpow.pop %v1462
      %v1464 = vsel %vm896, %v1463, 0.0
      %1465 = vadd.xlane.f32.xlu0 %v1464
      %v1466 = vpop.xlane.xlu0 %1465
      %v1467 = vrcp.pop %v1466
      %v1468 = vmul.f32 %v1463, %v1467
      %1469 = vrot.lane.b32.xlu0 %v893, 112
      %v1470 = vpop.permute.xlu0 %1469
      %v1473 = vsel %vm896, %v1468, 0
      %1475 = vmatprep.subr.mxu0 0.0
      %1476 = vmatpush1.msra.mxu0 %v1470
      %1477 = vmatprep.subr.mxu0 0.0
      %1478 = vmatpush1.msra.mxu0 0.0
      %1479 = vmatprep.subr.mxu0 0.0
      %1480 = vmatpush1.msra.mxu0 0.0
      %1481 = vmatprep.subr.mxu0 0.0
      %1482 = vmatpush1.msra.mxu0 0.0
      %1483 = vmatprep.subr.mxu0 0.0
      %1484 = vmatpush1.msra.mxu0 0.0
      %1485 = vmatprep.subr.mxu0 0.0
      %1486 = vmatpush1.msra.mxu0 0.0
      %1487 = vmatprep.subr.mxu0 0.0
      %1488 = vmatpush1.msra.mxu0 0.0
      %1489 = vmatprep.subr.mxu0 0.0
      %1490 = vmatpush1.msra.mxu0 0.0
      %1491 = vmatprep.subr.mxu0 0.0
      %1492 = vmatpush1.msra.mxu0 0.0
      %1493 = vmatprep.subr.mxu0 0.0
      %1494 = vmatpush1.msra.mxu0 0.0
      %1495 = vmatprep.subr.mxu0 0.0
      %1496 = vmatpush1.msra.mxu0 0.0
      %1497 = vmatprep.subr.mxu0 0.0
      %1498 = vmatpush1.msra.mxu0 0.0
      %1499 = vmatprep.subr.mxu0 0.0
      %1500 = vmatpush1.msra.mxu0 0.0
      %1501 = vmatprep.subr.mxu0 0.0
      %1502 = vmatpush1.msra.mxu0 0.0
      %1503 = vmatprep.subr.mxu0 0.0
      %1504 = vmatpush1.msra.mxu0 0.0
      %1505 = vmatprep.subr.mxu0 0.0
      %1506 = vmatpush1.msra.mxu0 0.0
      %1507 = vmatprep.subr.mxu0 0.0
      %1508 = vmatpush1.msra.mxu0 0.0
      %1509 = vmatprep.subr.mxu0 0.0
      %1510 = vmatpush1.msra.mxu0 0.0
      %1511 = vmatprep.subr.mxu0 0.0
      %1512 = vmatpush1.msra.mxu0 0.0
      %1513 = vmatprep.subr.mxu0 0.0
      %1514 = vmatpush1.msra.mxu0 0.0
      %1515 = vmatprep.subr.mxu0 0.0
      %1516 = vmatpush1.msra.mxu0 0.0
      %1517 = vmatprep.subr.mxu0 0.0
      %1518 = vmatpush1.msra.mxu0 0.0
      %1519 = vmatprep.subr.mxu0 0.0
      %1520 = vmatpush1.msra.mxu0 0.0
      %1521 = vmatprep.subr.mxu0 0.0
      %1522 = vmatpush1.msra.mxu0 0.0
      %1523 = vmatprep.subr.mxu0 0.0
      %1524 = vmatpush1.msra.mxu0 0.0
      %1525 = vmatprep.subr.mxu0 0.0
      %1526 = vmatpush1.msra.mxu0 0.0
      %1527 = vmatprep.subr.mxu0 0.0
      %1528 = vmatpush1.msra.mxu0 0.0
      %1529 = vmatprep.subr.mxu0 0.0
      %1530 = vmatpush1.msra.mxu0 0.0
      %1531 = vmatprep.subr.mxu0 0.0
      %1532 = vmatpush1.msra.mxu0 0.0
      %1533 = vmatprep.subr.mxu0 0.0
      %1534 = vmatpush1.msra.mxu0 0.0
      %1535 = vmatprep.subr.mxu0 0.0
      %1536 = vmatpush1.msra.mxu0 0.0
      %1537 = vmatprep.subr.mxu0 0.0
      %1538 = vmatpush1.msra.mxu0 0.0
      %1539 = vmatprep.mubr.f32.mxu0 0.0
      %1540 = vmatmul.mubr.f32.gmra.mrb[0].mxu0 %v1473
      %v1541 = vpop.f32.mrb[0].mxu0
      %v1542 = vadd.f32 0.0, %v1541
      %v1543 = vpop.f32.mrb[0].mxu0
      %1544 = vdwg.mxu0
      %v1546 = vsel %vm896, %v1542, 0
      %1548 = vmatprep.subr.mxu0 0.0
      %1549 = vmatpush1.msra.mxu0 %v658
      %1550 = vmatprep.subr.mxu0 0.0
      %1551 = vmatpush1.msra.mxu0 0.0
      %1552 = vmatprep.subr.mxu0 0.0
      %1553 = vmatpush1.msra.mxu0 0.0
      %1554 = vmatprep.subr.mxu0 0.0
      %1555 = vmatpush1.msra.mxu0 0.0
      %1556 = vmatprep.subr.mxu0 0.0
      %1557 = vmatpush1.msra.mxu0 0.0
      %1558 = vmatprep.subr.mxu0 0.0
      %1559 = vmatpush1.msra.mxu0 0.0
      %1560 = vmatprep.subr.mxu0 0.0
      %1561 = vmatpush1.msra.mxu0 0.0
      %1562 = vmatprep.subr.mxu0 0.0
      %1563 = vmatpush1.msra.mxu0 0.0
      %1564 = vmatprep.subr.mxu0 0.0
      %1565 = vmatpush1.msra.mxu0 0.0
      %1566 = vmatprep.subr.mxu0 0.0
      %1567 = vmatpush1.msra.mxu0 0.0
      %1568 = vmatprep.subr.mxu0 0.0
      %1569 = vmatpush1.msra.mxu0 0.0
      %1570 = vmatprep.subr.mxu0 0.0
      %1571 = vmatpush1.msra.mxu0 0.0
      %1572 = vmatprep.subr.mxu0 0.0
      %1573 = vmatpush1.msra.mxu0 0.0
      %1574 = vmatprep.subr.mxu0 0.0
      %1575 = vmatpush1.msra.mxu0 0.0
      %1576 = vmatprep.subr.mxu0 0.0
      %1577 = vmatpush1.msra.mxu0 0.0
      %1578 = vmatprep.subr.mxu0 0.0
      %1579 = vmatpush1.msra.mxu0 0.0
      %1580 = vmatprep.subr.mxu0 0.0
      %1581 = vmatpush1.msra.mxu0 0.0
      %1582 = vmatprep.subr.mxu0 0.0
      %1583 = vmatpush1.msra.mxu0 0.0
      %1584 = vmatprep.subr.mxu0 0.0
      %1585 = vmatpush1.msra.mxu0 0.0
      %1586 = vmatprep.subr.mxu0 0.0
      %1587 = vmatpush1.msra.mxu0 0.0
      %1588 = vmatprep.subr.mxu0 0.0
      %1589 = vmatpush1.msra.mxu0 0.0
      %1590 = vmatprep.subr.mxu0 0.0
      %1591 = vmatpush1.msra.mxu0 0.0
      %1592 = vmatprep.subr.mxu0 0.0
      %1593 = vmatpush1.msra.mxu0 0.0
      %1594 = vmatprep.subr.mxu0 0.0
      %1595 = vmatpush1.msra.mxu0 0.0
      %1596 = vmatprep.subr.mxu0 0.0
      %1597 = vmatpush1.msra.mxu0 0.0
      %1598 = vmatprep.subr.mxu0 0.0
      %1599 = vmatpush1.msra.mxu0 0.0
      %1600 = vmatprep.subr.mxu0 0.0
      %1601 = vmatpush1.msra.mxu0 0.0
      %1602 = vmatprep.subr.mxu0 0.0
      %1603 = vmatpush1.msra.mxu0 0.0
      %1604 = vmatprep.subr.mxu0 0.0
      %1605 = vmatpush1.msra.mxu0 0.0
      %1606 = vmatprep.subr.mxu0 0.0
      %1607 = vmatpush1.msra.mxu0 0.0
      %1608 = vmatprep.subr.mxu0 0.0
      %1609 = vmatpush1.msra.mxu0 0.0
      %1610 = vmatprep.subr.mxu0 0.0
      %1611 = vmatpush1.msra.mxu0 0.0
      %1612 = vmatprep.mubr.f32.mxu0 0.0
      %1613 = vmatmul.mubr.f32.gmra.mrb[0].mxu0 %v1546
      %v1614 = vpop.f32.mrb[0].mxu0
      %v1615 = vadd.f32 0.0, %v1614
      %v1616 = vpop.f32.mrb[0].mxu0
      %1617 = vdwg.mxu0
      %v1618 = vadd.f32 %v1375, %v1615
      %1619 = vrot.lane.b32.xlu0 %v741, 104
      %v1620 = vpop.permute.xlu0 %1619
      %1621 = vrot.lane.b32.xlu0 %v817, 104
      %v1622 = vpop.permute.xlu0 %1621
      %v1623 = vsel %vm896, %v1620, 0
      %v1625 = vsel %vm896, %v1622, 0
      %1627 = vmatprep.subr.mxu0 0.0
      %1628 = vmatpush1.xpose.msra.mxu0 %v1625
      %1629 = vmatprep.subr.mxu0 0.0
      %1630 = vmatpush1.xpose.msra.mxu0 0.0
      %1631 = vmatprep.subr.mxu0 0.0
      %1632 = vmatpush1.xpose.msra.mxu0 0.0
      %1633 = vmatprep.subr.mxu0 0.0
      %1634 = vmatpush1.xpose.msra.mxu0 0.0
      %1635 = vmatprep.subr.mxu0 0.0
      %1636 = vmatpush1.xpose.msra.mxu0 0.0
      %1637 = vmatprep.subr.mxu0 0.0
      %1638 = vmatpush1.xpose.msra.mxu0 0.0
      %1639 = vmatprep.subr.mxu0 0.0
      %1640 = vmatpush1.xpose.msra.mxu0 0.0
      %1641 = vmatprep.subr.mxu0 0.0
      %1642 = vmatpush1.xpose.msra.mxu0 0.0
      %1643 = vmatprep.subr.mxu0 0.0
      %1644 = vmatpush1.xpose.msra.mxu0 0.0
      %1645 = vmatprep.subr.mxu0 0.0
      %1646 = vmatpush1.xpose.msra.mxu0 0.0
      %1647 = vmatprep.subr.mxu0 0.0
      %1648 = vmatpush1.xpose.msra.mxu0 0.0
      %1649 = vmatprep.subr.mxu0 0.0
      %1650 = vmatpush1.xpose.msra.mxu0 0.0
      %1651 = vmatprep.subr.mxu0 0.0
      %1652 = vmatpush1.xpose.msra.mxu0 0.0
      %1653 = vmatprep.subr.mxu0 0.0
      %1654 = vmatpush1.xpose.msra.mxu0 0.0
      %1655 = vmatprep.subr.mxu0 0.0
      %1656 = vmatpush1.xpose.msra.mxu0 0.0
      %1657 = vmatprep.subr.mxu0 0.0
      %1658 = vmatpush1.xpose.msra.mxu0 0.0
      %1659 = vmatprep.subr.mxu0 0.0
      %1660 = vmatpush1.xpose.msra.mxu0 0.0
      %1661 = vmatprep.subr.mxu0 0.0
      %1662 = vmatpush1.xpose.msra.mxu0 0.0
      %1663 = vmatprep.subr.mxu0 0.0
      %1664 = vmatpush1.xpose.msra.mxu0 0.0
      %1665 = vmatprep.subr.mxu0 0.0
      %1666 = vmatpush1.xpose.msra.mxu0 0.0
      %1667 = vmatprep.subr.mxu0 0.0
      %1668 = vmatpush1.xpose.msra.mxu0 0.0
      %1669 = vmatprep.subr.mxu0 0.0
      %1670 = vmatpush1.xpose.msra.mxu0 0.0
      %1671 = vmatprep.subr.mxu0 0.0
      %1672 = vmatpush1.xpose.msra.mxu0 0.0
      %1673 = vmatprep.subr.mxu0 0.0
      %1674 = vmatpush1.xpose.msra.mxu0 0.0
      %1675 = vmatprep.subr.mxu0 0.0
      %1676 = vmatpush1.xpose.msra.mxu0 0.0
      %1677 = vmatprep.subr.mxu0 0.0
      %1678 = vmatpush1.xpose.msra.mxu0 0.0
      %1679 = vmatprep.subr.mxu0 0.0
      %1680 = vmatpush1.xpose.msra.mxu0 0.0
      %1681 = vmatprep.subr.mxu0 0.0
      %1682 = vmatpush1.xpose.msra.mxu0 0.0
      %1683 = vmatprep.subr.mxu0 0.0
      %1684 = vmatpush1.xpose.msra.mxu0 0.0
      %1685 = vmatprep.subr.mxu0 0.0
      %1686 = vmatpush1.xpose.msra.mxu0 0.0
      %1687 = vmatprep.subr.mxu0 0.0
      %1688 = vmatpush1.xpose.msra.mxu0 0.0
      %1689 = vmatprep.subr.mxu0 0.0
      %1690 = vmatpush1.xpose.msra.mxu0 0.0
      %1691 = vmatprep.mubr.f32.mxu0 0.0
      %1692 = vmatmul.mubr.f32.gmra.mrb[0].mxu0 %v1623
      %v1693 = vpop.f32.mrb[0].mxu0
      %v1694 = vadd.f32 0.0, %v1693
      %v1695 = vpop.f32.mrb[0].mxu0
      %1696 = vdwg.mxu0
      %v1697 = vmul.f32 %v1694, 0.35355338
      %v1698 = vadd.f32 %v1697, %v977
      %v1699 = vsel %vm896, %v1698, -inf
      %1700 = vmax.xlane.f32.xlu0 %v1699
      %v1701 = vpop.xlane.xlu0 %1700
      %v1702 = vsub.f32 %v1698, %v1701
      %v1703 = vmul.f32 %v1702, 1.442695
      %v1704 = vpow.pop %v1703
      %v1705 = vsel %vm896, %v1704, 0.0
      %1706 = vadd.xlane.f32.xlu0 %v1705
      %v1707 = vpop.xlane.xlu0 %1706
      %v1708 = vrcp.pop %v1707
      %v1709 = vmul.f32 %v1704, %v1708
      %1710 = vrot.lane.b32.xlu0 %v893, 104
      %v1711 = vpop.permute.xlu0 %1710
      %v1714 = vsel %vm896, %v1709, 0
      %1716 = vmatprep.subr.mxu0 0.0
      %1717 = vmatpush1.msra.mxu0 %v1711
      %1718 = vmatprep.subr.mxu0 0.0
      %1719 = vmatpush1.msra.mxu0 0.0
      %1720 = vmatprep.subr.mxu0 0.0
      %1721 = vmatpush1.msra.mxu0 0.0
      %1722 = vmatprep.subr.mxu0 0.0
      %1723 = vmatpush1.msra.mxu0 0.0
      %1724 = vmatprep.subr.mxu0 0.0
      %1725 = vmatpush1.msra.mxu0 0.0
      %1726 = vmatprep.subr.mxu0 0.0
      %1727 = vmatpush1.msra.mxu0 0.0
      %1728 = vmatprep.subr.mxu0 0.0
      %1729 = vmatpush1.msra.mxu0 0.0
      %1730 = vmatprep.subr.mxu0 0.0
      %1731 = vmatpush1.msra.mxu0 0.0
      %1732 = vmatprep.subr.mxu0 0.0
      %1733 = vmatpush1.msra.mxu0 0.0
      %1734 = vmatprep.subr.mxu0 0.0
      %1735 = vmatpush1.msra.mxu0 0.0
      %1736 = vmatprep.subr.mxu0 0.0
      %1737 = vmatpush1.msra.mxu0 0.0
      %1738 = vmatprep.subr.mxu0 0.0
      %1739 = vmatpush1.msra.mxu0 0.0
      %1740 = vmatprep.subr.mxu0 0.0
      %1741 = vmatpush1.msra.mxu0 0.0
      %1742 = vmatprep.subr.mxu0 0.0
      %1743 = vmatpush1.msra.mxu0 0.0
      %1744 = vmatprep.subr.mxu0 0.0
      %1745 = vmatpush1.msra.mxu0 0.0
      %1746 = vmatprep.subr.mxu0 0.0
      %1747 = vmatpush1.msra.mxu0 0.0
      %1748 = vmatprep.subr.mxu0 0.0
      %1749 = vmatpush1.msra.mxu0 0.0
      %1750 = vmatprep.subr.mxu0 0.0
      %1751 = vmatpush1.msra.mxu0 0.0
      %1752 = vmatprep.subr.mxu0 0.0
      %1753 = vmatpush1.msra.mxu0 0.0
      %1754 = vmatprep.subr.mxu0 0.0
      %1755 = vmatpush1.msra.mxu0 0.0
      %1756 = vmatprep.subr.mxu0 0.0
      %1757 = vmatpush1.msra.mxu0 0.0
      %1758 = vmatprep.subr.mxu0 0.0
      %1759 = vmatpush1.msra.mxu0 0.0
      %1760 = vmatprep.subr.mxu0 0.0
      %1761 = vmatpush1.msra.mxu0 0.0
      %1762 = vmatprep.subr.mxu0 0.0
      %1763 = vmatpush1.msra.mxu0 0.0
      %1764 = vmatprep.subr.mxu0 0.0
      %1765 = vmatpush1.msra.mxu0 0.0
      %1766 = vmatprep.subr.mxu0 0.0
      %1767 = vmatpush1.msra.mxu0 0.0
      %1768 = vmatprep.subr.mxu0 0.0
      %1769 = vmatpush1.msra.mxu0 0.0
      %1770 = vmatprep.subr.mxu0 0.0
      %1771 = vmatpush1.msra.mxu0 0.0
      %1772 = vmatprep.subr.mxu0 0.0
      %1773 = vmatpush1.msra.mxu0 0.0
      %1774 = vmatprep.subr.mxu0 0.0
      %1775 = vmatpush1.msra.mxu0 0.0
      %1776 = vmatprep.subr.mxu0 0.0
      %1777 = vmatpush1.msra.mxu0 0.0
      %1778 = vmatprep.subr.mxu0 0.0
      %1779 = vmatpush1.msra.mxu0 0.0
      %1780 = vmatprep.mubr.f32.mxu0 0.0
      %1781 = vmatmul.mubr.f32.gmra.mrb[0].mxu0 %v1714
      %v1782 = vpop.f32.mrb[0].mxu0
      %v1783 = vadd.f32 0.0, %v1782
      %v1784 = vpop.f32.mrb[0].mxu0
      %1785 = vdwg.mxu0
      %v1787 = vsel %vm896, %v1783, 0
      %1789 = vmatprep.subr.mxu0 0.0
      %1790 = vmatpush1.msra.mxu0 %v659
      %1791 = vmatprep.subr.mxu0 0.0
      %1792 = vmatpush1.msra.mxu0 0.0
      %1793 = vmatprep.subr.mxu0 0.0
      %1794 = vmatpush1.msra.mxu0 0.0
      %1795 = vmatprep.subr.mxu0 0.0
      %1796 = vmatpush1.msra.mxu0 0.0
      %1797 = vmatprep.subr.mxu0 0.0
      %1798 = vmatpush1.msra.mxu0 0.0
      %1799 = vmatprep.subr.mxu0 0.0
      %1800 = vmatpush1.msra.mxu0 0.0
      %1801 = vmatprep.subr.mxu0 0.0
      %1802 = vmatpush1.msra.mxu0 0.0
      %1803 = vmatprep.subr.mxu0 0.0
      %1804 = vmatpush1.msra.mxu0 0.0
      %1805 = vmatprep.subr.mxu0 0.0
      %1806 = vmatpush1.msra.mxu0 0.0
      %1807 = vmatprep.subr.mxu0 0.0
      %1808 = vmatpush1.msra.mxu0 0.0
      %1809 = vmatprep.subr.mxu0 0.0
      %1810 = vmatpush1.msra.mxu0 0.0
      %1811 = vmatprep.subr.mxu0 0.0
      %1812 = vmatpush1.msra.mxu0 0.0
      %1813 = vmatprep.subr.mxu0 0.0
      %1814 = vmatpush1.msra.mxu0 0.0
      %1815 = vmatprep.subr.mxu0 0.0
      %1816 = vmatpush1.msra.mxu0 0.0
      %1817 = vmatprep.subr.mxu0 0.0
      %1818 = vmatpush1.msra.mxu0 0.0
      %1819 = vmatprep.subr.mxu0 0.0
      %1820 = vmatpush1.msra.mxu0 0.0
      %1821 = vmatprep.subr.mxu0 0.0
      %1822 = vmatpush1.msra.mxu0 0.0
      %1823 = vmatprep.subr.mxu0 0.0
      %1824 = vmatpush1.msra.mxu0 0.0
      %1825 = vmatprep.subr.mxu0 0.0
      %1826 = vmatpush1.msra.mxu0 0.0
      %1827 = vmatprep.subr.mxu0 0.0
      %1828 = vmatpush1.msra.mxu0 0.0
      %1829 = vmatprep.subr.mxu0 0.0
      %1830 = vmatpush1.msra.mxu0 0.0
      %1831 = vmatprep.subr.mxu0 0.0
      %1832 = vmatpush1.msra.mxu0 0.0
      %1833 = vmatprep.subr.mxu0 0.0
      %1834 = vmatpush1.msra.mxu0 0.0
      %1835 = vmatprep.subr.mxu0 0.0
      %1836 = vmatpush1.msra.mxu0 0.0
      %1837 = vmatprep.subr.mxu0 0.0
      %1838 = vmatpush1.msra.mxu0 0.0
      %1839 = vmatprep.subr.mxu0 0.0
      %1840 = vmatpush1.msra.mxu0 0.0
      %1841 = vmatprep.subr.mxu0 0.0
      %1842 = vmatpush1.msra.mxu0 0.0
      %1843 = vmatprep.subr.mxu0 0.0
      %1844 = vmatpush1.msra.mxu0 0.0
      %1845 = vmatprep.subr.mxu0 0.0
      %1846 = vmatpush1.msra.mxu0 0.0
      %1847 = vmatprep.subr.mxu0 0.0
      %1848 = vmatpush1.msra.mxu0 0.0
      %1849 = vmatprep.subr.mxu0 0.0
      %1850 = vmatpush1.msra.mxu0 0.0
      %1851 = vmatprep.subr.mxu0 0.0
      %1852 = vmatpush1.msra.mxu0 0.0
      %1853 = vmatprep.mubr.f32.mxu0 0.0
      %1854 = vmatmul.mubr.f32.gmra.mrb[0].mxu0 %v1787
      %v1855 = vpop.f32.mrb[0].mxu0
      %v1856 = vadd.f32 0.0, %v1855
      %v1857 = vpop.f32.mrb[0].mxu0
      %1858 = vdwg.mxu0
      %v1859 = vadd.f32 %v1618, %v1856
      %v1861 = vlaneseq
      %v1862 = vshrl.u32 %v1861, 7
      %v1863 = vsub.s32 0, %v1862
      %v1864 = vrot.slane %v663, %v1863
      %v1866 = vadd.f32 %v1859, %v1864
      %v1867 = vadd.f32 %v642, %v1866
      %v1868 = vld [vmem:[%s10] sm:$0x1]
      %v1869 = vld [vmem:[%s11] sm:$0x1]
      %v1870 = vsel %vm670, %v1867, 0.0
      %1871 = vadd.xlane.f32.xlu0 %v1870
      %v1872 = vpop.xlane.xlu0 %1871
      %v1873 = vrcp.pop 32.0
      %v1874 = vmul.f32 %v1872, %v1873
      %v1875 = vsub.f32 %v1867, %v1874
      %v1876 = vmul.f32 %v1875, %v1875
      %v1877 = vsel %vm670, %v1876, 0.0
      %1878 = vadd.xlane.f32.xlu0 %v1877
      %v1879 = vpop.xlane.xlu0 %1878
      %v1880 = vmul.f32 %v1879, %v1873
      %v1881 = vadd.f32 %v1880, 1e-05
      %v1882 = vrsqrt.pop %v1881
      %v1883 = vmul.f32 %v1875, %v1882
      %v1885 = vlaneseq
      %v1886 = vshrl.u32 %v1885, 7
      %v1887 = vsub.s32 0, %v1886
      %v1888 = vrot.slane %v1868, %v1887
      %v1890 = vmul.f32 %v1883, %v1888
      %v1892 = vlaneseq
      %v1893 = vshrl.u32 %v1892, 7
      %v1894 = vsub.s32 0, %v1893
      %v1895 = vrot.slane %v1869, %v1894
      %v1897 = vadd.f32 %v1890, %v1895
      %v1898 = vld [vmem:[%s12] sm:$0xff]
      %v1899 = vld [vmem:[%s12 + $0x8] sm:$0xff]
      %v1900 = vld [vmem:[%s12 + $0x10] sm:$0xff]
      %v1901 = vld [vmem:[%s12 + $0x18] sm:$0xff]
      %v1902 = vld [vmem:[%s13] sm:$0x1]
      %v1904 = vlaneseq
      %v1905 = vshrl.u32 %v1904, 7
      %v1906 = vsub.s32 0, %v1905
      %v1907 = vrot.slane %v1902, %v1906
      %v1910 = vsel %vm670, %v1897, 0
      %1912 = vmatprep.subr.mxu0 0.0
      %1913 = vmatpush1.msra.mxu0 %v1898
      %1914 = vmatprep.subr.mxu0 0.0
      %1915 = vmatpush1.msra.mxu0 %v1899
      %1916 = vmatprep.subr.mxu0 0.0
      %1917 = vmatpush1.msra.mxu0 %v1900
      %1918 = vmatprep.subr.mxu0 0.0
      %1919 = vmatpush1.msra.mxu0 %v1901
      %1920 = vmatprep.subr.mxu0 0.0
      %1921 = vmatpush1.msra.mxu0 0.0
      %1922 = vmatprep.subr.mxu0 0.0
      %1923 = vmatpush1.msra.mxu0 0.0
      %1924 = vmatprep.subr.mxu0 0.0
      %1925 = vmatpush1.msra.mxu0 0.0
      %1926 = vmatprep.subr.mxu0 0.0
      %1927 = vmatpush1.msra.mxu0 0.0
      %1928 = vmatprep.subr.mxu0 0.0
      %1929 = vmatpush1.msra.mxu0 0.0
      %1930 = vmatprep.subr.mxu0 0.0
      %1931 = vmatpush1.msra.mxu0 0.0
      %1932 = vmatprep.subr.mxu0 0.0
      %1933 = vmatpush1.msra.mxu0 0.0
      %1934 = vmatprep.subr.mxu0 0.0
      %1935 = vmatpush1.msra.mxu0 0.0
      %1936 = vmatprep.subr.mxu0 0.0
      %1937 = vmatpush1.msra.mxu0 0.0
      %1938 = vmatprep.subr.mxu0 0.0
      %1939 = vmatpush1.msra.mxu0 0.0
      %1940 = vmatprep.subr.mxu0 0.0
      %1941 = vmatpush1.msra.mxu0 0.0
      %1942 = vmatprep.subr.mxu0 0.0
      %1943 = vmatpush1.msra.mxu0 0.0
      %1944 = vmatprep.subr.mxu0 0.0
      %1945 = vmatpush1.msra.mxu0 0.0
      %1946 = vmatprep.subr.mxu0 0.0
      %1947 = vmatpush1.msra.mxu0 0.0
      %1948 = vmatprep.subr.mxu0 0.0
      %1949 = vmatpush1.msra.mxu0 0.0
      %1950 = vmatprep.subr.mxu0 0.0
      %1951 = vmatpush1.msra.mxu0 0.0
      %1952 = vmatprep.subr.mxu0 0.0
      %1953 = vmatpush1.msra.mxu0 0.0
      %1954 = vmatprep.subr.mxu0 0.0
      %1955 = vmatpush1.msra.mxu0 0.0
      %1956 = vmatprep.subr.mxu0 0.0
      %1957 = vmatpush1.msra.mxu0 0.0
      %1958 = vmatprep.subr.mxu0 0.0
      %1959 = vmatpush1.msra.mxu0 0.0
      %1960 = vmatprep.subr.mxu0 0.0
      %1961 = vmatpush1.msra.mxu0 0.0
      %1962 = vmatprep.subr.mxu0 0.0
      %1963 = vmatpush1.msra.mxu0 0.0
      %1964 = vmatprep.subr.mxu0 0.0
      %1965 = vmatpush1.msra.mxu0 0.0
      %1966 = vmatprep.subr.mxu0 0.0
      %1967 = vmatpush1.msra.mxu0 0.0
      %1968 = vmatprep.subr.mxu0 0.0
      %1969 = vmatpush1.msra.mxu0 0.0
      %1970 = vmatprep.subr.mxu0 0.0
      %1971 = vmatpush1.msra.mxu0 0.0
      %1972 = vmatprep.subr.mxu0 0.0
      %1973 = vmatpush1.msra.mxu0 0.0
      %1974 = vmatprep.subr.mxu0 0.0
      %1975 = vmatpush1.msra.mxu0 0.0
      %1976 = vmatprep.mubr.f32.mxu0 0.0
      %1977 = vmatmul.mubr.f32.gmra.mrb[0].mxu0 %v1910
      %v1978 = vpop.f32.mrb[0].mxu0
      %v1979 = vadd.f32 %v1907, %v1978
      %v1980 = vpop.f32.mrb[0].mxu0
      %1981 = vdwg.mxu0
      %v1982 = vmax.f32 %v1979, 0.0
      %v1983 = vld [vmem:[%s14] sm:$0xff]
      %v1984 = vld [vmem:[%s14 + $0x8] sm:$0xff]
      %v1985 = vld [vmem:[%s14 + $0x10] sm:$0xff]
      %v1986 = vld [vmem:[%s14 + $0x18] sm:$0xff]
      %v1987 = vld [vmem:[%s14 + $0x20] sm:$0xff]
      %v1988 = vld [vmem:[%s14 + $0x28] sm:$0xff]
      %v1989 = vld [vmem:[%s14 + $0x30] sm:$0xff]
      %v1990 = vld [vmem:[%s14 + $0x38] sm:$0xff]
      %v1991 = vld [vmem:[%s14 + $0x40] sm:$0xff]
      %v1992 = vld [vmem:[%s14 + $0x48] sm:$0xff]
      %v1993 = vld [vmem:[%s14 + $0x50] sm:$0xff]
      %v1994 = vld [vmem:[%s14 + $0x58] sm:$0xff]
      %v1995 = vld [vmem:[%s14 + $0x60] sm:$0xff]
      %v1996 = vld [vmem:[%s14 + $0x68] sm:$0xff]
      %v1997 = vld [vmem:[%s14 + $0x70] sm:$0xff]
      %v1998 = vld [vmem:[%s14 + $0x78] sm:$0xff]
      %v1999 = vld [vmem:[%s15] sm:$0x1]
      %v2001 = vlaneseq
      %v2002 = vshrl.u32 %v2001, 7
      %v2003 = vsub.s32 0, %v2002
      %v2004 = vrot.slane %v1999, %v2003
      %2006 = vmatprep.subr.mxu0 0.0
      %2007 = vmatpush1.msra.mxu0 %v1983
      %2008 = vmatprep.subr.mxu0 0.0
      %2009 = vmatpush1.msra.mxu0 %v1984
      %2010 = vmatprep.subr.mxu0 0.0
      %2011 = vmatpush1.msra.mxu0 %v1985
      %2012 = vmatprep.subr.mxu0 0.0
      %2013 = vmatpush1.msra.mxu0 %v1986
      %2014 = vmatprep.subr.mxu0 0.0
      %2015 = vmatpush1.msra.mxu0 %v1987
      %2016 = vmatprep.subr.mxu0 0.0
      %2017 = vmatpush1.msra.mxu0 %v1988
      %2018 = vmatprep.subr.mxu0 0.0
      %2019 = vmatpush1.msra.mxu0 %v1989
      %2020 = vmatprep.subr.mxu0 0.0
      %2021 = vmatpush1.msra.mxu0 %v1990
      %2022 = vmatprep.subr.mxu0 0.0
      %2023 = vmatpush1.msra.mxu0 %v1991
      %2024 = vmatprep.subr.mxu0 0.0
      %2025 = vmatpush1.msra.mxu0 %v1992
      %2026 = vmatprep.subr.mxu0 0.0
      %2027 = vmatpush1.msra.mxu0 %v1993
      %2028 = vmatprep.subr.mxu0 0.0
      %2029 = vmatpush1.msra.mxu0 %v1994
      %2030 = vmatprep.subr.mxu0 0.0
      %2031 = vmatpush1.msra.mxu0 %v1995
      %2032 = vmatprep.subr.mxu0 0.0
      %2033 = vmatpush1.msra.mxu0 %v1996
      %2034 = vmatprep.subr.mxu0 0.0
      %2035 = vmatpush1.msra.mxu0 %v1997
      %2036 = vmatprep.subr.mxu0 0.0
      %2037 = vmatpush1.msra.mxu0 %v1998
      %2038 = vmatprep.subr.mxu0 0.0
      %2039 = vmatpush1.msra.mxu0 0.0
      %2040 = vmatprep.subr.mxu0 0.0
      %2041 = vmatpush1.msra.mxu0 0.0
      %2042 = vmatprep.subr.mxu0 0.0
      %2043 = vmatpush1.msra.mxu0 0.0
      %2044 = vmatprep.subr.mxu0 0.0
      %2045 = vmatpush1.msra.mxu0 0.0
      %2046 = vmatprep.subr.mxu0 0.0
      %2047 = vmatpush1.msra.mxu0 0.0
      %2048 = vmatprep.subr.mxu0 0.0
      %2049 = vmatpush1.msra.mxu0 0.0
      %2050 = vmatprep.subr.mxu0 0.0
      %2051 = vmatpush1.msra.mxu0 0.0
      %2052 = vmatprep.subr.mxu0 0.0
      %2053 = vmatpush1.msra.mxu0 0.0
      %2054 = vmatprep.subr.mxu0 0.0
      %2055 = vmatpush1.msra.mxu0 0.0
      %2056 = vmatprep.subr.mxu0 0.0
      %2057 = vmatpush1.msra.mxu0 0.0
      %2058 = vmatprep.subr.mxu0 0.0
      %2059 = vmatpush1.msra.mxu0 0.0
      %2060 = vmatprep.subr.mxu0 0.0
      %2061 = vmatpush1.msra.mxu0 0.0
      %2062 = vmatprep.subr.mxu0 0.0
      %2063 = vmatpush1.msra.mxu0 0.0
      %2064 = vmatprep.subr.mxu0 0.0
      %2065 = vmatpush1.msra.mxu0 0.0
      %2066 = vmatprep.subr.mxu0 0.0
      %2067 = vmatpush1.msra.mxu0 0.0
      %2068 = vmatprep.subr.mxu0 0.0
      %2069 = vmatpush1.msra.mxu0 0.0
      %2070 = vmatprep.mubr.f32.mxu0 0.0
      %2071 = vmatmul.mubr.f32.gmra.mrb[0].mxu0 %v1982
      %v2072 = vpop.f32.mrb[0].mxu0
      %v2073 = vadd.f32 %v2004, %v2072
      %v2074 = vpop.f32.mrb[0].mxu0
      %2075 = vdwg.mxu0
      %v2076 = vadd.f32 %v1897, %v2073
      %v2077 = vld [vmem:[%s16] sm:$0x1]
      %v2078 = vld [vmem:[%s17] sm:$0x1]
      %v2079 = vsel %vm670, %v2076, 0.0
      %2080 = vadd.xlane.f32.xlu0 %v2079
      %v2081 = vpop.xlane.xlu0 %2080
      %v2082 = vmul.f32 %v2081, %v1873
      %v2083 = vsub.f32 %v2076, %v2082
      %v2084 = vmul.f32 %v2083, %v2083
      %v2085 = vsel %vm670, %v2084, 0.0
      %2086 = vadd.xlane.f32.xlu0 %v2085
      %v2087 = vpop.xlane.xlu0 %2086
      %v2088 = vmul.f32 %v2087, %v1873
      %v2089 = vadd.f32 %v2088, 1e-05
      %v2090 = vrsqrt.pop %v2089
      %v2091 = vmul.f32 %v2083, %v2090
      %v2093 = vlaneseq
      %v2094 = vshrl.u32 %v2093, 7
      %v2095 = vsub.s32 0, %v2094
      %v2096 = vrot.slane %v2077, %v2095
      %v2098 = vmul.f32 %v2091, %v2096
      %v2100 = vlaneseq
      %v2101 = vshrl.u32 %v2100, 7
      %v2102 = vsub.s32 0, %v2101
      %v2103 = vrot.slane %v2078, %v2102
      %v2105 = vadd.f32 %v2098, %v2103
      %s2106 = scalar_lea.vmem %s2, 32
      %v2107 = vld [vmem:[%s2106] sm:$0xff]
      %v2108 = vld [vmem:[%s2106 + $0x8] sm:$0xff]
      %v2109 = vld [vmem:[%s2106 + $0x10] sm:$0xff]
      %v2110 = vld [vmem:[%s2106 + $0x18] sm:$0xff]
      %s2111 = scalar_lea.vmem %s4, 32
      %v2112 = vld [vmem:[%s2111] sm:$0xff]
      %v2113 = vld [vmem:[%s2111 + $0x8] sm:$0xff]
      %v2114 = vld [vmem:[%s2111 + $0x10] sm:$0xff]
      %v2115 = vld [vmem:[%s2111 + $0x18] sm:$0xff]
      %s2116 = scalar_lea.vmem %s6, 32
      %v2117 = vld [vmem:[%s2116] sm:$0xff]
      %v2118 = vld [vmem:[%s2116 + $0x8] sm:$0xff]
      %v2119 = vld [vmem:[%s2116 + $0x10] sm:$0xff]
      %v2120 = vld [vmem:[%s2116 + $0x18] sm:$0xff]
      %s2121 = scalar_lea.vmem %s8, 32
      %v2122 = vld [vmem:[%s2121] sm:$0xff]
      %v2123 = vld [vmem:[%s2121 + $0x8] sm:$0xff]
      %v2124 = vld [vmem:[%s2121 + $0x10] sm:$0xff]
      %v2125 = vld [vmem:[%s2121 + $0x18] sm:$0xff]
      %s2126 = scalar_lea.vmem %s3, 1
      %v2127 = vld [vmem:[%s2126] sm:$0x1]
      %s2128 = scalar_lea.vmem %s5, 1
      %v2129 = vld [vmem:[%s2128] sm:$0x1]
      %s2130 = scalar_lea.vmem %s7, 1
      %v2131 = vld [vmem:[%s2130] sm:$0x1]
      %s2132 = scalar_lea.vmem %s9, 1
      %v2133 = vld [vmem:[%s2132] sm:$0x1]
      %v2135 = vlaneseq
      %v2136 = vshrl.u32 %v2135, 7
      %v2137 = vsub.s32 0, %v2136
      %v2138 = vrot.slane %v2127, %v2137
      %v2141 = vsel %vm670, %v2105, 0
      %2143 = vmatprep.subr.mxu0 0.0
      %2144 = vmatpush1.msra.mxu0 %v2107
      %2145 = vmatprep.subr.mxu0 0.0
      %2146 = vmatpush1.msra.mxu0 %v2108
      %2147 = vmatprep.subr.mxu0 0.0
      %2148 = vmatpush1.msra.mxu0 %v2109
      %2149 = vmatprep.subr.mxu0 0.0
      %2150 = vmatpush1.msra.mxu0 %v2110
      %2151 = vmatprep.subr.mxu0 0.0
      %2152 = vmatpush1.msra.mxu0 0.0
      %2153 = vmatprep.subr.mxu0 0.0
      %2154 = vmatpush1.msra.mxu0 0.0
      %2155 = vmatprep.subr.mxu0 0.0
      %2156 = vmatpush1.msra.mxu0 0.0
      %2157 = vmatprep.subr.mxu0 0.0
      %2158 = vmatpush1.msra.mxu0 0.0
      %2159 = vmatprep.subr.mxu0 0.0
      %2160 = vmatpush1.msra.mxu0 0.0
      %2161 = vmatprep.subr.mxu0 0.0
      %2162 = vmatpush1.msra.mxu0 0.0
      %2163 = vmatprep.subr.mxu0 0.0
      %2164 = vmatpush1.msra.mxu0 0.0
      %2165 = vmatprep.subr.mxu0 0.0
      %2166 = vmatpush1.msra.mxu0 0.0
      %2167 = vmatprep.subr.mxu0 0.0
      %2168 = vmatpush1.msra.mxu0 0.0
      %2169 = vmatprep.subr.mxu0 0.0
      %2170 = vmatpush1.msra.mxu0 0.0
      %2171 = vmatprep.subr.mxu0 0.0
      %2172 = vmatpush1.msra.mxu0 0.0
      %2173 = vmatprep.subr.mxu0 0.0
      %2174 = vmatpush1.msra.mxu0 0.0
      %2175 = vmatprep.subr.mxu0 0.0
      %2176 = vmatpush1.msra.mxu0 0.0
      %2177 = vmatprep.subr.mxu0 0.0
      %2178 = vmatpush1.msra.mxu0 0.0
      %2179 = vmatprep.subr.mxu0 0.0
      %2180 = vmatpush1.msra.mxu0 0.0
      %2181 = vmatprep.subr.mxu0 0.0
      %2182 = vmatpush1.msra.mxu0 0.0
      %2183 = vmatprep.subr.mxu0 0.0
      %2184 = vmatpush1.msra.mxu0 0.0
      %2185 = vmatprep.subr.mxu0 0.0
      %2186 = vmatpush1.msra.mxu0 0.0
      %2187 = vmatprep.subr.mxu0 0.0
      %2188 = vmatpush1.msra.mxu0 0.0
      %2189 = vmatprep.subr.mxu0 0.0
      %2190 = vmatpush1.msra.mxu0 0.0
      %2191 = vmatprep.subr.mxu0 0.0
      %2192 = vmatpush1.msra.mxu0 0.0
      %2193 = vmatprep.subr.mxu0 0.0
      %2194 = vmatpush1.msra.mxu0 0.0
      %2195 = vmatprep.subr.mxu0 0.0
      %2196 = vmatpush1.msra.mxu0 0.0
      %2197 = vmatprep.subr.mxu0 0.0
      %2198 = vmatpush1.msra.mxu0 0.0
      %2199 = vmatprep.subr.mxu0 0.0
      %2200 = vmatpush1.msra.mxu0 0.0
      %2201 = vmatprep.subr.mxu0 0.0
      %2202 = vmatpush1.msra.mxu0 0.0
      %2203 = vmatprep.subr.mxu0 0.0
      %2204 = vmatpush1.msra.mxu0 0.0
      %2205 = vmatprep.subr.mxu0 0.0
      %2206 = vmatpush1.msra.mxu0 0.0
      %2207 = vmatprep.mubr.f32.mxu0 0.0
      %2208 = vmatmul.mubr.f32.gmra.mrb[0].mxu0 %v2141
      %v2209 = vpop.f32.mrb[0].mxu0
      %v2210 = vadd.f32 %v2138, %v2209
      %v2211 = vpop.f32.mrb[0].mxu0
      %2212 = vdwg.mxu0
      %v2214 = vlaneseq
      %v2215 = vshrl.u32 %v2214, 7
      %v2216 = vsub.s32 0, %v2215
      %v2217 = vrot.slane %v2129, %v2216
      %2219 = vmatprep.subr.mxu0 0.0
      %2220 = vmatpush1.msra.mxu0 %v2112
      %2221 = vmatprep.subr.mxu0 0.0
      %2222 = vmatpush1.msra.mxu0 %v2113
      %2223 = vmatprep.subr.mxu0 0.0
      %2224 = vmatpush1.msra.mxu0 %v2114
      %2225 = vmatprep.subr.mxu0 0.0
      %2226 = vmatpush1.msra.mxu0 %v2115
      %2227 = vmatprep.subr.mxu0 0.0
      %2228 = vmatpush1.msra.mxu0 0.0
      %2229 = vmatprep.subr.mxu0 0.0
      %2230 = vmatpush1.msra.mxu0 0.0
      %2231 = vmatprep.subr.mxu0 0.0
      %2232 = vmatpush1.msra.mxu0 0.0
      %2233 = vmatprep.subr.mxu0 0.0
      %2234 = vmatpush1.msra.mxu0 0.0
      %2235 = vmatprep.subr.mxu0 0.0
      %2236 = vmatpush1.msra.mxu0 0.0
      %2237 = vmatprep.subr.mxu0 0.0
      %2238 = vmatpush1.msra.mxu0 0.0
      %2239 = vmatprep.subr.mxu0 0.0
      %2240 = vmatpush1.msra.mxu0 0.0
      %2241 = vmatprep.subr.mxu0 0.0
      %2242 = vmatpush1.msra.mxu0 0.0
      %2243 = vmatprep.subr.mxu0 0.0
      %2244 = vmatpush1.msra.mxu0 0.0
      %2245 = vmatprep.subr.mxu0 0.0
      %2246 = vmatpush1.msra.mxu0 0.0
      %2247 = vmatprep.subr.mxu0 0.0
      %2248 = vmatpush1.msra.mxu0 0.0
      %2249 = vmatprep.subr.mxu0 0.0
      %2250 = vmatpush1.msra.mxu0 0.0
      %2251 = vmatprep.subr.mxu0 0.0
      %2252 = vmatpush1.msra.mxu0 0.0
      %2253 = vmatprep.subr.mxu0 0.0
      %2254 = vmatpush1.msra.mxu0 0.0
      %2255 = vmatprep.subr.mxu0 0.0
      %2256 = vmatpush1.msra.mxu0 0.0
      %2257 = vmatprep.subr.mxu0 0.0
      %2258 = vmatpush1.msra.mxu0 0.0
      %2259 = vmatprep.subr.mxu0 0.0
      %2260 = vmatpush1.msra.mxu0 0.0
      %2261 = vmatprep.subr.mxu0 0.0
      %2262 = vmatpush1.msra.mxu0 0.0
      %2263 = vmatprep.subr.mxu0 0.0
      %2264 = vmatpush1.msra.mxu0 0.0
      %2265 = vmatprep.subr.mxu0 0.0
      %2266 = vmatpush1.msra.mxu0 0.0
      %2267 = vmatprep.subr.mxu0 0.0
      %2268 = vmatpush1.msra.mxu0 0.0
      %2269 = vmatprep.subr.mxu0 0.0
      %2270 = vmatpush1.msra.mxu0 0.0
      %2271 = vmatprep.subr.mxu0 0.0
      %2272 = vmatpush1.msra.mxu0 0.0
      %2273 = vmatprep.subr.mxu0 0.0
      %2274 = vmatpush1.msra.mxu0 0.0
      %2275 = vmatprep.subr.mxu0 0.0
      %2276 = vmatpush1.msra.mxu0 0.0
      %2277 = vmatprep.subr.mxu0 0.0
      %2278 = vmatpush1.msra.mxu0 0.0
      %2279 = vmatprep.subr.mxu0 0.0
      %2280 = vmatpush1.msra.mxu0 0.0
      %2281 = vmatprep.subr.mxu0 0.0
      %2282 = vmatpush1.msra.mxu0 0.0
      %2283 = vmatprep.mubr.f32.mxu0 0.0
      %2284 = vmatmul.mubr.f32.gmra.mrb[0].mxu0 %v2141
      %v2285 = vpop.f32.mrb[0].mxu0
      %v2286 = vadd.f32 %v2217, %v2285
      %v2287 = vpop.f32.mrb[0].mxu0
      %2288 = vdwg.mxu0
      %v2290 = vlaneseq
      %v2291 = vshrl.u32 %v2290, 7
      %v2292 = vsub.s32 0, %v2291
      %v2293 = vrot.slane %v2131, %v2292
      %2295 = vmatprep.subr.mxu0 0.0
      %2296 = vmatpush1.msra.mxu0 %v2117
      %2297 = vmatprep.subr.mxu0 0.0
      %2298 = vmatpush1.msra.mxu0 %v2118
      %2299 = vmatprep.subr.mxu0 0.0
      %2300 = vmatpush1.msra.mxu0 %v2119
      %2301 = vmatprep.subr.mxu0 0.0
      %2302 = vmatpush1.msra.mxu0 %v2120
      %2303 = vmatprep.subr.mxu0 0.0
      %2304 = vmatpush1.msra.mxu0 0.0
      %2305 = vmatprep.subr.mxu0 0.0
      %2306 = vmatpush1.msra.mxu0 0.0
      %2307 = vmatprep.subr.mxu0 0.0
      %2308 = vmatpush1.msra.mxu0 0.0
      %2309 = vmatprep.subr.mxu0 0.0
      %2310 = vmatpush1.msra.mxu0 0.0
      %2311 = vmatprep.subr.mxu0 0.0
      %2312 = vmatpush1.msra.mxu0 0.0
      %2313 = vmatprep.subr.mxu0 0.0
      %2314 = vmatpush1.msra.mxu0 0.0
      %2315 = vmatprep.subr.mxu0 0.0
      %2316 = vmatpush1.msra.mxu0 0.0
      %2317 = vmatprep.subr.mxu0 0.0
      %2318 = vmatpush1.msra.mxu0 0.0
      %2319 = vmatprep.subr.mxu0 0.0
      %2320 = vmatpush1.msra.mxu0 0.0
      %2321 = vmatprep.subr.mxu0 0.0
      %2322 = vmatpush1.msra.mxu0 0.0
      %2323 = vmatprep.subr.mxu0 0.0
      %2324 = vmatpush1.msra.mxu0 0.0
      %2325 = vmatprep.subr.mxu0 0.0
      %2326 = vmatpush1.msra.mxu0 0.0
      %2327 = vmatprep.subr.mxu0 0.0
      %2328 = vmatpush1.msra.mxu0 0.0
      %2329 = vmatprep.subr.mxu0 0.0
      %2330 = vmatpush1.msra.mxu0 0.0
      %2331 = vmatprep.subr.mxu0 0.0
      %2332 = vmatpush1.msra.mxu0 0.0
      %2333 = vmatprep.subr.mxu0 0.0
      %2334 = vmatpush1.msra.mxu0 0.0
      %2335 = vmatprep.subr.mxu0 0.0
      %2336 = vmatpush1.msra.mxu0 0.0
      %2337 = vmatprep.subr.mxu0 0.0
      %2338 = vmatpush1.msra.mxu0 0.0
      %2339 = vmatprep.subr.mxu0 0.0
      %2340 = vmatpush1.msra.mxu0 0.0
      %2341 = vmatprep.subr.mxu0 0.0
      %2342 = vmatpush1.msra.mxu0 0.0
      %2343 = vmatprep.subr.mxu0 0.0
      %2344 = vmatpush1.msra.mxu0 0.0
      %2345 = vmatprep.subr.mxu0 0.0
      %2346 = vmatpush1.msra.mxu0 0.0
      %2347 = vmatprep.subr.mxu0 0.0
      %2348 = vmatpush1.msra.mxu0 0.0
      %2349 = vmatprep.subr.mxu0 0.0
      %2350 = vmatpush1.msra.mxu0 0.0
      %2351 = vmatprep.subr.mxu0 0.0
      %2352 = vmatpush1.msra.mxu0 0.0
      %2353 = vmatprep.subr.mxu0 0.0
      %2354 = vmatpush1.msra.mxu0 0.0
      %2355 = vmatprep.subr.mxu0 0.0
      %2356 = vmatpush1.msra.mxu0 0.0
      %2357 = vmatprep.subr.mxu0 0.0
      %2358 = vmatpush1.msra.mxu0 0.0
      %2359 = vmatprep.mubr.f32.mxu0 0.0
      %2360 = vmatmul.mubr.f32.gmra.mrb[0].mxu0 %v2141
      %v2361 = vpop.f32.mrb[0].mxu0
      %v2362 = vadd.f32 %v2293, %v2361
      %v2363 = vpop.f32.mrb[0].mxu0
      %2364 = vdwg.mxu0
      %v2366 = vsel %vm896, %v2210, 0
      %v2369 = vsel %vm896, %v2286, 0
      %2371 = vmatprep.subr.mxu0 0.0
      %2372 = vmatpush1.xpose.msra.mxu0 %v2369
      %2373 = vmatprep.subr.mxu0 0.0
      %2374 = vmatpush1.xpose.msra.mxu0 0.0
      %2375 = vmatprep.subr.mxu0 0.0
      %2376 = vmatpush1.xpose.msra.mxu0 0.0
      %2377 = vmatprep.subr.mxu0 0.0
      %2378 = vmatpush1.xpose.msra.mxu0 0.0
      %2379 = vmatprep.subr.mxu0 0.0
      %2380 = vmatpush1.xpose.msra.mxu0 0.0
      %2381 = vmatprep.subr.mxu0 0.0
      %2382 = vmatpush1.xpose.msra.mxu0 0.0
      %2383 = vmatprep.subr.mxu0 0.0
      %2384 = vmatpush1.xpose.msra.mxu0 0.0
      %2385 = vmatprep.subr.mxu0 0.0
      %2386 = vmatpush1.xpose.msra.mxu0 0.0
      %2387 = vmatprep.subr.mxu0 0.0
      %2388 = vmatpush1.xpose.msra.mxu0 0.0
      %2389 = vmatprep.subr.mxu0 0.0
      %2390 = vmatpush1.xpose.msra.mxu0 0.0
      %2391 = vmatprep.subr.mxu0 0.0
      %2392 = vmatpush1.xpose.msra.mxu0 0.0
      %2393 = vmatprep.subr.mxu0 0.0
      %2394 = vmatpush1.xpose.msra.mxu0 0.0
      %2395 = vmatprep.subr.mxu0 0.0
      %2396 = vmatpush1.xpose.msra.mxu0 0.0
      %2397 = vmatprep.subr.mxu0 0.0
      %2398 = vmatpush1.xpose.msra.mxu0 0.0
      %2399 = vmatprep.subr.mxu0 0.0
      %2400 = vmatpush1.xpose.msra.mxu0 0.0
      %2401 = vmatprep.subr.mxu0 0.0
      %2402 = vmatpush1.xpose.msra.mxu0 0.0
      %2403 = vmatprep.subr.mxu0 0.0
      %2404 = vmatpush1.xpose.msra.mxu0 0.0
      %2405 = vmatprep.subr.mxu0 0.0
      %2406 = vmatpush1.xpose.msra.mxu0 0.0
      %2407 = vmatprep.subr.mxu0 0.0
      %2408 = vmatpush1.xpose.msra.mxu0 0.0
      %2409 = vmatprep.subr.mxu0 0.0
      %2410 = vmatpush1.xpose.msra.mxu0 0.0
      %2411 = vmatprep.subr.mxu0 0.0
      %2412 = vmatpush1.xpose.msra.mxu0 0.0
      %2413 = vmatprep.subr.mxu0 0.0
      %2414 = vmatpush1.xpose.msra.mxu0 0.0
      %2415 = vmatprep.subr.mxu0 0.0
      %2416 = vmatpush1.xpose.msra.mxu0 0.0
      %2417 = vmatprep.subr.mxu0 0.0
      %2418 = vmatpush1.xpose.msra.mxu0 0.0
      %2419 = vmatprep.subr.mxu0 0.0
      %2420 = vmatpush1.xpose.msra.mxu0 0.0
      %2421 = vmatprep.subr.mxu0 0.0
      %2422 = vmatpush1.xpose.msra.mxu0 0.0
      %2423 = vmatprep.subr.mxu0 0.0
      %2424 = vmatpush1.xpose.msra.mxu0 0.0
      %2425 = vmatprep.subr.mxu0 0.0
      %2426 = vmatpush1.xpose.msra.mxu0 0.0
      %2427 = vmatprep.subr.mxu0 0.0
      %2428 = vmatpush1.xpose.msra.mxu0 0.0
      %2429 = vmatprep.subr.mxu0 0.0
      %2430 = vmatpush1.xpose.msra.mxu0 0.0
      %2431 = vmatprep.subr.mxu0 0.0
      %2432 = vmatpush1.xpose.msra.mxu0 0.0
      %2433 = vmatprep.subr.mxu0 0.0
      %2434 = vmatpush1.xpose.msra.mxu0 0.0
      %2435 = vmatprep.mubr.f32.mxu0 0.0
      %2436 = vmatmul.mubr.f32.gmra.mrb[0].mxu0 %v2366
      %v2437 = vpop.f32.mrb[0].mxu0
      %v2438 = vadd.f32 0.0, %v2437
      %v2439 = vpop.f32.mrb[0].mxu0
      %2440 = vdwg.mxu0
      %v2441 = vmul.f32 %v2438, 0.35355338
      %v2442 = vadd.f32 %v2441, %v977
      %v2443 = vsel %vm896, %v2442, -inf
      %2444 = vmax.xlane.f32.xlu0 %v2443
      %v2445 = vpop.xlane.xlu0 %2444
      %v2446 = vsub.f32 %v2442, %v2445
      %v2447 = vmul.f32 %v2446, 1.442695
      %v2448 = vpow.pop %v2447
      %v2449 = vsel %vm896, %v2448, 0.0
      %2450 = vadd.xlane.f32.xlu0 %v2449
      %v2451 = vpop.xlane.xlu0 %2450
      %v2452 = vrcp.pop %v2451
      %v2453 = vmul.f32 %v2448, %v2452
      %v2455 = vsel %vm896, %v2453, 0
      %2457 = vmatprep.subr.mxu0 0.0
      %2458 = vmatpush1.msra.mxu0 %v2362
      %2459 = vmatprep.subr.mxu0 0.0
      %2460 = vmatpush1.msra.mxu0 0.0
      %2461 = vmatprep.subr.mxu0 0.0
      %2462 = vmatpush1.msra.mxu0 0.0
      %2463 = vmatprep.subr.mxu0 0.0
      %2464 = vmatpush1.msra.mxu0 0.0
      %2465 = vmatprep.subr.mxu0 0.0
      %2466 = vmatpush1.msra.mxu0 0.0
      %2467 = vmatprep.subr.mxu0 0.0
      %2468 = vmatpush1.msra.mxu0 0.0
      %2469 = vmatprep.subr.mxu0 0.0
      %2470 = vmatpush1.msra.mxu0 0.0
      %2471 = vmatprep.subr.mxu0 0.0
      %2472 = vmatpush1.msra.mxu0 0.0
      %2473 = vmatprep.subr.mxu0 0.0
      %2474 = vmatpush1.msra.mxu0 0.0
      %2475 = vmatprep.subr.mxu0 0.0
      %2476 = vmatpush1.msra.mxu0 0.0
      %2477 = vmatprep.subr.mxu0 0.0
      %2478 = vmatpush1.msra.mxu0 0.0
      %2479 = vmatprep.subr.mxu0 0.0
      %2480 = vmatpush1.msra.mxu0 0.0
      %2481 = vmatprep.subr.mxu0 0.0
      %2482 = vmatpush1.msra.mxu0 0.0
      %2483 = vmatprep.subr.mxu0 0.0
      %2484 = vmatpush1.msra.mxu0 0.0
      %2485 = vmatprep.subr.mxu0 0.0
      %2486 = vmatpush1.msra.mxu0 0.0
      %2487 = vmatprep.subr.mxu0 0.0
      %2488 = vmatpush1.msra.mxu0 0.0
      %2489 = vmatprep.subr.mxu0 0.0
      %2490 = vmatpush1.msra.mxu0 0.0
      %2491 = vmatprep.subr.mxu0 0.0
      %2492 = vmatpush1.msra.mxu0 0.0
      %2493 = vmatprep.subr.mxu0 0.0
      %2494 = vmatpush1.msra.mxu0 0.0
      %2495 = vmatprep.subr.mxu0 0.0
      %2496 = vmatpush1.msra.mxu0 0.0
      %2497 = vmatprep.subr.mxu0 0.0
      %2498 = vmatpush1.msra.mxu0 0.0
      %2499 = vmatprep.subr.mxu0 0.0
      %2500 = vmatpush1.msra.mxu0 0.0
      %2501 = vmatprep.subr.mxu0 0.0
      %2502 = vmatpush1.msra.mxu0 0.0
      %2503 = vmatprep.subr.mxu0 0.0
      %2504 = vmatpush1.msra.mxu0 0.0
      %2505 = vmatprep.subr.mxu0 0.0
      %2506 = vmatpush1.msra.mxu0 0.0
      %2507 = vmatprep.subr.mxu0 0.0
      %2508 = vmatpush1.msra.mxu0 0.0
      %2509 = vmatprep.subr.mxu0 0.0
      %2510 = vmatpush1.msra.mxu0 0.0
      %2511 = vmatprep.subr.mxu0 0.0
      %2512 = vmatpush1.msra.mxu0 0.0
      %2513 = vmatprep.subr.mxu0 0.0
      %2514 = vmatpush1.msra.mxu0 0.0
      %2515 = vmatprep.subr.mxu0 0.0
      %2516 = vmatpush1.msra.mxu0 0.0
      %2517 = vmatprep.subr.mxu0 0.0
      %2518 = vmatpush1.msra.mxu0 0.0
      %2519 = vmatprep.subr.mxu0 0.0
      %2520 = vmatpush1.msra.mxu0 0.0
      %2521 = vmatprep.mubr.f32.mxu0 0.0
      %2522 = vmatmul.mubr.f32.gmra.mrb[0].mxu0 %v2455
      %v2523 = vpop.f32.mrb[0].mxu0
      %v2524 = vadd.f32 0.0, %v2523
      %v2525 = vpop.f32.mrb[0].mxu0
      %2526 = vdwg.mxu0
      %2527 = vrot.lane.b32.xlu0 %v2210, 120
      %v2528 = vpop.permute.xlu0 %2527
      %2529 = vrot.lane.b32.xlu0 %v2286, 120
      %v2530 = vpop.permute.xlu0 %2529
      %v2531 = vsel %vm896, %v2528, 0
      %v2533 = vsel %vm896, %v2530, 0
      %2535 = vmatprep.subr.mxu0 0.0
      %2536 = vmatpush1.xpose.msra.mxu0 %v2533
      %2537 = vmatprep.subr.mxu0 0.0
      %2538 = vmatpush1.xpose.msra.mxu0 0.0
      %2539 = vmatprep.subr.mxu0 0.0
      %2540 = vmatpush1.xpose.msra.mxu0 0.0
      %2541 = vmatprep.subr.mxu0 0.0
      %2542 = vmatpush1.xpose.msra.mxu0 0.0
      %2543 = vmatprep.subr.mxu0 0.0
      %2544 = vmatpush1.xpose.msra.mxu0 0.0
      %2545 = vmatprep.subr.mxu0 0.0
      %2546 = vmatpush1.xpose.msra.mxu0 0.0
      %2547 = vmatprep.subr.mxu0 0.0
      %2548 = vmatpush1.xpose.msra.mxu0 0.0
      %2549 = vmatprep.subr.mxu0 0.0
      %2550 = vmatpush1.xpose.msra.mxu0 0.0
      %2551 = vmatprep.subr.mxu0 0.0
      %2552 = vmatpush1.xpose.msra.mxu0 0.0
      %2553 = vmatprep.subr.mxu0 0.0
      %2554 = vmatpush1.xpose.msra.mxu0 0.0
      %2555 = vmatprep.subr.mxu0 0.0
      %2556 = vmatpush1.xpose.msra.mxu0 0.0
      %2557 = vmatprep.subr.mxu0 0.0
      %2558 = vmatpush1.xpose.msra.mxu0 0.0
      %2559 = vmatprep.subr.mxu0 0.0
      %2560 = vmatpush1.xpose.msra.mxu0 0.0
      %2561 = vmatprep.subr.mxu0 0.0
      %2562 = vmatpush1.xpose.msra.mxu0 0.0
      %2563 = vmatprep.subr.mxu0 0.0
      %2564 = vmatpush1.xpose.msra.mxu0 0.0
      %2565 = vmatprep.subr.mxu0 0.0
      %2566 = vmatpush1.xpose.msra.mxu0 0.0
      %2567 = vmatprep.subr.mxu0 0.0
      %2568 = vmatpush1.xpose.msra.mxu0 0.0
      %2569 = vmatprep.subr.mxu0 0.0
      %2570 = vmatpush1.xpose.msra.mxu0 0.0
      %2571 = vmatprep.subr.mxu0 0.0
      %2572 = vmatpush1.xpose.msra.mxu0 0.0
      %2573 = vmatprep.subr.mxu0 0.0
      %2574 = vmatpush1.xpose.msra.mxu0 0.0
      %2575 = vmatprep.subr.mxu0 0.0
      %2576 = vmatpush1.xpose.msra.mxu0 0.0
      %2577 = vmatprep.subr.mxu0 0.0
      %2578 = vmatpush1.xpose.msra.mxu0 0.0
      %2579 = vmatprep.subr.mxu0 0.0
      %2580 = vmatpush1.xpose.msra.mxu0 0.0
      %2581 = vmatprep.subr.mxu0 0.0
      %2582 = vmatpush1.xpose.msra.mxu0 0.0
      %2583 = vmatprep.subr.mxu0 0.0
      %2584 = vmatpush1.xpose.msra.mxu0 0.0
      %2585 = vmatprep.subr.mxu0 0.0
      %2586 = vmatpush1.xpose.msra.mxu0 0.0
      %2587 = vmatprep.subr.mxu0 0.0
      %2588 = vmatpush1.xpose.msra.mxu0 0.0
      %2589 = vmatprep.subr.mxu0 0.0
      %2590 = vmatpush1.xpose.msra.mxu0 0.0
      %2591 = vmatprep.subr.mxu0 0.0
      %2592 = vmatpush1.xpose.msra.mxu0 0.0
      %2593 = vmatprep.subr.mxu0 0.0
      %2594 = vmatpush1.xpose.msra.mxu0 0.0
      %2595 = vmatprep.subr.mxu0 0.0
      %2596 = vmatpush1.xpose.msra.mxu0 0.0
      %2597 = vmatprep.subr.mxu0 0.0
      %2598 = vmatpush1.xpose.msra.mxu0 0.0
      %2599 = vmatprep.mubr.f32.mxu0 0.0
      %2600 = vmatmul.mubr.f32.gmra.mrb[0].mxu0 %v2531
      %v2601 = vpop.f32.mrb[0].mxu0
      %v2602 = vadd.f32 0.0, %v2601
      %v2603 = vpop.f32.mrb[0].mxu0
      %2604 = vdwg.mxu0
      %v2605 = vmul.f32 %v2602, 0.35355338
      %v2606 = vadd.f32 %v2605, %v977
      %v2607 = vsel %vm896, %v2606, -inf
      %2608 = vmax.xlane.f32.xlu0 %v2607
      %v2609 = vpop.xlane.xlu0 %2608
      %v2610 = vsub.f32 %v2606, %v2609
      %v2611 = vmul.f32 %v2610, 1.442695
      %v2612 = vpow.pop %v2611
      %v2613 = vsel %vm896, %v2612, 0.0
      %2614 = vadd.xlane.f32.xlu0 %v2613
      %v2615 = vpop.xlane.xlu0 %2614
      %v2616 = vrcp.pop %v2615
      %v2617 = vmul.f32 %v2612, %v2616
      %2619 = vrot.lane.b32.xlu0 %v2362, 120
      %v2620 = vpop.permute.xlu0 %2619
      %v2623 = vsel %vm896, %v2617, 0
      %2625 = vmatprep.subr.mxu0 0.0
      %2626 = vmatpush1.msra.mxu0 %v2620
      %2627 = vmatprep.subr.mxu0 0.0
      %2628 = vmatpush1.msra.mxu0 0.0
      %2629 = vmatprep.subr.mxu0 0.0
      %2630 = vmatpush1.msra.mxu0 0.0
      %2631 = vmatprep.subr.mxu0 0.0
      %2632 = vmatpush1.msra.mxu0 0.0
      %2633 = vmatprep.subr.mxu0 0.0
      %2634 = vmatpush1.msra.mxu0 0.0
      %2635 = vmatprep.subr.mxu0 0.0
      %2636 = vmatpush1.msra.mxu0 0.0
      %2637 = vmatprep.subr.mxu0 0.0
      %2638 = vmatpush1.msra.mxu0 0.0
      %2639 = vmatprep.subr.mxu0 0.0
      %2640 = vmatpush1.msra.mxu0 0.0
      %2641 = vmatprep.subr.mxu0 0.0
      %2642 = vmatpush1.msra.mxu0 0.0
      %2643 = vmatprep.subr.mxu0 0.0
      %2644 = vmatpush1.msra.mxu0 0.0
      %2645 = vmatprep.subr.mxu0 0.0
      %2646 = vmatpush1.msra.mxu0 0.0
      %2647 = vmatprep.subr.mxu0 0.0
      %2648 = vmatpush1.msra.mxu0 0.0
      %2649 = vmatprep.subr.mxu0 0.0
      %2650 = vmatpush1.msra.mxu0 0.0
      %2651 = vmatprep.subr.mxu0 0.0
      %2652 = vmatpush1.msra.mxu0 0.0
      %2653 = vmatprep.subr.mxu0 0.0
      %2654 = vmatpush1.msra.mxu0 0.0
      %2655 = vmatprep.subr.mxu0 0.0
      %2656 = vmatpush1.msra.mxu0 0.0
      %2657 = vmatprep.subr.mxu0 0.0
      %2658 = vmatpush1.msra.mxu0 0.0
      %2659 = vmatprep.subr.mxu0 0.0
      %2660 = vmatpush1.msra.mxu0 0.0
      %2661 = vmatprep.subr.mxu0 0.0
      %2662 = vmatpush1.msra.mxu0 0.0
      %2663 = vmatprep.subr.mxu0 0.0
      %2664 = vmatpush1.msra.mxu0 0.0
      %2665 = vmatprep.subr.mxu0 0.0
      %2666 = vmatpush1.msra.mxu0 0.0
      %2667 = vmatprep.subr.mxu0 0.0
      %2668 = vmatpush1.msra.mxu0 0.0
      %2669 = vmatprep.subr.mxu0 0.0
      %2670 = vmatpush1.msra.mxu0 0.0
      %2671 = vmatprep.subr.mxu0 0.0
      %2672 = vmatpush1.msra.mxu0 0.0
      %2673 = vmatprep.subr.mxu0 0.0
      %2674 = vmatpush1.msra.mxu0 0.0
      %2675 = vmatprep.subr.mxu0 0.0
      %2676 = vmatpush1.msra.mxu0 0.0
      %2677 = vmatprep.subr.mxu0 0.0
      %2678 = vmatpush1.msra.mxu0 0.0
      %2679 = vmatprep.subr.mxu0 0.0
      %2680 = vmatpush1.msra.mxu0 0.0
      %2681 = vmatprep.subr.mxu0 0.0
      %2682 = vmatpush1.msra.mxu0 0.0
      %2683 = vmatprep.subr.mxu0 0.0
      %2684 = vmatpush1.msra.mxu0 0.0
      %2685 = vmatprep.subr.mxu0 0.0
      %2686 = vmatpush1.msra.mxu0 0.0
      %2687 = vmatprep.subr.mxu0 0.0
      %2688 = vmatpush1.msra.mxu0 0.0
      %2689 = vmatprep.mubr.f32.mxu0 0.0
      %2690 = vmatmul.mubr.f32.gmra.mrb[0].mxu0 %v2623
      %v2691 = vpop.f32.mrb[0].mxu0
      %v2692 = vadd.f32 0.0, %v2691
      %v2693 = vpop.f32.mrb[0].mxu0
      %2694 = vdwg.mxu0
      %v2696 = vsel %vm896, %v2692, 0
      %2698 = vmatprep.subr.mxu0 0.0
      %2699 = vmatpush1.msra.mxu0 %v2123
      %2700 = vmatprep.subr.mxu0 0.0
      %2701 = vmatpush1.msra.mxu0 0.0
      %2702 = vmatprep.subr.mxu0 0.0
      %2703 = vmatpush1.msra.mxu0 0.0
      %2704 = vmatprep.subr.mxu0 0.0
      %2705 = vmatpush1.msra.mxu0 0.0
      %2706 = vmatprep.subr.mxu0 0.0
      %2707 = vmatpush1.msra.mxu0 0.0
      %2708 = vmatprep.subr.mxu0 0.0
      %2709 = vmatpush1.msra.mxu0 0.0
      %2710 = vmatprep.subr.mxu0 0.0
      %2711 = vmatpush1.msra.mxu0 0.0
      %2712 = vmatprep.subr.mxu0 0.0
      %2713 = vmatpush1.msra.mxu0 0.0
      %2714 = vmatprep.subr.mxu0 0.0
      %2715 = vmatpush1.msra.mxu0 0.0
      %2716 = vmatprep.subr.mxu0 0.0
      %2717 = vmatpush1.msra.mxu0 0.0
      %2718 = vmatprep.subr.mxu0 0.0
      %2719 = vmatpush1.msra.mxu0 0.0
      %2720 = vmatprep.subr.mxu0 0.0
      %2721 = vmatpush1.msra.mxu0 0.0
      %2722 = vmatprep.subr.mxu0 0.0
      %2723 = vmatpush1.msra.mxu0 0.0
      %2724 = vmatprep.subr.mxu0 0.0
      %2725 = vmatpush1.msra.mxu0 0.0
      %2726 = vmatprep.subr.mxu0 0.0
      %2727 = vmatpush1.msra.mxu0 0.0
      %2728 = vmatprep.subr.mxu0 0.0
      %2729 = vmatpush1.msra.mxu0 0.0
      %2730 = vmatprep.subr.mxu0 0.0
      %2731 = vmatpush1.msra.mxu0 0.0
      %2732 = vmatprep.subr.mxu0 0.0
      %2733 = vmatpush1.msra.mxu0 0.0
      %2734 = vmatprep.subr.mxu0 0.0
      %2735 = vmatpush1.msra.mxu0 0.0
      %2736 = vmatprep.subr.mxu0 0.0
      %2737 = vmatpush1.msra.mxu0 0.0
      %2738 = vmatprep.subr.mxu0 0.0
      %2739 = vmatpush1.msra.mxu0 0.0
      %2740 = vmatprep.subr.mxu0 0.0
      %2741 = vmatpush1.msra.mxu0 0.0
      %2742 = vmatprep.subr.mxu0 0.0
      %2743 = vmatpush1.msra.mxu0 0.0
      %2744 = vmatprep.subr.mxu0 0.0
      %2745 = vmatpush1.msra.mxu0 0.0
      %2746 = vmatprep.subr.mxu0 0.0
      %2747 = vmatpush1.msra.mxu0 0.0
      %2748 = vmatprep.subr.mxu0 0.0
      %2749 = vmatpush1.msra.mxu0 0.0
      %2750 = vmatprep.subr.mxu0 0.0
      %2751 = vmatpush1.msra.mxu0 0.0
      %2752 = vmatprep.subr.mxu0 0.0
      %2753 = vmatpush1.msra.mxu0 0.0
      %2754 = vmatprep.subr.mxu0 0.0
      %2755 = vmatpush1.msra.mxu0 0.0
      %2756 = vmatprep.subr.mxu0 0.0
      %2757 = vmatpush1.msra.mxu0 0.0
      %2758 = vmatprep.subr.mxu0 0.0
      %2759 = vmatpush1.msra.mxu0 0.0
      %2760 = vmatprep.subr.mxu0 0.0
      %2761 = vmatpush1.msra.mxu0 0.0
      %2762 = vmatprep.mubr.f32.mxu0 0.0
      %2763 = vmatmul.mubr.f32.gmra.mrb[0].mxu0 %v2696
      %v2764 = vpop.f32.mrb[0].mxu0
      %v2765 = vadd.f32 0.0, %v2764
      %v2766 = vpop.f32.mrb[0].mxu0
      %2767 = vdwg.mxu0
      %v2769 = vsel %vm896, %v2524, 0
      %2771 = vmatprep.subr.mxu0 0.0
      %2772 = vmatpush1.msra.mxu0 %v2122
      %2773 = vmatprep.subr.mxu0 0.0
      %2774 = vmatpush1.msra.mxu0 0.0
      %2775 = vmatprep.subr.mxu0 0.0
      %2776 = vmatpush1.msra.mxu0 0.0
      %2777 = vmatprep.subr.mxu0 0.0
      %2778 = vmatpush1.msra.mxu0 0.0
      %2779 = vmatprep.subr.mxu0 0.0
      %2780 = vmatpush1.msra.mxu0 0.0
      %2781 = vmatprep.subr.mxu0 0.0
      %2782 = vmatpush1.msra.mxu0 0.0
      %2783 = vmatprep.subr.mxu0 0.0
      %2784 = vmatpush1.msra.mxu0 0.0
      %2785 = vmatprep.subr.mxu0 0.0
      %2786 = vmatpush1.msra.mxu0 0.0
      %2787 = vmatprep.subr.mxu0 0.0
      %2788 = vmatpush1.msra.mxu0 0.0
      %2789 = vmatprep.subr.mxu0 0.0
      %2790 = vmatpush1.msra.mxu0 0.0
      %2791 = vmatprep.subr.mxu0 0.0
      %2792 = vmatpush1.msra.mxu0 0.0
      %2793 = vmatprep.subr.mxu0 0.0
      %2794 = vmatpush1.msra.mxu0 0.0
      %2795 = vmatprep.subr.mxu0 0.0
      %2796 = vmatpush1.msra.mxu0 0.0
      %2797 = vmatprep.subr.mxu0 0.0
      %2798 = vmatpush1.msra.mxu0 0.0
      %2799 = vmatprep.subr.mxu0 0.0
      %2800 = vmatpush1.msra.mxu0 0.0
      %2801 = vmatprep.subr.mxu0 0.0
      %2802 = vmatpush1.msra.mxu0 0.0
      %2803 = vmatprep.subr.mxu0 0.0
      %2804 = vmatpush1.msra.mxu0 0.0
      %2805 = vmatprep.subr.mxu0 0.0
      %2806 = vmatpush1.msra.mxu0 0.0
      %2807 = vmatprep.subr.mxu0 0.0
      %2808 = vmatpush1.msra.mxu0 0.0
      %2809 = vmatprep.subr.mxu0 0.0
      %2810 = vmatpush1.msra.mxu0 0.0
      %2811 = vmatprep.subr.mxu0 0.0
      %2812 = vmatpush1.msra.mxu0 0.0
      %2813 = vmatprep.subr.mxu0 0.0
      %2814 = vmatpush1.msra.mxu0 0.0
      %2815 = vmatprep.subr.mxu0 0.0
      %2816 = vmatpush1.msra.mxu0 0.0
      %2817 = vmatprep.subr.mxu0 0.0
      %2818 = vmatpush1.msra.mxu0 0.0
      %2819 = vmatprep.subr.mxu0 0.0
      %2820 = vmatpush1.msra.mxu0 0.0
      %2821 = vmatprep.subr.mxu0 0.0
      %2822 = vmatpush1.msra.mxu0 0.0
      %2823 = vmatprep.subr.mxu0 0.0
      %2824 = vmatpush1.msra.mxu0 0.0
      %2825 = vmatprep.subr.mxu0 0.0
      %2826 = vmatpush1.msra.mxu0 0.0
      %2827 = vmatprep.subr.mxu0 0.0
      %2828 = vmatpush1.msra.mxu0 0.0
      %2829 = vmatprep.subr.mxu0 0.0
      %2830 = vmatpush1.msra.mxu0 0.0
      %2831 = vmatprep.subr.mxu0 0.0
      %2832 = vmatpush1.msra.mxu0 0.0
      %2833 = vmatprep.subr.mxu0 0.0
      %2834 = vmatpush1.msra.mxu0 0.0
      %2835 = vmatprep.mubr.f32.mxu0 0.0
      %2836 = vmatmul.mubr.f32.gmra.mrb[0].mxu0 %v2769
      %v2837 = vpop.f32.mrb[0].mxu0
      %v2838 = vadd.f32 %v2765, %v2837
      %v2839 = vpop.f32.mrb[0].mxu0
      %2840 = vdwg.mxu0
      %2841 = vrot.lane.b32.xlu0 %v2210, 112
      %v2842 = vpop.permute.xlu0 %2841
      %2843 = vrot.lane.b32.xlu0 %v2286, 112
      %v2844 = vpop.permute.xlu0 %2843
      %v2845 = vsel %vm896, %v2842, 0
      %v2847 = vsel %vm896, %v2844, 0
      %2849 = vmatprep.subr.mxu0 0.0
      %2850 = vmatpush1.xpose.msra.mxu0 %v2847
      %2851 = vmatprep.subr.mxu0 0.0
      %2852 = vmatpush1.xpose.msra.mxu0 0.0
      %2853 = vmatprep.subr.mxu0 0.0
      %2854 = vmatpush1.xpose.msra.mxu0 0.0
      %2855 = vmatprep.subr.mxu0 0.0
      %2856 = vmatpush1.xpose.msra.mxu0 0.0
      %2857 = vmatprep.subr.mxu0 0.0
      %2858 = vmatpush1.xpose.msra.mxu0 0.0
      %2859 = vmatprep.subr.mxu0 0.0
      %2860 = vmatpush1.xpose.msra.mxu0 0.0
      %2861 = vmatprep.subr.mxu0 0.0
      %2862 = vmatpush1.xpose.msra.mxu0 0.0
      %2863 = vmatprep.subr.mxu0 0.0
      %2864 = vmatpush1.xpose.msra.mxu0 0.0
      %2865 = vmatprep.subr.mxu0 0.0
      %2866 = vmatpush1.xpose.msra.mxu0 0.0
      %2867 = vmatprep.subr.mxu0 0.0
      %2868 = vmatpush1.xpose.msra.mxu0 0.0
      %2869 = vmatprep.subr.mxu0 0.0
      %2870 = vmatpush1.xpose.msra.mxu0 0.0
      %2871 = vmatprep.subr.mxu0 0.0
      %2872 = vmatpush1.xpose.msra.mxu0 0.0
      %2873 = vmatprep.subr.mxu0 0.0
      %2874 = vmatpush1.xpose.msra.mxu0 0.0
      %2875 = vmatprep.subr.mxu0 0.0
      %2876 = vmatpush1.xpose.msra.mxu0 0.0
      %2877 = vmatprep.subr.mxu0 0.0
      %2878 = vmatpush1.xpose.msra.mxu0 0.0
      %2879 = vmatprep.subr.mxu0 0.0
      %2880 = vmatpush1.xpose.msra.mxu0 0.0
      %2881 = vmatprep.subr.mxu0 0.0
      %2882 = vmatpush1.xpose.msra.mxu0 0.0
      %2883 = vmatprep.subr.mxu0 0.0
      %2884 = vmatpush1.xpose.msra.mxu0 0.0
      %2885 = vmatprep.subr.mxu0 0.0
      %2886 = vmatpush1.xpose.msra.mxu0 0.0
      %2887 = vmatprep.subr.mxu0 0.0
      %2888 = vmatpush1.xpose.msra.mxu0 0.0
      %2889 = vmatprep.subr.mxu0 0.0
      %2890 = vmatpush1.xpose.msra.mxu0 0.0
      %2891 = vmatprep.subr.mxu0 0.0
      %2892 = vmatpush1.xpose.msra.mxu0 0.0
      %2893 = vmatprep.subr.mxu0 0.0
      %2894 = vmatpush1.xpose.msra.mxu0 0.0
      %2895 = vmatprep.subr.mxu0 0.0
      %2896 = vmatpush1.xpose.msra.mxu0 0.0
      %2897 = vmatprep.subr.mxu0 0.0
      %2898 = vmatpush1.xpose.msra.mxu0 0.0
      %2899 = vmatprep.subr.mxu0 0.0
      %2900 = vmatpush1.xpose.msra.mxu0 0.0
      %2901 = vmatprep.subr.mxu0 0.0
      %2902 = vmatpush1.xpose.msra.mxu0 0.0
      %2903 = vmatprep.subr.mxu0 0.0
      %2904 = vmatpush1.xpose.msra.mxu0 0.0
      %2905 = vmatprep.subr.mxu0 0.0
      %2906 = vmatpush1.xpose.msra.mxu0 0.0
      %2907 = vmatprep.subr.mxu0 0.0
      %2908 = vmatpush1.xpose.msra.mxu0 0.0
      %2909 = vmatprep.subr.mxu0 0.0
      %2910 = vmatpush1.xpose.msra.mxu0 0.0
      %2911 = vmatprep.subr.mxu0 0.0
      %2912 = vmatpush1.xpose.msra.mxu0 0.0
      %2913 = vmatprep.mubr.f32.mxu0 0.0
      %2914 = vmatmul.mubr.f32.gmra.mrb[0].mxu0 %v2845
      %v2915 = vpop.f32.mrb[0].mxu0
      %v2916 = vadd.f32 0.0, %v2915
      %v2917 = vpop.f32.mrb[0].mxu0
      %2918 = vdwg.mxu0
      %v2919 = vmul.f32 %v2916, 0.35355338
      %v2920 = vadd.f32 %v2919, %v977
      %v2921 = vsel %vm896, %v2920, -inf
      %2922 = vmax.xlane.f32.xlu0 %v2921
      %v2923 = vpop.xlane.xlu0 %2922
      %v2924 = vsub.f32 %v2920, %v2923
      %v2925 = vmul.f32 %v2924, 1.442695
      %v2926 = vpow.pop %v2925
      %v2927 = vsel %vm896, %v2926, 0.0
      %2928 = vadd.xlane.f32.xlu0 %v2927
      %v2929 = vpop.xlane.xlu0 %2928
      %v2930 = vrcp.pop %v2929
      %v2931 = vmul.f32 %v2926, %v2930
      %2932 = vrot.lane.b32.xlu0 %v2362, 112
      %v2933 = vpop.permute.xlu0 %2932
      %v2936 = vsel %vm896, %v2931, 0
      %2938 = vmatprep.subr.mxu0 0.0
      %2939 = vmatpush1.msra.mxu0 %v2933
      %2940 = vmatprep.subr.mxu0 0.0
      %2941 = vmatpush1.msra.mxu0 0.0
      %2942 = vmatprep.subr.mxu0 0.0
      %2943 = vmatpush1.msra.mxu0 0.0
      %2944 = vmatprep.subr.mxu0 0.0
      %2945 = vmatpush1.msra.mxu0 0.0
      %2946 = vmatprep.subr.mxu0 0.0
      %2947 = vmatpush1.msra.mxu0 0.0
      %2948 = vmatprep.subr.mxu0 0.0
      %2949 = vmatpush1.msra.mxu0 0.0
      %2950 = vmatprep.subr.mxu0 0.0
      %2951 = vmatpush1.msra.mxu0 0.0
      %2952 = vmatprep.subr.mxu0 0.0
      %2953 = vmatpush1.msra.mxu0 0.0
      %2954 = vmatprep.subr.mxu0 0.0
      %2955 = vmatpush1.msra.mxu0 0.0
      %2956 = vmatprep.subr.mxu0 0.0
      %2957 = vmatpush1.msra.mxu0 0.0
      %2958 = vmatprep.subr.mxu0 0.0
      %2959 = vmatpush1.msra.mxu0 0.0
      %2960 = vmatprep.subr.mxu0 0.0
      %2961 = vmatpush1.msra.mxu0 0.0
      %2962 = vmatprep.subr.mxu0 0.0
      %2963 = vmatpush1.msra.mxu0 0.0
      %2964 = vmatprep.subr.mxu0 0.0
      %2965 = vmatpush1.msra.mxu0 0.0
      %2966 = vmatprep.subr.mxu0 0.0
      %2967 = vmatpush1.msra.mxu0 0.0
      %2968 = vmatprep.subr.mxu0 0.0
      %2969 = vmatpush1.msra.mxu0 0.0
      %2970 = vmatprep.subr.mxu0 0.0
      %2971 = vmatpush1.msra.mxu0 0.0
      %2972 = vmatprep.subr.mxu0 0.0
      %2973 = vmatpush1.msra.mxu0 0.0
      %2974 = vmatprep.subr.mxu0 0.0
      %2975 = vmatpush1.msra.mxu0 0.0
      %2976 = vmatprep.subr.mxu0 0.0
      %2977 = vmatpush1.msra.mxu0 0.0
      %2978 = vmatprep.subr.mxu0 0.0
      %2979 = vmatpush1.msra.mxu0 0.0
      %2980 = vmatprep.subr.mxu0 0.0
      %2981 = vmatpush1.msra.mxu0 0.0
      %2982 = vmatprep.subr.mxu0 0.0
      %2983 = vmatpush1.msra.mxu0 0.0
      %2984 = vmatprep.subr.mxu0 0.0
      %2985 = vmatpush1.msra.mxu0 0.0
      %2986 = vmatprep.subr.mxu0 0.0
      %2987 = vmatpush1.msra.mxu0 0.0
      %2988 = vmatprep.subr.mxu0 0.0
      %2989 = vmatpush1.msra.mxu0 0.0
      %2990 = vmatprep.subr.mxu0 0.0
      %2991 = vmatpush1.msra.mxu0 0.0
      %2992 = vmatprep.subr.mxu0 0.0
      %2993 = vmatpush1.msra.mxu0 0.0
      %2994 = vmatprep.subr.mxu0 0.0
      %2995 = vmatpush1.msra.mxu0 0.0
      %2996 = vmatprep.subr.mxu0 0.0
      %2997 = vmatpush1.msra.mxu0 0.0
      %2998 = vmatprep.subr.mxu0 0.0
      %2999 = vmatpush1.msra.mxu0 0.0
      %3000 = vmatprep.subr.mxu0 0.0
      %3001 = vmatpush1.msra.mxu0 0.0
      %3002 = vmatprep.mubr.f32.mxu0 0.0
      %3003 = vmatmul.mubr.f32.gmra.mrb[0].mxu0 %v2936
      %v3004 = vpop.f32.mrb[0].mxu0
      %v3005 = vadd.f32 0.0, %v3004
      %v3006 = vpop.f32.mrb[0].mxu0
      %3007 = vdwg.mxu0
      %v3009 = vsel %vm896, %v3005, 0
      %3011 = vmatprep.subr.mxu0 0.0
      %3012 = vmatpush1.msra.mxu0 %v2124
      %3013 = vmatprep.subr.mxu0 0.0
      %3014 = vmatpush1.msra.mxu0 0.0
      %3015 = vmatprep.subr.mxu0 0.0
      %3016 = vmatpush1.msra.mxu0 0.0
      %3017 = vmatprep.subr.mxu0 0.0
      %3018 = vmatpush1.msra.mxu0 0.0
      %3019 = vmatprep.subr.mxu0 0.0
      %3020 = vmatpush1.msra.mxu0 0.0
      %3021 = vmatprep.subr.mxu0 0.0
      %3022 = vmatpush1.msra.mxu0 0.0
      %3023 = vmatprep.subr.mxu0 0.0
      %3024 = vmatpush1.msra.mxu0 0.0
      %3025 = vmatprep.subr.mxu0 0.0
      %3026 = vmatpush1.msra.mxu0 0.0
      %3027 = vmatprep.subr.mxu0 0.0
      %3028 = vmatpush1.msra.mxu0 0.0
      %3029 = vmatprep.subr.mxu0 0.0
      %3030 = vmatpush1.msra.mxu0 0.0
      %3031 = vmatprep.subr.mxu0 0.0
      %3032 = vmatpush1.msra.mxu0 0.0
      %3033 = vmatprep.subr.mxu0 0.0
      %3034 = vmatpush1.msra.mxu0 0.0
      %3035 = vmatprep.subr.mxu0 0.0
      %3036 = vmatpush1.msra.mxu0 0.0
      %3037 = vmatprep.subr.mxu0 0.0
      %3038 = vmatpush1.msra.mxu0 0.0
      %3039 = vmatprep.subr.mxu0 0.0
      %3040 = vmatpush1.msra.mxu0 0.0
      %3041 = vmatprep.subr.mxu0 0.0
      %3042 = vmatpush1.msra.mxu0 0.0
      %3043 = vmatprep.subr.mxu0 0.0
      %3044 = vmatpush1.msra.mxu0 0.0
      %3045 = vmatprep.subr.mxu0 0.0
      %3046 = vmatpush1.msra.mxu0 0.0
      %3047 = vmatprep.subr.mxu0 0.0
      %3048 = vmatpush1.msra.mxu0 0.0
      %3049 = vmatprep.subr.mxu0 0.0
      %3050 = vmatpush1.msra.mxu0 0.0
      %3051 = vmatprep.subr.mxu0 0.0
      %3052 = vmatpush1.msra.mxu0 0.0
      %3053 = vmatprep.subr.mxu0 0.0
      %3054 = vmatpush1.msra.mxu0 0.0
      %3055 = vmatprep.subr.mxu0 0.0
      %3056 = vmatpush1.msra.mxu0 0.0
      %3057 = vmatprep.subr.mxu0 0.0
      %3058 = vmatpush1.msra.mxu0 0.0
      %3059 = vmatprep.subr.mxu0 0.0
      %3060 = vmatpush1.msra.mxu0 0.0
      %3061 = vmatprep.subr.mxu0 0.0
      %3062 = vmatpush1.msra.mxu0 0.0
      %3063 = vmatprep.subr.mxu0 0.0
      %3064 = vmatpush1.msra.mxu0 0.0
      %3065 = vmatprep.subr.mxu0 0.0
      %3066 = vmatpush1.msra.mxu0 0.0
      %3067 = vmatprep.subr.mxu0 0.0
      %3068 = vmatpush1.msra.mxu0 0.0
      %3069 = vmatprep.subr.mxu0 0.0
      %3070 = vmatpush1.msra.mxu0 0.0
      %3071 = vmatprep.subr.mxu0 0.0
      %3072 = vmatpush1.msra.mxu0 0.0
      %3073 = vmatprep.subr.mxu0 0.0
      %3074 = vmatpush1.msra.mxu0 0.0
      %3075 = vmatprep.mubr.f32.mxu0 0.0
      %3076 = vmatmul.mubr.f32.gmra.mrb[0].mxu0 %v3009
      %v3077 = vpop.f32.mrb[0].mxu0
      %v3078 = vadd.f32 0.0, %v3077
      %v3079 = vpop.f32.mrb[0].mxu0
      %3080 = vdwg.mxu0
      %v3081 = vadd.f32 %v2838, %v3078
      %3082 = vrot.lane.b32.xlu0 %v2210, 104
      %v3083 = vpop.permute.xlu0 %3082
      %3084 = vrot.lane.b32.xlu0 %v2286, 104
      %v3085 = vpop.permute.xlu0 %3084
      %v3086 = vsel %vm896, %v3083, 0
      %v3088 = vsel %vm896, %v3085, 0
      %3090 = vmatprep.subr.mxu0 0.0
      %3091 = vmatpush1.xpose.msra.mxu0 %v3088
      %3092 = vmatprep.subr.mxu0 0.0
      %3093 = vmatpush1.xpose.msra.mxu0 0.0
      %3094 = vmatprep.subr.mxu0 0.0
      %3095 = vmatpush1.xpose.msra.mxu0 0.0
      %3096 = vmatprep.subr.mxu0 0.0
      %3097 = vmatpush1.xpose.msra.mxu0 0.0
      %3098 = vmatprep.subr.mxu0 0.0
      %3099 = vmatpush1.xpose.msra.mxu0 0.0
      %3100 = vmatprep.subr.mxu0 0.0
      %3101 = vmatpush1.xpose.msra.mxu0 0.0
      %3102 = vmatprep.subr.mxu0 0.0
      %3103 = vmatpush1.xpose.msra.mxu0 0.0
      %3104 = vmatprep.subr.mxu0 0.0
      %3105 = vmatpush1.xpose.msra.mxu0 0.0
      %3106 = vmatprep.subr.mxu0 0.0
      %3107 = vmatpush1.xpose.msra.mxu0 0.0
      %3108 = vmatprep.subr.mxu0 0.0
      %3109 = vmatpush1.xpose.msra.mxu0 0.0
      %3110 = vmatprep.subr.mxu0 0.0
      %3111 = vmatpush1.xpose.msra.mxu0 0.0
      %3112 = vmatprep.subr.mxu0 0.0
      %3113 = vmatpush1.xpose.msra.mxu0 0.0
      %3114 = vmatprep.subr.mxu0 0.0
      %3115 = vmatpush1.xpose.msra.mxu0 0.0
      %3116 = vmatprep.subr.mxu0 0.0
      %3117 = vmatpush1.xpose.msra.mxu0 0.0
      %3118 = vmatprep.subr.mxu0 0.0
      %3119 = vmatpush1.xpose.msra.mxu0 0.0
      %3120 = vmatprep.subr.mxu0 0.0
      %3121 = vmatpush1.xpose.msra.mxu0 0.0
      %3122 = vmatprep.subr.mxu0 0.0
      %3123 = vmatpush1.xpose.msra.mxu0 0.0
      %3124 = vmatprep.subr.mxu0 0.0
      %3125 = vmatpush1.xpose.msra.mxu0 0.0
      %3126 = vmatprep.subr.mxu0 0.0
      %3127 = vmatpush1.xpose.msra.mxu0 0.0
      %3128 = vmatprep.subr.mxu0 0.0
      %3129 = vmatpush1.xpose.msra.mxu0 0.0
      %3130 = vmatprep.subr.mxu0 0.0
      %3131 = vmatpush1.xpose.msra.mxu0 0.0
      %3132 = vmatprep.subr.mxu0 0.0
      %3133 = vmatpush1.xpose.msra.mxu0 0.0
      %3134 = vmatprep.subr.mxu0 0.0
      %3135 = vmatpush1.xpose.msra.mxu0 0.0
      %3136 = vmatprep.subr.mxu0 0.0
      %3137 = vmatpush1.xpose.msra.mxu0 0.0
      %3138 = vmatprep.subr.mxu0 0.0
      %3139 = vmatpush1.xpose.msra.mxu0 0.0
      %3140 = vmatprep.subr.mxu0 0.0
      %3141 = vmatpush1.xpose.msra.mxu0 0.0
      %3142 = vmatprep.subr.mxu0 0.0
      %3143 = vmatpush1.xpose.msra.mxu0 0.0
      %3144 = vmatprep.subr.mxu0 0.0
      %3145 = vmatpush1.xpose.msra.mxu0 0.0
      %3146 = vmatprep.subr.mxu0 0.0
      %3147 = vmatpush1.xpose.msra.mxu0 0.0
      %3148 = vmatprep.subr.mxu0 0.0
      %3149 = vmatpush1.xpose.msra.mxu0 0.0
      %3150 = vmatprep.subr.mxu0 0.0
      %3151 = vmatpush1.xpose.msra.mxu0 0.0
      %3152 = vmatprep.subr.mxu0 0.0
      %3153 = vmatpush1.xpose.msra.mxu0 0.0
      %3154 = vmatprep.mubr.f32.mxu0 0.0
      %3155 = vmatmul.mubr.f32.gmra.mrb[0].mxu0 %v3086
      %v3156 = vpop.f32.mrb[0].mxu0
      %v3157 = vadd.f32 0.0, %v3156
      %v3158 = vpop.f32.mrb[0].mxu0
      %3159 = vdwg.mxu0
      %v3160 = vmul.f32 %v3157, 0.35355338
      %v3161 = vadd.f32 %v3160, %v977
      %v3162 = vsel %vm896, %v3161, -inf
      %3163 = vmax.xlane.f32.xlu0 %v3162
      %v3164 = vpop.xlane.xlu0 %3163
      %v3165 = vsub.f32 %v3161, %v3164
      %v3166 = vmul.f32 %v3165, 1.442695
      %v3167 = vpow.pop %v3166
      %v3168 = vsel %vm896, %v3167, 0.0
      %3169 = vadd.xlane.f32.xlu0 %v3168
      %v3170 = vpop.xlane.xlu0 %3169
      %v3171 = vrcp.pop %v3170
      %v3172 = vmul.f32 %v3167, %v3171
      %3173 = vrot.lane.b32.xlu0 %v2362, 104
      %v3174 = vpop.permute.xlu0 %3173
      %v3177 = vsel %vm896, %v3172, 0
      %3179 = vmatprep.subr.mxu0 0.0
      %3180 = vmatpush1.msra.mxu0 %v3174
      %3181 = vmatprep.subr.mxu0 0.0
      %3182 = vmatpush1.msra.mxu0 0.0
      %3183 = vmatprep.subr.mxu0 0.0
      %3184 = vmatpush1.msra.mxu0 0.0
      %3185 = vmatprep.subr.mxu0 0.0
      %3186 = vmatpush1.msra.mxu0 0.0
      %3187 = vmatprep.subr.mxu0 0.0
      %3188 = vmatpush1.msra.mxu0 0.0
      %3189 = vmatprep.subr.mxu0 0.0
      %3190 = vmatpush1.msra.mxu0 0.0
      %3191 = vmatprep.subr.mxu0 0.0
      %3192 = vmatpush1.msra.mxu0 0.0
      %3193 = vmatprep.subr.mxu0 0.0
      %3194 = vmatpush1.msra.mxu0 0.0
      %3195 = vmatprep.subr.mxu0 0.0
      %3196 = vmatpush1.msra.mxu0 0.0
      %3197 = vmatprep.subr.mxu0 0.0
      %3198 = vmatpush1.msra.mxu0 0.0
      %3199 = vmatprep.subr.mxu0 0.0
      %3200 = vmatpush1.msra.mxu0 0.0
      %3201 = vmatprep.subr.mxu0 0.0
      %3202 = vmatpush1.msra.mxu0 0.0
      %3203 = vmatprep.subr.mxu0 0.0
      %3204 = vmatpush1.msra.mxu0 0.0
      %3205 = vmatprep.subr.mxu0 0.0
      %3206 = vmatpush1.msra.mxu0 0.0
      %3207 = vmatprep.subr.mxu0 0.0
      %3208 = vmatpush1.msra.mxu0 0.0
      %3209 = vmatprep.subr.mxu0 0.0
      %3210 = vmatpush1.msra.mxu0 0.0
      %3211 = vmatprep.subr.mxu0 0.0
      %3212 = vmatpush1.msra.mxu0 0.0
      %3213 = vmatprep.subr.mxu0 0.0
      %3214 = vmatpush1.msra.mxu0 0.0
      %3215 = vmatprep.subr.mxu0 0.0
      %3216 = vmatpush1.msra.mxu0 0.0
      %3217 = vmatprep.subr.mxu0 0.0
      %3218 = vmatpush1.msra.mxu0 0.0
      %3219 = vmatprep.subr.mxu0 0.0
      %3220 = vmatpush1.msra.mxu0 0.0
      %3221 = vmatprep.subr.mxu0 0.0
      %3222 = vmatpush1.msra.mxu0 0.0
      %3223 = vmatprep.subr.mxu0 0.0
      %3224 = vmatpush1.msra.mxu0 0.0
      %3225 = vmatprep.subr.mxu0 0.0
      %3226 = vmatpush1.msra.mxu0 0.0
      %3227 = vmatprep.subr.mxu0 0.0
      %3228 = vmatpush1.msra.mxu0 0.0
      %3229 = vmatprep.subr.mxu0 0.0
      %3230 = vmatpush1.msra.mxu0 0.0
      %3231 = vmatprep.subr.mxu0 0.0
      %3232 = vmatpush1.msra.mxu0 0.0
      %3233 = vmatprep.subr.mxu0 0.0
      %3234 = vmatpush1.msra.mxu0 0.0
      %3235 = vmatprep.subr.mxu0 0.0
      %3236 = vmatpush1.msra.mxu0 0.0
      %3237 = vmatprep.subr.mxu0 0.0
      %3238 = vmatpush1.msra.mxu0 0.0
      %3239 = vmatprep.subr.mxu0 0.0
      %3240 = vmatpush1.msra.mxu0 0.0
      %3241 = vmatprep.subr.mxu0 0.0
      %3242 = vmatpush1.msra.mxu0 0.0
      %3243 = vmatprep.mubr.f32.mxu0 0.0
      %3244 = vmatmul.mubr.f32.gmra.mrb[0].mxu0 %v3177
      %v3245 = vpop.f32.mrb[0].mxu0
      %v3246 = vadd.f32 0.0, %v3245
      %v3247 = vpop.f32.mrb[0].mxu0
      %3248 = vdwg.mxu0
      %v3250 = vsel %vm896, %v3246, 0
      %3252 = vmatprep.subr.mxu0 0.0
      %3253 = vmatpush1.msra.mxu0 %v2125
      %3254 = vmatprep.subr.mxu0 0.0
      %3255 = vmatpush1.msra.mxu0 0.0
      %3256 = vmatprep.subr.mxu0 0.0
      %3257 = vmatpush1.msra.mxu0 0.0
      %3258 = vmatprep.subr.mxu0 0.0
      %3259 = vmatpush1.msra.mxu0 0.0
      %3260 = vmatprep.subr.mxu0 0.0
      %3261 = vmatpush1.msra.mxu0 0.0
      %3262 = vmatprep.subr.mxu0 0.0
      %3263 = vmatpush1.msra.mxu0 0.0
      %3264 = vmatprep.subr.mxu0 0.0
      %3265 = vmatpush1.msra.mxu0 0.0
      %3266 = vmatprep.subr.mxu0 0.0
      %3267 = vmatpush1.msra.mxu0 0.0
      %3268 = vmatprep.subr.mxu0 0.0
      %3269 = vmatpush1.msra.mxu0 0.0
      %3270 = vmatprep.subr.mxu0 0.0
      %3271 = vmatpush1.msra.mxu0 0.0
      %3272 = vmatprep.subr.mxu0 0.0
      %3273 = vmatpush1.msra.mxu0 0.0
      %3274 = vmatprep.subr.mxu0 0.0
      %3275 = vmatpush1.msra.mxu0 0.0
      %3276 = vmatprep.subr.mxu0 0.0
      %3277 = vmatpush1.msra.mxu0 0.0
      %3278 = vmatprep.subr.mxu0 0.0
      %3279 = vmatpush1.msra.mxu0 0.0
      %3280 = vmatprep.subr.mxu0 0.0
      %3281 = vmatpush1.msra.mxu0 0.0
      %3282 = vmatprep.subr.mxu0 0.0
      %3283 = vmatpush1.msra.mxu0 0.0
      %3284 = vmatprep.subr.mxu0 0.0
      %3285 = vmatpush1.msra.mxu0 0.0
      %3286 = vmatprep.subr.mxu0 0.0
      %3287 = vmatpush1.msra.mxu0 0.0
      %3288 = vmatprep.subr.mxu0 0.0
      %3289 = vmatpush1.msra.mxu0 0.0
      %3290 = vmatprep.subr.mxu0 0.0
      %3291 = vmatpush1.msra.mxu0 0.0
      %3292 = vmatprep.subr.mxu0 0.0
      %3293 = vmatpush1.msra.mxu0 0.0
      %3294 = vmatprep.subr.mxu0 0.0
      %3295 = vmatpush1.msra.mxu0 0.0
      %3296 = vmatprep.subr.mxu0 0.0
      %3297 = vmatpush1.msra.mxu0 0.0
      %3298 = vmatprep.subr.mxu0 0.0
      %3299 = vmatpush1.msra.mxu0 0.0
      %3300 = vmatprep.subr.mxu0 0.0
      %3301 = vmatpush1.msra.mxu0 0.0
      %3302 = vmatprep.subr.mxu0 0.0
      %3303 = vmatpush1.msra.mxu0 0.0
      %3304 = vmatprep.subr.mxu0 0.0
      %3305 = vmatpush1.msra.mxu0 0.0
      %3306 = vmatprep.subr.mxu0 0.0
      %3307 = vmatpush1.msra.mxu0 0.0
      %3308 = vmatprep.subr.mxu0 0.0
      %3309 = vmatpush1.msra.mxu0 0.0
      %3310 = vmatprep.subr.mxu0 0.0
      %3311 = vmatpush1.msra.mxu0 0.0
      %3312 = vmatprep.subr.mxu0 0.0
      %3313 = vmatpush1.msra.mxu0 0.0
      %3314 = vmatprep.subr.mxu0 0.0
      %3315 = vmatpush1.msra.mxu0 0.0
      %3316 = vmatprep.mubr.f32.mxu0 0.0
      %3317 = vmatmul.mubr.f32.gmra.mrb[0].mxu0 %v3250
      %v3318 = vpop.f32.mrb[0].mxu0
      %v3319 = vadd.f32 0.0, %v3318
      %v3320 = vpop.f32.mrb[0].mxu0
      %3321 = vdwg.mxu0
      %v3322 = vadd.f32 %v3081, %v3319
      %v3324 = vlaneseq
      %v3325 = vshrl.u32 %v3324, 7
      %v3326 = vsub.s32 0, %v3325
      %v3327 = vrot.slane %v2133, %v3326
      %v3329 = vadd.f32 %v3322, %v3327
      %v3330 = vadd.f32 %v2105, %v3329
      %s3331 = scalar_lea.vmem %s10, 1
      %v3332 = vld [vmem:[%s3331] sm:$0x1]
      %s3333 = scalar_lea.vmem %s11, 1
      %v3334 = vld [vmem:[%s3333] sm:$0x1]
      %v3335 = vsel %vm670, %v3330, 0.0
      %3336 = vadd.xlane.f32.xlu0 %v3335
      %v3337 = vpop.xlane.xlu0 %3336
      %v3338 = vmul.f32 %v3337, %v1873
      %v3339 = vsub.f32 %v3330, %v3338
      %v3340 = vmul.f32 %v3339, %v3339
      %v3341 = vsel %vm670, %v3340, 0.0
      %3342 = vadd.xlane.f32.xlu0 %v3341
      %v3343 = vpop.xlane.xlu0 %3342
      %v3344 = vmul.f32 %v3343, %v1873
      %v3345 = vadd.f32 %v3344, 1e-05
      %v3346 = vrsqrt.pop %v3345
      %v3347 = vmul.f32 %v3339, %v3346
      %v3349 = vlaneseq
      %v3350 = vshrl.u32 %v3349, 7
      %v3351 = vsub.s32 0, %v3350
      %v3352 = vrot.slane %v3332, %v3351
      %v3354 = vmul.f32 %v3347, %v3352
      %v3356 = vlaneseq
      %v3357 = vshrl.u32 %v3356, 7
      %v3358 = vsub.s32 0, %v3357
      %v3359 = vrot.slane %v3334, %v3358
      %v3361 = vadd.f32 %v3354, %v3359
      %s3362 = scalar_lea.vmem %s12, 32
      %v3363 = vld [vmem:[%s3362] sm:$0xff]
      %v3364 = vld [vmem:[%s3362 + $0x8] sm:$0xff]
      %v3365 = vld [vmem:[%s3362 + $0x10] sm:$0xff]
      %v3366 = vld [vmem:[%s3362 + $0x18] sm:$0xff]
      %s3367 = scalar_lea.vmem %s13, 1
      %v3368 = vld [vmem:[%s3367] sm:$0x1]
      %v3370 = vlaneseq
      %v3371 = vshrl.u32 %v3370, 7
      %v3372 = vsub.s32 0, %v3371
      %v3373 = vrot.slane %v3368, %v3372
      %v3376 = vsel %vm670, %v3361, 0
      %3378 = vmatprep.subr.mxu0 0.0
      %3379 = vmatpush1.msra.mxu0 %v3363
      %3380 = vmatprep.subr.mxu0 0.0
      %3381 = vmatpush1.msra.mxu0 %v3364
      %3382 = vmatprep.subr.mxu0 0.0
      %3383 = vmatpush1.msra.mxu0 %v3365
      %3384 = vmatprep.subr.mxu0 0.0
      %3385 = vmatpush1.msra.mxu0 %v3366
      %3386 = vmatprep.subr.mxu0 0.0
      %3387 = vmatpush1.msra.mxu0 0.0
      %3388 = vmatprep.subr.mxu0 0.0
      %3389 = vmatpush1.msra.mxu0 0.0
      %3390 = vmatprep.subr.mxu0 0.0
      %3391 = vmatpush1.msra.mxu0 0.0
      %3392 = vmatprep.subr.mxu0 0.0
      %3393 = vmatpush1.msra.mxu0 0.0
      %3394 = vmatprep.subr.mxu0 0.0
      %3395 = vmatpush1.msra.mxu0 0.0
      %3396 = vmatprep.subr.mxu0 0.0
      %3397 = vmatpush1.msra.mxu0 0.0
      %3398 = vmatprep.subr.mxu0 0.0
      %3399 = vmatpush1.msra.mxu0 0.0
      %3400 = vmatprep.subr.mxu0 0.0
      %3401 = vmatpush1.msra.mxu0 0.0
      %3402 = vmatprep.subr.mxu0 0.0
      %3403 = vmatpush1.msra.mxu0 0.0
      %3404 = vmatprep.subr.mxu0 0.0
      %3405 = vmatpush1.msra.mxu0 0.0
      %3406 = vmatprep.subr.mxu0 0.0
      %3407 = vmatpush1.msra.mxu0 0.0
      %3408 = vmatprep.subr.mxu0 0.0
      %3409 = vmatpush1.msra.mxu0 0.0
      %3410 = vmatprep.subr.mxu0 0.0
      %3411 = vmatpush1.msra.mxu0 0.0
      %3412 = vmatprep.subr.mxu0 0.0
      %3413 = vmatpush1.msra.mxu0 0.0
      %3414 = vmatprep.subr.mxu0 0.0
      %3415 = vmatpush1.msra.mxu0 0.0
      %3416 = vmatprep.subr.mxu0 0.0
      %3417 = vmatpush1.msra.mxu0 0.0
      %3418 = vmatprep.subr.mxu0 0.0
      %3419 = vmatpush1.msra.mxu0 0.0
      %3420 = vmatprep.subr.mxu0 0.0
      %3421 = vmatpush1.msra.mxu0 0.0
      %3422 = vmatprep.subr.mxu0 0.0
      %3423 = vmatpush1.msra.mxu0 0.0
      %3424 = vmatprep.subr.mxu0 0.0
      %3425 = vmatpush1.msra.mxu0 0.0
      %3426 = vmatprep.subr.mxu0 0.0
      %3427 = vmatpush1.msra.mxu0 0.0
      %3428 = vmatprep.subr.mxu0 0.0
      %3429 = vmatpush1.msra.mxu0 0.0
      %3430 = vmatprep.subr.mxu0 0.0
      %3431 = vmatpush1.msra.mxu0 0.0
      %3432 = vmatprep.subr.mxu0 0.0
      %3433 = vmatpush1.msra.mxu0 0.0
      %3434 = vmatprep.subr.mxu0 0.0
      %3435 = vmatpush1.msra.mxu0 0.0
      %3436 = vmatprep.subr.mxu0 0.0
      %3437 = vmatpush1.msra.mxu0 0.0
      %3438 = vmatprep.subr.mxu0 0.0
      %3439 = vmatpush1.msra.mxu0 0.0
      %3440 = vmatprep.subr.mxu0 0.0
      %3441 = vmatpush1.msra.mxu0 0.0
      %3442 = vmatprep.mubr.f32.mxu0 0.0
      %3443 = vmatmul.mubr.f32.gmra.mrb[0].mxu0 %v3376
      %v3444 = vpop.f32.mrb[0].mxu0
      %v3445 = vadd.f32 %v3373, %v3444
      %v3446 = vpop.f32.mrb[0].mxu0
      %3447 = vdwg.mxu0
      %v3448 = vmax.f32 %v3445, 0.0
      %s3449 = scalar_lea.vmem %s14, 128
      %v3450 = vld [vmem:[%s3449] sm:$0xff]
      %v3451 = vld [vmem:[%s3449 + $0x8] sm:$0xff]
      %v3452 = vld [vmem:[%s3449 + $0x10] sm:$0xff]
      %v3453 = vld [vmem:[%s3449 + $0x18] sm:$0xff]
      %v3454 = vld [vmem:[%s3449 + $0x20] sm:$0xff]
      %v3455 = vld [vmem:[%s3449 + $0x28] sm:$0xff]
      %v3456 = vld [vmem:[%s3449 + $0x30] sm:$0xff]
      %v3457 = vld [vmem:[%s3449 + $0x38] sm:$0xff]
      %v3458 = vld [vmem:[%s3449 + $0x40] sm:$0xff]
      %v3459 = vld [vmem:[%s3449 + $0x48] sm:$0xff]
      %v3460 = vld [vmem:[%s3449 + $0x50] sm:$0xff]
      %v3461 = vld [vmem:[%s3449 + $0x58] sm:$0xff]
      %v3462 = vld [vmem:[%s3449 + $0x60] sm:$0xff]
      %v3463 = vld [vmem:[%s3449 + $0x68] sm:$0xff]
      %v3464 = vld [vmem:[%s3449 + $0x70] sm:$0xff]
      %v3465 = vld [vmem:[%s3449 + $0x78] sm:$0xff]
      %s3466 = scalar_lea.vmem %s15, 1
      %v3467 = vld [vmem:[%s3466] sm:$0x1]
      %v3469 = vlaneseq
      %v3470 = vshrl.u32 %v3469, 7
      %v3471 = vsub.s32 0, %v3470
      %v3472 = vrot.slane %v3467, %v3471
      %3474 = vmatprep.subr.mxu0 0.0
      %3475 = vmatpush1.msra.mxu0 %v3450
      %3476 = vmatprep.subr.mxu0 0.0
      %3477 = vmatpush1.msra.mxu0 %v3451
      %3478 = vmatprep.subr.mxu0 0.0
      %3479 = vmatpush1.msra.mxu0 %v3452
      %3480 = vmatprep.subr.mxu0 0.0
      %3481 = vmatpush1.msra.mxu0 %v3453
      %3482 = vmatprep.subr.mxu0 0.0
      %3483 = vmatpush1.msra.mxu0 %v3454
      %3484 = vmatprep.subr.mxu0 0.0
      %3485 = vmatpush1.msra.mxu0 %v3455
      %3486 = vmatprep.subr.mxu0 0.0
      %3487 = vmatpush1.msra.mxu0 %v3456
      %3488 = vmatprep.subr.mxu0 0.0
      %3489 = vmatpush1.msra.mxu0 %v3457
      %3490 = vmatprep.subr.mxu0 0.0
      %3491 = vmatpush1.msra.mxu0 %v3458
      %3492 = vmatprep.subr.mxu0 0.0
      %3493 = vmatpush1.msra.mxu0 %v3459
      %3494 = vmatprep.subr.mxu0 0.0
      %3495 = vmatpush1.msra.mxu0 %v3460
      %3496 = vmatprep.subr.mxu0 0.0
      %3497 = vmatpush1.msra.mxu0 %v3461
      %3498 = vmatprep.subr.mxu0 0.0
      %3499 = vmatpush1.msra.mxu0 %v3462
      %3500 = vmatprep.subr.mxu0 0.0
      %3501 = vmatpush1.msra.mxu0 %v3463
      %3502 = vmatprep.subr.mxu0 0.0
      %3503 = vmatpush1.msra.mxu0 %v3464
      %3504 = vmatprep.subr.mxu0 0.0
      %3505 = vmatpush1.msra.mxu0 %v3465
      %3506 = vmatprep.subr.mxu0 0.0
      %3507 = vmatpush1.msra.mxu0 0.0
      %3508 = vmatprep.subr.mxu0 0.0
      %3509 = vmatpush1.msra.mxu0 0.0
      %3510 = vmatprep.subr.mxu0 0.0
      %3511 = vmatpush1.msra.mxu0 0.0
      %3512 = vmatprep.subr.mxu0 0.0
      %3513 = vmatpush1.msra.mxu0 0.0
      %3514 = vmatprep.subr.mxu0 0.0
      %3515 = vmatpush1.msra.mxu0 0.0
      %3516 = vmatprep.subr.mxu0 0.0
      %3517 = vmatpush1.msra.mxu0 0.0
      %3518 = vmatprep.subr.mxu0 0.0
      %3519 = vmatpush1.msra.mxu0 0.0
      %3520 = vmatprep.subr.mxu0 0.0
      %3521 = vmatpush1.msra.mxu0 0.0
      %3522 = vmatprep.subr.mxu0 0.0
      %3523 = vmatpush1.msra.mxu0 0.0
      %3524 = vmatprep.subr.mxu0 0.0
      %3525 = vmatpush1.msra.mxu0 0.0
      %3526 = vmatprep.subr.mxu0 0.0
      %3527 = vmatpush1.msra.mxu0 0.0
      %3528 = vmatprep.subr.mxu0 0.0
      %3529 = vmatpush1.msra.mxu0 0.0
      %3530 = vmatprep.subr.mxu0 0.0
      %3531 = vmatpush1.msra.mxu0 0.0
      %3532 = vmatprep.subr.mxu0 0.0
      %3533 = vmatpush1.msra.mxu0 0.0
      %3534 = vmatprep.subr.mxu0 0.0
      %3535 = vmatpush1.msra.mxu0 0.0
      %3536 = vmatprep.subr.mxu0 0.0
      %3537 = vmatpush1.msra.mxu0 0.0
      %3538 = vmatprep.mubr.f32.mxu0 0.0
      %3539 = vmatmul.mubr.f32.gmra.mrb[0].mxu0 %v3448
      %v3540 = vpop.f32.mrb[0].mxu0
      %v3541 = vadd.f32 %v3472, %v3540
      %v3542 = vpop.f32.mrb[0].mxu0
      %3543 = vdwg.mxu0
      %v3544 = vadd.f32 %v3361, %v3541
      %s3545 = scalar_lea.vmem %s16, 1
      %v3546 = vld [vmem:[%s3545] sm:$0x1]
      %s3547 = scalar_lea.vmem %s17, 1
      %v3548 = vld [vmem:[%s3547] sm:$0x1]
      %v3549 = vsel %vm670, %v3544, 0.0
      %3550 = vadd.xlane.f32.xlu0 %v3549
      %v3551 = vpop.xlane.xlu0 %3550
      %v3552 = vmul.f32 %v3551, %v1873
      %v3553 = vsub.f32 %v3544, %v3552
      %v3554 = vmul.f32 %v3553, %v3553
      %v3555 = vsel %vm670, %v3554, 0.0
      %3556 = vadd.xlane.f32.xlu0 %v3555
      %v3557 = vpop.xlane.xlu0 %3556
      %v3558 = vmul.f32 %v3557, %v1873
      %v3559 = vadd.f32 %v3558, 1e-05
      %v3560 = vrsqrt.pop %v3559
      %v3561 = vmul.f32 %v3553, %v3560
      %v3563 = vlaneseq
      %v3564 = vshrl.u32 %v3563, 7
      %v3565 = vsub.s32 0, %v3564
      %v3566 = vrot.slane %v3546, %v3565
      %v3568 = vmul.f32 %v3561, %v3566
      %v3570 = vlaneseq
      %v3571 = vshrl.u32 %v3570, 7
      %v3572 = vsub.s32 0, %v3571
      %v3573 = vrot.slane %v3548, %v3572
      %v3575 = vadd.f32 %v3568, %v3573
      %v3576 = vld [vmem:[%s18] sm:$0xff]
      %v3577 = vld [vmem:[%s18 + $0x8] sm:$0xff]
      %v3578 = vld [vmem:[%s18 + $0x10] sm:$0xff]
      %v3579 = vld [vmem:[%s18 + $0x18] sm:$0xff]
      %v3580 = vld [vmem:[%s19] sm:$0x1]
      %v3582 = vlaneseq
      %v3583 = vshrl.u32 %v3582, 7
      %v3584 = vsub.s32 0, %v3583
      %v3585 = vrot.slane %v3580, %v3584
      %v3588 = vsel %vm670, %v3575, 0
      %3590 = vmatprep.subr.mxu0 0.0
      %3591 = vmatpush1.msra.mxu0 %v3576
      %3592 = vmatprep.subr.mxu0 0.0
      %3593 = vmatpush1.msra.mxu0 %v3577
      %3594 = vmatprep.subr.mxu0 0.0
      %3595 = vmatpush1.msra.mxu0 %v3578
      %3596 = vmatprep.subr.mxu0 0.0
      %3597 = vmatpush1.msra.mxu0 %v3579
      %3598 = vmatprep.subr.mxu0 0.0
      %3599 = vmatpush1.msra.mxu0 0.0
      %3600 = vmatprep.subr.mxu0 0.0
      %3601 = vmatpush1.msra.mxu0 0.0
      %3602 = vmatprep.subr.mxu0 0.0
      %3603 = vmatpush1.msra.mxu0 0.0
      %3604 = vmatprep.subr.mxu0 0.0
      %3605 = vmatpush1.msra.mxu0 0.0
      %3606 = vmatprep.subr.mxu0 0.0
      %3607 = vmatpush1.msra.mxu0 0.0
      %3608 = vmatprep.subr.mxu0 0.0
      %3609 = vmatpush1.msra.mxu0 0.0
      %3610 = vmatprep.subr.mxu0 0.0
      %3611 = vmatpush1.msra.mxu0 0.0
      %3612 = vmatprep.subr.mxu0 0.0
      %3613 = vmatpush1.msra.mxu0 0.0
      %3614 = vmatprep.subr.mxu0 0.0
      %3615 = vmatpush1.msra.mxu0 0.0
      %3616 = vmatprep.subr.mxu0 0.0
      %3617 = vmatpush1.msra.mxu0 0.0
      %3618 = vmatprep.subr.mxu0 0.0
      %3619 = vmatpush1.msra.mxu0 0.0
      %3620 = vmatprep.subr.mxu0 0.0
      %3621 = vmatpush1.msra.mxu0 0.0
      %3622 = vmatprep.subr.mxu0 0.0
      %3623 = vmatpush1.msra.mxu0 0.0
      %3624 = vmatprep.subr.mxu0 0.0
      %3625 = vmatpush1.msra.mxu0 0.0
      %3626 = vmatprep.subr.mxu0 0.0
      %3627 = vmatpush1.msra.mxu0 0.0
      %3628 = vmatprep.subr.mxu0 0.0
      %3629 = vmatpush1.msra.mxu0 0.0
      %3630 = vmatprep.subr.mxu0 0.0
      %3631 = vmatpush1.msra.mxu0 0.0
      %3632 = vmatprep.subr.mxu0 0.0
      %3633 = vmatpush1.msra.mxu0 0.0
      %3634 = vmatprep.subr.mxu0 0.0
      %3635 = vmatpush1.msra.mxu0 0.0
      %3636 = vmatprep.subr.mxu0 0.0
      %3637 = vmatpush1.msra.mxu0 0.0
      %3638 = vmatprep.subr.mxu0 0.0
      %3639 = vmatpush1.msra.mxu0 0.0
      %3640 = vmatprep.subr.mxu0 0.0
      %3641 = vmatpush1.msra.mxu0 0.0
      %3642 = vmatprep.subr.mxu0 0.0
      %3643 = vmatpush1.msra.mxu0 0.0
      %3644 = vmatprep.subr.mxu0 0.0
      %3645 = vmatpush1.msra.mxu0 0.0
      %3646 = vmatprep.subr.mxu0 0.0
      %3647 = vmatpush1.msra.mxu0 0.0
      %3648 = vmatprep.subr.mxu0 0.0
      %3649 = vmatpush1.msra.mxu0 0.0
      %3650 = vmatprep.subr.mxu0 0.0
      %3651 = vmatpush1.msra.mxu0 0.0
      %3652 = vmatprep.subr.mxu0 0.0
      %3653 = vmatpush1.msra.mxu0 0.0
      %3654 = vmatprep.mubr.f32.mxu0 0.0
      %3655 = vmatmul.mubr.f32.gmra.mrb[0].mxu0 %v3588
      %v3656 = vpop.f32.mrb[0].mxu0
      %v3657 = vadd.f32 %v3585, %v3656
      %v3658 = vpop.f32.mrb[0].mxu0
      %3659 = vdwg.mxu0
      %3660 = vst [vmem:[%s641] sm:$0xff] %v3657
      %p3661 = scmp.lt.s32.totalorder %s31, 1
      %s3662 = scalar_select %p3661, %s31, 1
      %s3663 = smul.addr %s3662, 8
      %s3664 = scalar_lea.vmem %s20, %s3663
      // Predicated region
      $region101: #{model_forward.1} parent=99 // pred_check
        %p3665 = pneg %p479
      $region102: #{model_forward.1} parent=99 // pred_check_branch
        %3667 = sbr.rel (%p3665) target = $region104
      $region103: #{model_forward.1} parent=99 // pred_region
        _
      $region104: #{model_forward.1} parent=99 // pred_fallthru
        _
    $region100: #{model_forward.1} parent=5 // pred_fallthru
      _
    %p3668 = scmp.le.s32.totalorder 2, %s26
    // Predicated region
    $region105: #{model_forward.1} parent=5 // pred_check
      %p3669 = pneg %p3668
    $region106: #{model_forward.1} parent=5 // pred_check_branch
      %3671 = sbr.rel (%p3669) target = $region108
    $region107: #{model_forward.1} parent=5 // pred_region
      %s3672 = ssub.s32 %s26, 2
      // Predicated region
      $region109: #{model_forward.1} parent=107 // pred_check
        %p3673 = pneg %p485
      $region110: #{model_forward.1} parent=107 // pred_check_branch
        %3675 = sbr.rel (%p3673) target = $region112
      $region111: #{model_forward.1} parent=107 // pred_region
        %p3676 = scmp.lt.s32.totalorder %s32, 1
        %s3677 = scalar_select %p3676, %s32, 1
        %s3678 = smul.addr %s3677, 8
        %s3679 = scalar_lea.vmem %s20, %s3678
      $region112: #{model_forward.1} parent=107 // pred_fallthru
        _
    $region108: #{model_forward.1} parent=5 // pred_fallthru
      _
  $region6: #{model_forward.1} parent=0 // loop_footer
    %s30 = sadd.s32 1, %s26
  $region7: #{model_forward.1} parent=0 // loop_footer_branch
    %25 = sbr.rel target = $region3
  $region8: #{model_forward.1} parent=0 // loop_exit
    _

</llo_original>
